<compile_context>
chip_gen: v5e
topology: v5e:2x2
jax: 0.10.0
libtpu: 0.0.40
codegen_flags: <defaults>
</compile_context>

<pallas_src>
import math

import jax
import jax.numpy as jnp
import numpy as np
from jax.experimental import pallas as pl
from jax.experimental.pallas import tpu as pltpu


# ---------------------------------------------------------------------------
# Host-side constant builders (compile-time; all shapes static per level)
# ---------------------------------------------------------------------------

def _gaussian_taps(window_size, sigma=1.5):
    # Matches reference `gaussian(window_size, 1.5)` incl. the 1e-6 terms.
    center = window_size // 2
    g = np.array([math.exp(-((x - center) ** 2) / (2.0 * sigma ** 2 + 1e-6))
                  for x in range(window_size)], dtype=np.float32)
    return g / (g.sum() + 1e-6)


def _conv_band(n_in, taps):
    # B[i, i + k] = taps[k]  ->  (B @ x) is a "valid" 1-D correlation over rows.
    n_out = n_in - len(taps) + 1
    b = np.zeros((n_out, n_in), dtype=np.float32)
    for k, g in enumerate(taps):
        b[np.arange(n_out), np.arange(n_out) + k] = g
    return b


def _pool_band(n_in):
    # P[i, 2i] = P[i, 2i+1] = 0.5  ->  (P @ x) averages adjacent row pairs
    # (floor behaviour for odd sizes, same as F.avg_pool2d(kernel=2, stride=2)).
    n_out = n_in // 2
    p = np.zeros((n_out, n_in), dtype=np.float32)
    idx = np.arange(n_out)
    p[idx, 2 * idx] = 0.5
    p[idx, 2 * idx + 1] = 0.5
    return p


def _block_diag(blk, reps):
    r, c = blk.shape
    out = np.zeros((reps * r, reps * c), dtype=np.float32)
    for i in range(reps):
        out[i * r:(i + 1) * r, i * c:(i + 1) * c] = blk
    return out


def _build_level_constants(p, h, w, window_size, levels):
    """Per-level constants for the stacked-plane (N*C*H, W) layout.

    Left matrix (per level, except last) = [ blockdiag_p(GH) ; pad ; blockdiag_p(PH) ]
    so one left matmul yields both the Gaussian-window rows and the 2x2-pool
    rows; the GH block is zero-padded to a multiple of 8 rows so the pool-row
    slice starts on a sublane-tile boundary.
    """
    consts, shapes = [], []
    ch, cw = h, w
    for lvl in range(levels):
        win = min(window_size, ch, cw)          # reference: real_size = min(ws, H, W)
        taps = _gaussian_taps(win, 1.5)
        ho, wo = ch - win + 1, cw - win + 1
        hp, wp = ch // 2, cw // 2
        gh_blk = _block_diag(_conv_band(ch, taps), p)        # (p*ho, p*ch)
        gw = _conv_band(cw, taps).T                          # (cw, wo)
        pho = p * ho
        last = (lvl == levels - 1)
        if last:
            ghp = gh_blk                                     # pool after last level is unused
            pho_pad = pho
            consts += [jnp.asarray(ghp), jnp.asarray(gw)]
        else:
            ph_blk = _block_diag(_pool_band(ch), p)          # (p*hp, p*ch)
            pho_pad = -(-pho // 8) * 8
            ghp = np.zeros((pho_pad + p * hp, p * ch), dtype=np.float32)
            ghp[:pho] = gh_blk
            ghp[pho_pad:] = ph_blk
            pw = _pool_band(cw).T                            # (cw, wp)
            consts += [jnp.asarray(ghp), jnp.asarray(gw), jnp.asarray(pw)]
        shapes.append(dict(h=ch, w=cw, ho=ho, wo=wo, hp=hp, wp=wp,
                           pho=pho, pho_pad=pho_pad, last=last))
        ch, cw = hp, wp
    return consts, shapes


# ---------------------------------------------------------------------------
# Fused 5-level MS-SSIM kernel (single pallas_call, no grid, all in VMEM)
# ---------------------------------------------------------------------------

def _make_msssim_kernel(shapes, val_range):
    levels = len(shapes)
    n_consts = sum(2 if s['last'] else 3 for s in shapes)

    def kernel(*refs):
        x1_ref, x2_ref = refs[0], refs[1]
        const_refs = refs[2:2 + n_consts]
        out_refs = refs[2 + n_consts:]

        def mm(lhs, rhs):
            return jnp.dot(lhs, rhs, preferred_element_type=jnp.float32)

        a = x1_ref[...]                      # (P*H, W) stacked img1 planes
        b = x2_ref[...]
        ci = 0
        for lvl, s in enumerate(shapes):
            ghp = const_refs[ci][...]; ci += 1          # left: gaussian (+ pool) rows
            gw = const_refs[ci][...]; ci += 1           # right: gaussian cols
            if not s['last']:
                pw = const_refs[ci][...]; ci += 1       # right: pool cols

            # Reference value-range heuristic on the CURRENT level's img1
            # (already resident in VMEM -> no extra HBM pass).
            if val_range is None:
                max_val = jnp.where(jnp.max(a) > 128.0, 255.0, 1.0)
                min_val = jnp.where(jnp.min(a) < -0.5, -1.0, 0.0)
                big_l = max_val - min_val
            else:
                big_l = float(val_range)
            c1 = (0.01 * big_l) * (0.01 * big_l)
            c2 = (0.03 * big_l) * (0.03 * big_l)

            # Separable "valid" depthwise window stats, batched over all planes
            # via block-diagonal left matrices (one left + one right matmul per
            # statistic).  la/lb also carry the 2x2-pool rows (folded).
            la = mm(ghp, a)
            lb = mm(ghp, b)
            la2 = mm(ghp, a * a)
            lb2 = mm(ghp, b * b)
            lab = mm(ghp, a * b)

            pho = s['pho']                               # P * Ho rows of window stats
            mu1 = mm(la[:pho], gw)
            mu2 = mm(lb[:pho], gw)
            s11 = mm(la2[:pho], gw)
            s22 = mm(lb2[:pho], gw)
            s12 = mm(lab[:pho], gw)

            mu1_sq = mu1 * mu1
            mu2_sq = mu2 * mu2
            mu1_mu2 = mu1 * mu2
            sigma1_sq = s11 - mu1_sq
            sigma2_sq = s22 - mu2_sq
            sigma12 = s12 - mu1_mu2

            v1 = 2.0 * sigma12 + c2
            v2 = sigma1_sq + sigma2_sq + c2 + 1e-8       # 1e-8: as in reference
            cs_map = v1 / v2
            ssim_map = ((2.0 * mu1_mu2 + c1) * v1 /
                        ((mu1_sq + mu2_sq + c1) * v2 + 1e-6))   # 1e-6: as in reference

            inv_count = 1.0 / float(pho * s['wo'])       # mean over (N, C, Ho, Wo)
            out_refs[2 * lvl][...] = (jnp.sum(ssim_map) * inv_count).reshape(1, 1)
            out_refs[2 * lvl + 1][...] = (jnp.sum(cs_map) * inv_count).reshape(1, 1)

            if not s['last']:
                # 2x2 average pool for the next level, straight from the pool
                # rows of the fused left matmul (stays in VMEM).
                a = mm(la[s['pho_pad']:], pw)
                b = mm(lb[s['pho_pad']:], pw)

    return kernel, n_consts


# ---------------------------------------------------------------------------
# MS-SSIM wrapper (mirrors the PyTorch reference)
# ---------------------------------------------------------------------------

def msssim(img1, img2, window_size=11, size_average=True, val_range=None,
           normalize=False):
    if not size_average:
        # TODO(synk): size_average=False (per-image means) not implemented;
        # the module's forward always uses the default size_average=True.
        raise NotImplementedError("size_average=False not supported")

    n, c, h, w = img1.shape
    levels = 5
    assert min(h, w) >= 2 ** (levels - 1), "spatial dims too small for 5 MS-SSIM levels"

    p = n * c
    # Stack all depthwise planes along rows: (N, C, H, W) -> (N*C*H, W).
    x1 = img1.reshape(p * h, w).astype(jnp.float32)
    x2 = img2.reshape(p * h, w).astype(jnp.float32)

    consts, shapes = _build_level_constants(p, h, w, window_size, levels)
    kernel, n_consts = _make_msssim_kernel(shapes, val_range)

    vmem = pl.BlockSpec(memory_space=pltpu.MemorySpace.VMEM)
    out_shape = tuple(jax.ShapeDtypeStruct((1, 1), jnp.float32)
                      for _ in range(2 * levels))
    outs = pl.pallas_call(
        kernel,
        out_shape=out_shape,
        in_specs=[vmem] * (2 + n_consts),
        out_specs=tuple([vmem] * (2 * levels)),
    )(x1, x2, *consts)

    mssim_t = jnp.stack([outs[2 * l][0, 0] for l in range(levels)])
    mcs_t = jnp.stack([outs[2 * l + 1][0, 0] for l in range(levels)])

    weights = jnp.array([0.0448, 0.2856, 0.3001, 0.2363, 0.1333], jnp.float32)
    if normalize:
        mssim_t = (mssim_t + 1.0) / 2.0
        mcs_t = (mcs_t + 1.0) / 2.0
    pow1 = mcs_t ** weights
    pow2 = mssim_t ** weights
    return jnp.prod(pow1[:-1] * pow2[-1])      # literal translation of the reference


class MSSSIM:
    """Forward-only mirror of the PyTorch MSSSIM module."""

    def __init__(self, window_size=11, size_average=True, channel=3):
        self.window_size = window_size
        self.size_average = size_average
        self.channel = channel

    def __call__(self, img1, img2):
        return msssim(img1, img2, window_size=self.window_size,
                      size_average=self.size_average)


if __name__ == "__main__":
    key = jax.random.PRNGKey(0)
    k1, k2 = jax.random.split(key)
    # 5-level MS-SSIM pools 2x at every level, so spatial dims >= 32 keep every
    # level well formed.  Images in [0, 1] so the value-range heuristic picks
    # L = 1, and img2 is a noisy copy of img1 so all SSIM/CS terms stay
    # positive for the fractional weight powers (same constraint as the
    # reference).
    img1 = jax.random.uniform(k1, (2, 3, 32, 32), dtype=jnp.float32)
    noise = 0.05 * jax.random.normal(k2, (2, 3, 32, 32), dtype=jnp.float32)
    img2 = jnp.clip(img1 + noise, 0.0, 1.0)

    model = MSSSIM(window_size=11, size_average=True, channel=3)
    loss_fn = jax.jit(lambda a, b: model(a, b))
    out = loss_fn(img1, img2)
    out = jax.block_until_ready(out)
    assert out.shape == ()
    assert bool(jnp.isfinite(out))
    print("KERNEL_OK")
</pallas_src>

<mosaic_0001>
module attributes {stable_mosaic.version = 11 : i64} {
  func.func @kernel(%arg0: memref<192x32xf32, #tpu.memory_space<vmem>>, %arg1: memref<192x32xf32, #tpu.memory_space<vmem>>, %arg2: memref<232x192xf32, #tpu.memory_space<vmem>>, %arg3: memref<32x22xf32, #tpu.memory_space<vmem>>, %arg4: memref<32x16xf32, #tpu.memory_space<vmem>>, %arg5: memref<88x96xf32, #tpu.memory_space<vmem>>, %arg6: memref<16x6xf32, #tpu.memory_space<vmem>>, %arg7: memref<16x8xf32, #tpu.memory_space<vmem>>, %arg8: memref<32x48xf32, #tpu.memory_space<vmem>>, %arg9: memref<8x1xf32, #tpu.memory_space<vmem>>, %arg10: memref<8x4xf32, #tpu.memory_space<vmem>>, %arg11: memref<20x24xf32, #tpu.memory_space<vmem>>, %arg12: memref<4x1xf32, #tpu.memory_space<vmem>>, %arg13: memref<4x2xf32, #tpu.memory_space<vmem>>, %arg14: memref<6x12xf32, #tpu.memory_space<vmem>>, %arg15: memref<2x1xf32, #tpu.memory_space<vmem>>, %arg16: memref<1x1xf32, #tpu.memory_space<vmem>>, %arg17: memref<1x1xf32, #tpu.memory_space<vmem>>, %arg18: memref<1x1xf32, #tpu.memory_space<vmem>>, %arg19: memref<1x1xf32, #tpu.memory_space<vmem>>, %arg20: memref<1x1xf32, #tpu.memory_space<vmem>>, %arg21: memref<1x1xf32, #tpu.memory_space<vmem>>, %arg22: memref<1x1xf32, #tpu.memory_space<vmem>>, %arg23: memref<1x1xf32, #tpu.memory_space<vmem>>, %arg24: memref<1x1xf32, #tpu.memory_space<vmem>>, %arg25: memref<1x1xf32, #tpu.memory_space<vmem>>) attributes {dimension_semantics = [], scalar_prefetch = 0 : i64, scratch_operands = 0 : i64, tpu.core_type = #tpu.core_type<tc>} {
    %c0 = arith.constant 0 : index
    %c0_0 = arith.constant 0 : index
    %0 = vector.load %arg0[%c0, %c0_0] : memref<192x32xf32, #tpu.memory_space<vmem>>, vector<192x32xf32>
    %c0_1 = arith.constant 0 : index
    %c0_2 = arith.constant 0 : index
    %1 = vector.load %arg1[%c0_1, %c0_2] : memref<192x32xf32, #tpu.memory_space<vmem>>, vector<192x32xf32>
    %c0_3 = arith.constant 0 : index
    %c0_4 = arith.constant 0 : index
    %2 = vector.load %arg2[%c0_3, %c0_4] : memref<232x192xf32, #tpu.memory_space<vmem>>, vector<232x192xf32>
    %c0_5 = arith.constant 0 : index
    %c0_6 = arith.constant 0 : index
    %3 = vector.load %arg3[%c0_5, %c0_6] : memref<32x22xf32, #tpu.memory_space<vmem>>, vector<32x22xf32>
    %c0_7 = arith.constant 0 : index
    %c0_8 = arith.constant 0 : index
    %4 = vector.load %arg4[%c0_7, %c0_8] : memref<32x16xf32, #tpu.memory_space<vmem>>, vector<32x16xf32>
    %5 = vector.shape_cast %0 : vector<192x32xf32> to vector<1x192x32xf32>
    %cst = arith.constant dense<0xFF800000> : vector<1xf32>
    %6 = vector.multi_reduction <maximumf>, %5, %cst [1, 2] : vector<1x192x32xf32> to vector<1xf32>
    %7 = vector.shape_cast %6 : vector<1xf32> to vector<1x1x1xf32>
    %8 = vector.extract %7[0, 0, 0] : f32 from vector<1x1x1xf32>
    %cst_9 = arith.constant 1.280000e+02 : f32
    %9 = arith.cmpf ogt, %8, %cst_9 : f32
    %cst_10 = arith.constant 2.550000e+02 : f32
    %cst_11 = arith.constant 1.000000e+00 : f32
    %10 = arith.select %9, %cst_10, %cst_11 : f32
    %11 = vector.shape_cast %0 : vector<192x32xf32> to vector<1x192x32xf32>
    %cst_12 = arith.constant dense<0x7F800000> : vector<1xf32>
    %12 = vector.multi_reduction <minimumf>, %11, %cst_12 [1, 2] : vector<1x192x32xf32> to vector<1xf32>
    %13 = vector.shape_cast %12 : vector<1xf32> to vector<1x1x1xf32>
    %14 = vector.extract %13[0, 0, 0] : f32 from vector<1x1x1xf32>
    %cst_13 = arith.constant -5.000000e-01 : f32
    %15 = arith.cmpf olt, %14, %cst_13 : f32
    %cst_14 = arith.constant -1.000000e+00 : f32
    %cst_15 = arith.constant 0.000000e+00 : f32
    %16 = arith.select %15, %cst_14, %cst_15 : f32
    %17 = arith.subf %10, %16 : f32
    %cst_16 = arith.constant 0.00999999977 : f32
    %18 = arith.mulf %cst_16, %17 : f32
    %cst_17 = arith.constant 0.00999999977 : f32
    %19 = arith.mulf %cst_17, %17 : f32
    %20 = arith.mulf %18, %19 : f32
    %cst_18 = arith.constant 3.000000e-02 : f32
    %21 = arith.mulf %cst_18, %17 : f32
    %cst_19 = arith.constant 3.000000e-02 : f32
    %22 = arith.mulf %cst_19, %17 : f32
    %23 = arith.mulf %21, %22 : f32
    %cst_20 = arith.constant dense<0.000000e+00> : vector<232x32xf32>
    %24 = tpu.matmul %2, %0, %cst_20 {dimension_numbers = #tpu.dot_dimension_numbers<[1], [0], [0], [1], [0, 0, 1, 1], [], []>} : vector<232x192xf32>, vector<192x32xf32>, vector<232x32xf32> -> vector<232x32xf32>
    %cst_21 = arith.constant dense<0.000000e+00> : vector<232x32xf32>
    %25 = tpu.matmul %2, %1, %cst_21 {dimension_numbers = #tpu.dot_dimension_numbers<[1], [0], [0], [1], [0, 0, 1, 1], [], []>} : vector<232x192xf32>, vector<192x32xf32>, vector<232x32xf32> -> vector<232x32xf32>
    %26 = arith.mulf %0, %0 : vector<192x32xf32>
    %cst_22 = arith.constant dense<0.000000e+00> : vector<232x32xf32>
    %27 = tpu.matmul %2, %26, %cst_22 {dimension_numbers = #tpu.dot_dimension_numbers<[1], [0], [0], [1], [0, 0, 1, 1], [], []>} : vector<232x192xf32>, vector<192x32xf32>, vector<232x32xf32> -> vector<232x32xf32>
    %28 = arith.mulf %1, %1 : vector<192x32xf32>
    %cst_23 = arith.constant dense<0.000000e+00> : vector<232x32xf32>
    %29 = tpu.matmul %2, %28, %cst_23 {dimension_numbers = #tpu.dot_dimension_numbers<[1], [0], [0], [1], [0, 0, 1, 1], [], []>} : vector<232x192xf32>, vector<192x32xf32>, vector<232x32xf32> -> vector<232x32xf32>
    %30 = arith.mulf %0, %1 : vector<192x32xf32>
    %cst_24 = arith.constant dense<0.000000e+00> : vector<232x32xf32>
    %31 = tpu.matmul %2, %30, %cst_24 {dimension_numbers = #tpu.dot_dimension_numbers<[1], [0], [0], [1], [0, 0, 1, 1], [], []>} : vector<232x192xf32>, vector<192x32xf32>, vector<232x32xf32> -> vector<232x32xf32>
    %32 = vector.extract_strided_slice %24 {offsets = [0, 0], sizes = [132, 32], strides = [1, 1]} : vector<232x32xf32> to vector<132x32xf32>
    %cst_25 = arith.constant dense<0.000000e+00> : vector<132x22xf32>
    %33 = tpu.matmul %32, %3, %cst_25 {dimension_numbers = #tpu.dot_dimension_numbers<[1], [0], [0], [1], [0, 0, 1, 1], [], []>} : vector<132x32xf32>, vector<32x22xf32>, vector<132x22xf32> -> vector<132x22xf32>
    %34 = vector.extract_strided_slice %25 {offsets = [0, 0], sizes = [132, 32], strides = [1, 1]} : vector<232x32xf32> to vector<132x32xf32>
    %cst_26 = arith.constant dense<0.000000e+00> : vector<132x22xf32>
    %35 = tpu.matmul %34, %3, %cst_26 {dimension_numbers = #tpu.dot_dimension_numbers<[1], [0], [0], [1], [0, 0, 1, 1], [], []>} : vector<132x32xf32>, vector<32x22xf32>, vector<132x22xf32> -> vector<132x22xf32>
    %36 = vector.extract_strided_slice %27 {offsets = [0, 0], sizes = [132, 32], strides = [1, 1]} : vector<232x32xf32> to vector<132x32xf32>
    %cst_27 = arith.constant dense<0.000000e+00> : vector<132x22xf32>
    %37 = tpu.matmul %36, %3, %cst_27 {dimension_numbers = #tpu.dot_dimension_numbers<[1], [0], [0], [1], [0, 0, 1, 1], [], []>} : vector<132x32xf32>, vector<32x22xf32>, vector<132x22xf32> -> vector<132x22xf32>
    %38 = vector.extract_strided_slice %29 {offsets = [0, 0], sizes = [132, 32], strides = [1, 1]} : vector<232x32xf32> to vector<132x32xf32>
    %cst_28 = arith.constant dense<0.000000e+00> : vector<132x22xf32>
    %39 = tpu.matmul %38, %3, %cst_28 {dimension_numbers = #tpu.dot_dimension_numbers<[1], [0], [0], [1], [0, 0, 1, 1], [], []>} : vector<132x32xf32>, vector<32x22xf32>, vector<132x22xf32> -> vector<132x22xf32>
    %40 = vector.extract_strided_slice %31 {offsets = [0, 0], sizes = [132, 32], strides = [1, 1]} : vector<232x32xf32> to vector<132x32xf32>
    %cst_29 = arith.constant dense<0.000000e+00> : vector<132x22xf32>
    %41 = tpu.matmul %40, %3, %cst_29 {dimension_numbers = #tpu.dot_dimension_numbers<[1], [0], [0], [1], [0, 0, 1, 1], [], []>} : vector<132x32xf32>, vector<32x22xf32>, vector<132x22xf32> -> vector<132x22xf32>
    %42 = arith.mulf %33, %33 : vector<132x22xf32>
    %43 = arith.mulf %35, %35 : vector<132x22xf32>
    %44 = arith.mulf %33, %35 : vector<132x22xf32>
    %45 = arith.subf %37, %42 : vector<132x22xf32>
    %46 = arith.subf %39, %43 : vector<132x22xf32>
    %47 = arith.subf %41, %44 : vector<132x22xf32>
    %cst_30 = arith.constant 2.000000e+00 : f32
    %48 = vector.broadcast %cst_30 : f32 to vector<132x22xf32>
    %49 = arith.mulf %48, %47 : vector<132x22xf32>
    %50 = vector.broadcast %23 : f32 to vector<132x22xf32>
    %51 = arith.addf %49, %50 : vector<132x22xf32>
    %52 = arith.addf %45, %46 : vector<132x22xf32>
    %53 = vector.broadcast %23 : f32 to vector<132x22xf32>
    %54 = arith.addf %52, %53 : vector<132x22xf32>
    %cst_31 = arith.constant 9.99999993E-9 : f32
    %55 = vector.broadcast %cst_31 : f32 to vector<132x22xf32>
    %56 = arith.addf %54, %55 : vector<132x22xf32>
    %57 = arith.divf %51, %56 : vector<132x22xf32>
    %cst_32 = arith.constant 2.000000e+00 : f32
    %58 = vector.broadcast %cst_32 : f32 to vector<132x22xf32>
    %59 = arith.mulf %58, %44 : vector<132x22xf32>
    %60 = vector.broadcast %20 : f32 to vector<132x22xf32>
    %61 = arith.addf %59, %60 : vector<132x22xf32>
    %62 = arith.mulf %61, %51 : vector<132x22xf32>
    %63 = arith.addf %42, %43 : vector<132x22xf32>
    %64 = vector.broadcast %20 : f32 to vector<132x22xf32>
    %65 = arith.addf %63, %64 : vector<132x22xf32>
    %66 = arith.mulf %65, %56 : vector<132x22xf32>
    %cst_33 = arith.constant 9.99999997E-7 : f32
    %67 = vector.broadcast %cst_33 : f32 to vector<132x22xf32>
    %68 = arith.addf %66, %67 : vector<132x22xf32>
    %69 = arith.divf %62, %68 : vector<132x22xf32>
    %70 = vector.shape_cast %69 : vector<132x22xf32> to vector<1x132x22xf32>
    %cst_34 = arith.constant dense<0.000000e+00> : vector<1xf32>
    %71 = vector.multi_reduction <add>, %70, %cst_34 [1, 2] : vector<1x132x22xf32> to vector<1xf32>
    %72 = vector.shape_cast %71 : vector<1xf32> to vector<1x1x1xf32>
    %73 = vector.extract %72[0, 0, 0] : f32 from vector<1x1x1xf32>
    %cst_35 = arith.constant 3.44352622E-4 : f32
    %74 = arith.mulf %73, %cst_35 : f32
    %75 = vector.broadcast %74 : f32 to vector<1x1xf32>
    %c0_36 = arith.constant 0 : index
    %c0_37 = arith.constant 0 : index
    %76 = vector.load %arg16[%c0_36, %c0_37] : memref<1x1xf32, #tpu.memory_space<vmem>>, vector<1x1xf32>
    tpu.vector_store %arg16[%c0_36, %c0_37], %75 {strides = array<i32>} : memref<1x1xf32, #tpu.memory_space<vmem>>, vector<1x1xf32>,
    %77 = vector.shape_cast %57 : vector<132x22xf32> to vector<1x132x22xf32>
    %cst_38 = arith.constant dense<0.000000e+00> : vector<1xf32>
    %78 = vector.multi_reduction <add>, %77, %cst_38 [1, 2] : vector<1x132x22xf32> to vector<1xf32>
    %79 = vector.shape_cast %78 : vector<1xf32> to vector<1x1x1xf32>
    %80 = vector.extract %79[0, 0, 0] : f32 from vector<1x1x1xf32>
    %cst_39 = arith.constant 3.44352622E-4 : f32
    %81 = arith.mulf %80, %cst_39 : f32
    %82 = vector.broadcast %81 : f32 to vector<1x1xf32>
    %c0_40 = arith.constant 0 : index
    %c0_41 = arith.constant 0 : index
    %83 = vector.load %arg17[%c0_40, %c0_41] : memref<1x1xf32, #tpu.memory_space<vmem>>, vector<1x1xf32>
    tpu.vector_store %arg17[%c0_40, %c0_41], %82 {strides = array<i32>} : memref<1x1xf32, #tpu.memory_space<vmem>>, vector<1x1xf32>,
    %84 = vector.extract_strided_slice %24 {offsets = [136, 0], sizes = [96, 32], strides = [1, 1]} : vector<232x32xf32> to vector<96x32xf32>
    %cst_42 = arith.constant dense<0.000000e+00> : vector<96x16xf32>
    %85 = tpu.matmul %84, %4, %cst_42 {dimension_numbers = #tpu.dot_dimension_numbers<[1], [0], [0], [1], [0, 0, 1, 1], [], []>} : vector<96x32xf32>, vector<32x16xf32>, vector<96x16xf32> -> vector<96x16xf32>
    %86 = vector.extract_strided_slice %25 {offsets = [136, 0], sizes = [96, 32], strides = [1, 1]} : vector<232x32xf32> to vector<96x32xf32>
    %cst_43 = arith.constant dense<0.000000e+00> : vector<96x16xf32>
    %87 = tpu.matmul %86, %4, %cst_43 {dimension_numbers = #tpu.dot_dimension_numbers<[1], [0], [0], [1], [0, 0, 1, 1], [], []>} : vector<96x32xf32>, vector<32x16xf32>, vector<96x16xf32> -> vector<96x16xf32>
    %c0_44 = arith.constant 0 : index
    %c0_45 = arith.constant 0 : index
    %88 = vector.load %arg5[%c0_44, %c0_45] : memref<88x96xf32, #tpu.memory_space<vmem>>, vector<88x96xf32>
    %c0_46 = arith.constant 0 : index
    %c0_47 = arith.constant 0 : index
    %89 = vector.load %arg6[%c0_46, %c0_47] : memref<16x6xf32, #tpu.memory_space<vmem>>, vector<16x6xf32>
    %c0_48 = arith.constant 0 : index
    %c0_49 = arith.constant 0 : index
    %90 = vector.load %arg7[%c0_48, %c0_49] : memref<16x8xf32, #tpu.memory_space<vmem>>, vector<16x8xf32>
    %91 = vector.shape_cast %85 : vector<96x16xf32> to vector<1x96x16xf32>
    %cst_50 = arith.constant dense<0xFF800000> : vector<1xf32>
    %92 = vector.multi_reduction <maximumf>, %91, %cst_50 [1, 2] : vector<1x96x16xf32> to vector<1xf32>
    %93 = vector.shape_cast %92 : vector<1xf32> to vector<1x1x1xf32>
    %94 = vector.extract %93[0, 0, 0] : f32 from vector<1x1x1xf32>
    %cst_51 = arith.constant 1.280000e+02 : f32
    %95 = arith.cmpf ogt, %94, %cst_51 : f32
    %cst_52 = arith.constant 2.550000e+02 : f32
    %cst_53 = arith.constant 1.000000e+00 : f32
    %96 = arith.select %95, %cst_52, %cst_53 : f32
    %97 = vector.shape_cast %85 : vector<96x16xf32> to vector<1x96x16xf32>
    %cst_54 = arith.constant dense<0x7F800000> : vector<1xf32>
    %98 = vector.multi_reduction <minimumf>, %97, %cst_54 [1, 2] : vector<1x96x16xf32> to vector<1xf32>
    %99 = vector.shape_cast %98 : vector<1xf32> to vector<1x1x1xf32>
    %100 = vector.extract %99[0, 0, 0] : f32 from vector<1x1x1xf32>
    %cst_55 = arith.constant -5.000000e-01 : f32
    %101 = arith.cmpf olt, %100, %cst_55 : f32
    %cst_56 = arith.constant -1.000000e+00 : f32
    %cst_57 = arith.constant 0.000000e+00 : f32
    %102 = arith.select %101, %cst_56, %cst_57 : f32
    %103 = arith.subf %96, %102 : f32
    %cst_58 = arith.constant 0.00999999977 : f32
    %104 = arith.mulf %cst_58, %103 : f32
    %cst_59 = arith.constant 0.00999999977 : f32
    %105 = arith.mulf %cst_59, %103 : f32
    %106 = arith.mulf %104, %105 : f32
    %cst_60 = arith.constant 3.000000e-02 : f32
    %107 = arith.mulf %cst_60, %103 : f32
    %cst_61 = arith.constant 3.000000e-02 : f32
    %108 = arith.mulf %cst_61, %103 : f32
    %109 = arith.mulf %107, %108 : f32
    %cst_62 = arith.constant dense<0.000000e+00> : vector<88x16xf32>
    %110 = tpu.matmul %88, %85, %cst_62 {dimension_numbers = #tpu.dot_dimension_numbers<[1], [0], [0], [1], [0, 0, 1, 1], [], []>} : vector<88x96xf32>, vector<96x16xf32>, vector<88x16xf32> -> vector<88x16xf32>
    %cst_63 = arith.constant dense<0.000000e+00> : vector<88x16xf32>
    %111 = tpu.matmul %88, %87, %cst_63 {dimension_numbers = #tpu.dot_dimension_numbers<[1], [0], [0], [1], [0, 0, 1, 1], [], []>} : vector<88x96xf32>, vector<96x16xf32>, vector<88x16xf32> -> vector<88x16xf32>
    %112 = arith.mulf %85, %85 : vector<96x16xf32>
    %cst_64 = arith.constant dense<0.000000e+00> : vector<88x16xf32>
    %113 = tpu.matmul %88, %112, %cst_64 {dimension_numbers = #tpu.dot_dimension_numbers<[1], [0], [0], [1], [0, 0, 1, 1], [], []>} : vector<88x96xf32>, vector<96x16xf32>, vector<88x16xf32> -> vector<88x16xf32>
    %114 = arith.mulf %87, %87 : vector<96x16xf32>
    %cst_65 = arith.constant dense<0.000000e+00> : vector<88x16xf32>
    %115 = tpu.matmul %88, %114, %cst_65 {dimension_numbers = #tpu.dot_dimension_numbers<[1], [0], [0], [1], [0, 0, 1, 1], [], []>} : vector<88x96xf32>, vector<96x16xf32>, vector<88x16xf32> -> vector<88x16xf32>
    %116 = arith.mulf %85, %87 : vector<96x16xf32>
    %cst_66 = arith.constant dense<0.000000e+00> : vector<88x16xf32>
    %117 = tpu.matmul %88, %116, %cst_66 {dimension_numbers = #tpu.dot_dimension_numbers<[1], [0], [0], [1], [0, 0, 1, 1], [], []>} : vector<88x96xf32>, vector<96x16xf32>, vector<88x16xf32> -> vector<88x16xf32>
    %118 = vector.extract_strided_slice %110 {offsets = [0, 0], sizes = [36, 16], strides = [1, 1]} : vector<88x16xf32> to vector<36x16xf32>
    %cst_67 = arith.constant dense<0.000000e+00> : vector<36x6xf32>
    %119 = tpu.matmul %118, %89, %cst_67 {dimension_numbers = #tpu.dot_dimension_numbers<[1], [0], [0], [1], [0, 0, 1, 1], [], []>} : vector<36x16xf32>, vector<16x6xf32>, vector<36x6xf32> -> vector<36x6xf32>
    %120 = vector.extract_strided_slice %111 {offsets = [0, 0], sizes = [36, 16], strides = [1, 1]} : vector<88x16xf32> to vector<36x16xf32>
    %cst_68 = arith.constant dense<0.000000e+00> : vector<36x6xf32>
    %121 = tpu.matmul %120, %89, %cst_68 {dimension_numbers = #tpu.dot_dimension_numbers<[1], [0], [0], [1], [0, 0, 1, 1], [], []>} : vector<36x16xf32>, vector<16x6xf32>, vector<36x6xf32> -> vector<36x6xf32>
    %122 = vector.extract_strided_slice %113 {offsets = [0, 0], sizes = [36, 16], strides = [1, 1]} : vector<88x16xf32> to vector<36x16xf32>
    %cst_69 = arith.constant dense<0.000000e+00> : vector<36x6xf32>
    %123 = tpu.matmul %122, %89, %cst_69 {dimension_numbers = #tpu.dot_dimension_numbers<[1], [0], [0], [1], [0, 0, 1, 1], [], []>} : vector<36x16xf32>, vector<16x6xf32>, vector<36x6xf32> -> vector<36x6xf32>
    %124 = vector.extract_strided_slice %115 {offsets = [0, 0], sizes = [36, 16], strides = [1, 1]} : vector<88x16xf32> to vector<36x16xf32>
    %cst_70 = arith.constant dense<0.000000e+00> : vector<36x6xf32>
    %125 = tpu.matmul %124, %89, %cst_70 {dimension_numbers = #tpu.dot_dimension_numbers<[1], [0], [0], [1], [0, 0, 1, 1], [], []>} : vector<36x16xf32>, vector<16x6xf32>, vector<36x6xf32> -> vector<36x6xf32>
    %126 = vector.extract_strided_slice %117 {offsets = [0, 0], sizes = [36, 16], strides = [1, 1]} : vector<88x16xf32> to vector<36x16xf32>
    %cst_71 = arith.constant dense<0.000000e+00> : vector<36x6xf32>
    %127 = tpu.matmul %126, %89, %cst_71 {dimension_numbers = #tpu.dot_dimension_numbers<[1], [0], [0], [1], [0, 0, 1, 1], [], []>} : vector<36x16xf32>, vector<16x6xf32>, vector<36x6xf32> -> vector<36x6xf32>
    %128 = arith.mulf %119, %119 : vector<36x6xf32>
    %129 = arith.mulf %121, %121 : vector<36x6xf32>
    %130 = arith.mulf %119, %121 : vector<36x6xf32>
    %131 = arith.subf %123, %128 : vector<36x6xf32>
    %132 = arith.subf %125, %129 : vector<36x6xf32>
    %133 = arith.subf %127, %130 : vector<36x6xf32>
    %cst_72 = arith.constant 2.000000e+00 : f32
    %134 = vector.broadcast %cst_72 : f32 to vector<36x6xf32>
    %135 = arith.mulf %134, %133 : vector<36x6xf32>
    %136 = vector.broadcast %109 : f32 to vector<36x6xf32>
    %137 = arith.addf %135, %136 : vector<36x6xf32>
    %138 = arith.addf %131, %132 : vector<36x6xf32>
    %139 = vector.broadcast %109 : f32 to vector<36x6xf32>
    %140 = arith.addf %138, %139 : vector<36x6xf32>
    %cst_73 = arith.constant 9.99999993E-9 : f32
    %141 = vector.broadcast %cst_73 : f32 to vector<36x6xf32>
    %142 = arith.addf %140, %141 : vector<36x6xf32>
    %143 = arith.divf %137, %142 : vector<36x6xf32>
    %cst_74 = arith.constant 2.000000e+00 : f32
    %144 = vector.broadcast %cst_74 : f32 to vector<36x6xf32>
    %145 = arith.mulf %144, %130 : vector<36x6xf32>
    %146 = vector.broadcast %106 : f32 to vector<36x6xf32>
    %147 = arith.addf %145, %146 : vector<36x6xf32>
    %148 = arith.mulf %147, %137 : vector<36x6xf32>
    %149 = arith.addf %128, %129 : vector<36x6xf32>
    %150 = vector.broadcast %106 : f32 to vector<36x6xf32>
    %151 = arith.addf %149, %150 : vector<36x6xf32>
    %152 = arith.mulf %151, %142 : vector<36x6xf32>
    %cst_75 = arith.constant 9.99999997E-7 : f32
    %153 = vector.broadcast %cst_75 : f32 to vector<36x6xf32>
    %154 = arith.addf %152, %153 : vector<36x6xf32>
    %155 = arith.divf %148, %154 : vector<36x6xf32>
    %156 = vector.shape_cast %155 : vector<36x6xf32> to vector<1x36x6xf32>
    %cst_76 = arith.constant dense<0.000000e+00> : vector<1xf32>
    %157 = vector.multi_reduction <add>, %156, %cst_76 [1, 2] : vector<1x36x6xf32> to vector<1xf32>
    %158 = vector.shape_cast %157 : vector<1xf32> to vector<1x1x1xf32>
    %159 = vector.extract %158[0, 0, 0] : f32 from vector<1x1x1xf32>
    %cst_77 = arith.constant 0.00462962966 : f32
    %160 = arith.mulf %159, %cst_77 : f32
    %161 = vector.broadcast %160 : f32 to vector<1x1xf32>
    %c0_78 = arith.constant 0 : index
    %c0_79 = arith.constant 0 : index
    %162 = vector.load %arg18[%c0_78, %c0_79] : memref<1x1xf32, #tpu.memory_space<vmem>>, vector<1x1xf32>
    tpu.vector_store %arg18[%c0_78, %c0_79], %161 {strides = array<i32>} : memref<1x1xf32, #tpu.memory_space<vmem>>, vector<1x1xf32>,
    %163 = vector.shape_cast %143 : vector<36x6xf32> to vector<1x36x6xf32>
    %cst_80 = arith.constant dense<0.000000e+00> : vector<1xf32>
    %164 = vector.multi_reduction <add>, %163, %cst_80 [1, 2] : vector<1x36x6xf32> to vector<1xf32>
    %165 = vector.shape_cast %164 : vector<1xf32> to vector<1x1x1xf32>
    %166 = vector.extract %165[0, 0, 0] : f32 from vector<1x1x1xf32>
    %cst_81 = arith.constant 0.00462962966 : f32
    %167 = arith.mulf %166, %cst_81 : f32
    %168 = vector.broadcast %167 : f32 to vector<1x1xf32>
    %c0_82 = arith.constant 0 : index
    %c0_83 = arith.constant 0 : index
    %169 = vector.load %arg19[%c0_82, %c0_83] : memref<1x1xf32, #tpu.memory_space<vmem>>, vector<1x1xf32>
    tpu.vector_store %arg19[%c0_82, %c0_83], %168 {strides = array<i32>} : memref<1x1xf32, #tpu.memory_space<vmem>>, vector<1x1xf32>,
    %170 = vector.extract_strided_slice %110 {offsets = [40, 0], sizes = [48, 16], strides = [1, 1]} : vector<88x16xf32> to vector<48x16xf32>
    %cst_84 = arith.constant dense<0.000000e+00> : vector<48x8xf32>
    %171 = tpu.matmul %170, %90, %cst_84 {dimension_numbers = #tpu.dot_dimension_numbers<[1], [0], [0], [1], [0, 0, 1, 1], [], []>} : vector<48x16xf32>, vector<16x8xf32>, vector<48x8xf32> -> vector<48x8xf32>
    %172 = vector.extract_strided_slice %111 {offsets = [40, 0], sizes = [48, 16], strides = [1, 1]} : vector<88x16xf32> to vector<48x16xf32>
    %cst_85 = arith.constant dense<0.000000e+00> : vector<48x8xf32>
    %173 = tpu.matmul %172, %90, %cst_85 {dimension_numbers = #tpu.dot_dimension_numbers<[1], [0], [0], [1], [0, 0, 1, 1], [], []>} : vector<48x16xf32>, vector<16x8xf32>, vector<48x8xf32> -> vector<48x8xf32>
    %c0_86 = arith.constant 0 : index
    %c0_87 = arith.constant 0 : index
    %174 = vector.load %arg8[%c0_86, %c0_87] : memref<32x48xf32, #tpu.memory_space<vmem>>, vector<32x48xf32>
    %c0_88 = arith.constant 0 : index
    %c0_89 = arith.constant 0 : index
    %175 = vector.load %arg9[%c0_88, %c0_89] : memref<8x1xf32, #tpu.memory_space<vmem>>, vector<8x1xf32>
    %c0_90 = arith.constant 0 : index
    %c0_91 = arith.constant 0 : index
    %176 = vector.load %arg10[%c0_90, %c0_91] : memref<8x4xf32, #tpu.memory_space<vmem>>, vector<8x4xf32>
    %177 = vector.shape_cast %171 : vector<48x8xf32> to vector<1x48x8xf32>
    %cst_92 = arith.constant dense<0xFF800000> : vector<1xf32>
    %178 = vector.multi_reduction <maximumf>, %177, %cst_92 [1, 2] : vector<1x48x8xf32> to vector<1xf32>
    %179 = vector.shape_cast %178 : vector<1xf32> to vector<1x1x1xf32>
    %180 = vector.extract %179[0, 0, 0] : f32 from vector<1x1x1xf32>
    %cst_93 = arith.constant 1.280000e+02 : f32
    %181 = arith.cmpf ogt, %180, %cst_93 : f32
    %cst_94 = arith.constant 2.550000e+02 : f32
    %cst_95 = arith.constant 1.000000e+00 : f32
    %182 = arith.select %181, %cst_94, %cst_95 : f32
    %183 = vector.shape_cast %171 : vector<48x8xf32> to vector<1x48x8xf32>
    %cst_96 = arith.constant dense<0x7F800000> : vector<1xf32>
    %184 = vector.multi_reduction <minimumf>, %183, %cst_96 [1, 2] : vector<1x48x8xf32> to vector<1xf32>
    %185 = vector.shape_cast %184 : vector<1xf32> to vector<1x1x1xf32>
    %186 = vector.extract %185[0, 0, 0] : f32 from vector<1x1x1xf32>
    %cst_97 = arith.constant -5.000000e-01 : f32
    %187 = arith.cmpf olt, %186, %cst_97 : f32
    %cst_98 = arith.constant -1.000000e+00 : f32
    %cst_99 = arith.constant 0.000000e+00 : f32
    %188 = arith.select %187, %cst_98, %cst_99 : f32
    %189 = arith.subf %182, %188 : f32
    %cst_100 = arith.constant 0.00999999977 : f32
    %190 = arith.mulf %cst_100, %189 : f32
    %cst_101 = arith.constant 0.00999999977 : f32
    %191 = arith.mulf %cst_101, %189 : f32
    %192 = arith.mulf %190, %191 : f32
    %cst_102 = arith.constant 3.000000e-02 : f32
    %193 = arith.mulf %cst_102, %189 : f32
    %cst_103 = arith.constant 3.000000e-02 : f32
    %194 = arith.mulf %cst_103, %189 : f32
    %195 = arith.mulf %193, %194 : f32
    %cst_104 = arith.constant dense<0.000000e+00> : vector<32x8xf32>
    %196 = tpu.matmul %174, %171, %cst_104 {dimension_numbers = #tpu.dot_dimension_numbers<[1], [0], [0], [1], [0, 0, 1, 1], [], []>} : vector<32x48xf32>, vector<48x8xf32>, vector<32x8xf32> -> vector<32x8xf32>
    %cst_105 = arith.constant dense<0.000000e+00> : vector<32x8xf32>
    %197 = tpu.matmul %174, %173, %cst_105 {dimension_numbers = #tpu.dot_dimension_numbers<[1], [0], [0], [1], [0, 0, 1, 1], [], []>} : vector<32x48xf32>, vector<48x8xf32>, vector<32x8xf32> -> vector<32x8xf32>
    %198 = arith.mulf %171, %171 : vector<48x8xf32>
    %cst_106 = arith.constant dense<0.000000e+00> : vector<32x8xf32>
    %199 = tpu.matmul %174, %198, %cst_106 {dimension_numbers = #tpu.dot_dimension_numbers<[1], [0], [0], [1], [0, 0, 1, 1], [], []>} : vector<32x48xf32>, vector<48x8xf32>, vector<32x8xf32> -> vector<32x8xf32>
    %200 = arith.mulf %173, %173 : vector<48x8xf32>
    %cst_107 = arith.constant dense<0.000000e+00> : vector<32x8xf32>
    %201 = tpu.matmul %174, %200, %cst_107 {dimension_numbers = #tpu.dot_dimension_numbers<[1], [0], [0], [1], [0, 0, 1, 1], [], []>} : vector<32x48xf32>, vector<48x8xf32>, vector<32x8xf32> -> vector<32x8xf32>
    %202 = arith.mulf %171, %173 : vector<48x8xf32>
    %cst_108 = arith.constant dense<0.000000e+00> : vector<32x8xf32>
    %203 = tpu.matmul %174, %202, %cst_108 {dimension_numbers = #tpu.dot_dimension_numbers<[1], [0], [0], [1], [0, 0, 1, 1], [], []>} : vector<32x48xf32>, vector<48x8xf32>, vector<32x8xf32> -> vector<32x8xf32>
    %204 = vector.extract_strided_slice %196 {offsets = [0, 0], sizes = [6, 8], strides = [1, 1]} : vector<32x8xf32> to vector<6x8xf32>
    %cst_109 = arith.constant dense<0.000000e+00> : vector<6x1xf32>
    %205 = tpu.matmul %204, %175, %cst_109 {dimension_numbers = #tpu.dot_dimension_numbers<[1], [0], [0], [1], [0, 0, 1, 1], [], []>} : vector<6x8xf32>, vector<8x1xf32>, vector<6x1xf32> -> vector<6x1xf32>
    %206 = vector.extract_strided_slice %197 {offsets = [0, 0], sizes = [6, 8], strides = [1, 1]} : vector<32x8xf32> to vector<6x8xf32>
    %cst_110 = arith.constant dense<0.000000e+00> : vector<6x1xf32>
    %207 = tpu.matmul %206, %175, %cst_110 {dimension_numbers = #tpu.dot_dimension_numbers<[1], [0], [0], [1], [0, 0, 1, 1], [], []>} : vector<6x8xf32>, vector<8x1xf32>, vector<6x1xf32> -> vector<6x1xf32>
    %208 = vector.extract_strided_slice %199 {offsets = [0, 0], sizes = [6, 8], strides = [1, 1]} : vector<32x8xf32> to vector<6x8xf32>
    %cst_111 = arith.constant dense<0.000000e+00> : vector<6x1xf32>
    %209 = tpu.matmul %208, %175, %cst_111 {dimension_numbers = #tpu.dot_dimension_numbers<[1], [0], [0], [1], [0, 0, 1, 1], [], []>} : vector<6x8xf32>, vector<8x1xf32>, vector<6x1xf32> -> vector<6x1xf32>
    %210 = vector.extract_strided_slice %201 {offsets = [0, 0], sizes = [6, 8], strides = [1, 1]} : vector<32x8xf32> to vector<6x8xf32>
    %cst_112 = arith.constant dense<0.000000e+00> : vector<6x1xf32>
    %211 = tpu.matmul %210, %175, %cst_112 {dimension_numbers = #tpu.dot_dimension_numbers<[1], [0], [0], [1], [0, 0, 1, 1], [], []>} : vector<6x8xf32>, vector<8x1xf32>, vector<6x1xf32> -> vector<6x1xf32>
    %212 = vector.extract_strided_slice %203 {offsets = [0, 0], sizes = [6, 8], strides = [1, 1]} : vector<32x8xf32> to vector<6x8xf32>
    %cst_113 = arith.constant dense<0.000000e+00> : vector<6x1xf32>
    %213 = tpu.matmul %212, %175, %cst_113 {dimension_numbers = #tpu.dot_dimension_numbers<[1], [0], [0], [1], [0, 0, 1, 1], [], []>} : vector<6x8xf32>, vector<8x1xf32>, vector<6x1xf32> -> vector<6x1xf32>
    %214 = arith.mulf %205, %205 : vector<6x1xf32>
    %215 = arith.mulf %207, %207 : vector<6x1xf32>
    %216 = arith.mulf %205, %207 : vector<6x1xf32>
    %217 = arith.subf %209, %214 : vector<6x1xf32>
    %218 = arith.subf %211, %215 : vector<6x1xf32>
    %219 = arith.subf %213, %216 : vector<6x1xf32>
    %cst_114 = arith.constant 2.000000e+00 : f32
    %220 = vector.broadcast %cst_114 : f32 to vector<6x1xf32>
    %221 = arith.mulf %220, %219 : vector<6x1xf32>
    %222 = vector.broadcast %195 : f32 to vector<6x1xf32>
    %223 = arith.addf %221, %222 : vector<6x1xf32>
    %224 = arith.addf %217, %218 : vector<6x1xf32>
    %225 = vector.broadcast %195 : f32 to vector<6x1xf32>
    %226 = arith.addf %224, %225 : vector<6x1xf32>
    %cst_115 = arith.constant 9.99999993E-9 : f32
    %227 = vector.broadcast %cst_115 : f32 to vector<6x1xf32>
    %228 = arith.addf %226, %227 : vector<6x1xf32>
    %229 = arith.divf %223, %228 : vector<6x1xf32>
    %cst_116 = arith.constant 2.000000e+00 : f32
    %230 = vector.broadcast %cst_116 : f32 to vector<6x1xf32>
    %231 = arith.mulf %230, %216 : vector<6x1xf32>
    %232 = vector.broadcast %192 : f32 to vector<6x1xf32>
    %233 = arith.addf %231, %232 : vector<6x1xf32>
    %234 = arith.mulf %233, %223 : vector<6x1xf32>
    %235 = arith.addf %214, %215 : vector<6x1xf32>
    %236 = vector.broadcast %192 : f32 to vector<6x1xf32>
    %237 = arith.addf %235, %236 : vector<6x1xf32>
    %238 = arith.mulf %237, %228 : vector<6x1xf32>
    %cst_117 = arith.constant 9.99999997E-7 : f32
    %239 = vector.broadcast %cst_117 : f32 to vector<6x1xf32>
    %240 = arith.addf %238, %239 : vector<6x1xf32>
    %241 = arith.divf %234, %240 : vector<6x1xf32>
    %242 = vector.shape_cast %241 : vector<6x1xf32> to vector<1x6x1xf32>
    %cst_118 = arith.constant dense<0.000000e+00> : vector<1xf32>
    %243 = vector.multi_reduction <add>, %242, %cst_118 [1, 2] : vector<1x6x1xf32> to vector<1xf32>
    %244 = vector.shape_cast %243 : vector<1xf32> to vector<1x1x1xf32>
    %245 = vector.extract %244[0, 0, 0] : f32 from vector<1x1x1xf32>
    %cst_119 = arith.constant 0.166666672 : f32
    %246 = arith.mulf %245, %cst_119 : f32
    %247 = vector.broadcast %246 : f32 to vector<1x1xf32>
    %c0_120 = arith.constant 0 : index
    %c0_121 = arith.constant 0 : index
    %248 = vector.load %arg20[%c0_120, %c0_121] : memref<1x1xf32, #tpu.memory_space<vmem>>, vector<1x1xf32>
    tpu.vector_store %arg20[%c0_120, %c0_121], %247 {strides = array<i32>} : memref<1x1xf32, #tpu.memory_space<vmem>>, vector<1x1xf32>,
    %249 = vector.shape_cast %229 : vector<6x1xf32> to vector<1x6x1xf32>
    %cst_122 = arith.constant dense<0.000000e+00> : vector<1xf32>
    %250 = vector.multi_reduction <add>, %249, %cst_122 [1, 2] : vector<1x6x1xf32> to vector<1xf32>
    %251 = vector.shape_cast %250 : vector<1xf32> to vector<1x1x1xf32>
    %252 = vector.extract %251[0, 0, 0] : f32 from vector<1x1x1xf32>
    %cst_123 = arith.constant 0.166666672 : f32
    %253 = arith.mulf %252, %cst_123 : f32
    %254 = vector.broadcast %253 : f32 to vector<1x1xf32>
    %c0_124 = arith.constant 0 : index
    %c0_125 = arith.constant 0 : index
    %255 = vector.load %arg21[%c0_124, %c0_125] : memref<1x1xf32, #tpu.memory_space<vmem>>, vector<1x1xf32>
    tpu.vector_store %arg21[%c0_124, %c0_125], %254 {strides = array<i32>} : memref<1x1xf32, #tpu.memory_space<vmem>>, vector<1x1xf32>,
    %256 = vector.extract_strided_slice %196 {offsets = [8, 0], sizes = [24, 8], strides = [1, 1]} : vector<32x8xf32> to vector<24x8xf32>
    %cst_126 = arith.constant dense<0.000000e+00> : vector<24x4xf32>
    %257 = tpu.matmul %256, %176, %cst_126 {dimension_numbers = #tpu.dot_dimension_numbers<[1], [0], [0], [1], [0, 0, 1, 1], [], []>} : vector<24x8xf32>, vector<8x4xf32>, vector<24x4xf32> -> vector<24x4xf32>
    %258 = vector.extract_strided_slice %197 {offsets = [8, 0], sizes = [24, 8], strides = [1, 1]} : vector<32x8xf32> to vector<24x8xf32>
    %cst_127 = arith.constant dense<0.000000e+00> : vector<24x4xf32>
    %259 = tpu.matmul %258, %176, %cst_127 {dimension_numbers = #tpu.dot_dimension_numbers<[1], [0], [0], [1], [0, 0, 1, 1], [], []>} : vector<24x8xf32>, vector<8x4xf32>, vector<24x4xf32> -> vector<24x4xf32>
    %c0_128 = arith.constant 0 : index
    %c0_129 = arith.constant 0 : index
    %260 = vector.load %arg11[%c0_128, %c0_129] : memref<20x24xf32, #tpu.memory_space<vmem>>, vector<20x24xf32>
    %c0_130 = arith.constant 0 : index
    %c0_131 = arith.constant 0 : index
    %261 = vector.load %arg12[%c0_130, %c0_131] : memref<4x1xf32, #tpu.memory_space<vmem>>, vector<4x1xf32>
    %c0_132 = arith.constant 0 : index
    %c0_133 = arith.constant 0 : index
    %262 = vector.load %arg13[%c0_132, %c0_133] : memref<4x2xf32, #tpu.memory_space<vmem>>, vector<4x2xf32>
    %263 = vector.shape_cast %257 : vector<24x4xf32> to vector<1x24x4xf32>
    %cst_134 = arith.constant dense<0xFF800000> : vector<1xf32>
    %264 = vector.multi_reduction <maximumf>, %263, %cst_134 [1, 2] : vector<1x24x4xf32> to vector<1xf32>
    %265 = vector.shape_cast %264 : vector<1xf32> to vector<1x1x1xf32>
    %266 = vector.extract %265[0, 0, 0] : f32 from vector<1x1x1xf32>
    %cst_135 = arith.constant 1.280000e+02 : f32
    %267 = arith.cmpf ogt, %266, %cst_135 : f32
    %cst_136 = arith.constant 2.550000e+02 : f32
    %cst_137 = arith.constant 1.000000e+00 : f32
    %268 = arith.select %267, %cst_136, %cst_137 : f32
    %269 = vector.shape_cast %257 : vector<24x4xf32> to vector<1x24x4xf32>
    %cst_138 = arith.constant dense<0x7F800000> : vector<1xf32>
    %270 = vector.multi_reduction <minimumf>, %269, %cst_138 [1, 2] : vector<1x24x4xf32> to vector<1xf32>
    %271 = vector.shape_cast %270 : vector<1xf32> to vector<1x1x1xf32>
    %272 = vector.extract %271[0, 0, 0] : f32 from vector<1x1x1xf32>
    %cst_139 = arith.constant -5.000000e-01 : f32
    %273 = arith.cmpf olt, %272, %cst_139 : f32
    %cst_140 = arith.constant -1.000000e+00 : f32
    %cst_141 = arith.constant 0.000000e+00 : f32
    %274 = arith.select %273, %cst_140, %cst_141 : f32
    %275 = arith.subf %268, %274 : f32
    %cst_142 = arith.constant 0.00999999977 : f32
    %276 = arith.mulf %cst_142, %275 : f32
    %cst_143 = arith.constant 0.00999999977 : f32
    %277 = arith.mulf %cst_143, %275 : f32
    %278 = arith.mulf %276, %277 : f32
    %cst_144 = arith.constant 3.000000e-02 : f32
    %279 = arith.mulf %cst_144, %275 : f32
    %cst_145 = arith.constant 3.000000e-02 : f32
    %280 = arith.mulf %cst_145, %275 : f32
    %281 = arith.mulf %279, %280 : f32
    %cst_146 = arith.constant dense<0.000000e+00> : vector<20x4xf32>
    %282 = tpu.matmul %260, %257, %cst_146 {dimension_numbers = #tpu.dot_dimension_numbers<[1], [0], [0], [1], [0, 0, 1, 1], [], []>} : vector<20x24xf32>, vector<24x4xf32>, vector<20x4xf32> -> vector<20x4xf32>
    %cst_147 = arith.constant dense<0.000000e+00> : vector<20x4xf32>
    %283 = tpu.matmul %260, %259, %cst_147 {dimension_numbers = #tpu.dot_dimension_numbers<[1], [0], [0], [1], [0, 0, 1, 1], [], []>} : vector<20x24xf32>, vector<24x4xf32>, vector<20x4xf32> -> vector<20x4xf32>
    %284 = arith.mulf %257, %257 : vector<24x4xf32>
    %cst_148 = arith.constant dense<0.000000e+00> : vector<20x4xf32>
    %285 = tpu.matmul %260, %284, %cst_148 {dimension_numbers = #tpu.dot_dimension_numbers<[1], [0], [0], [1], [0, 0, 1, 1], [], []>} : vector<20x24xf32>, vector<24x4xf32>, vector<20x4xf32> -> vector<20x4xf32>
    %286 = arith.mulf %259, %259 : vector<24x4xf32>
    %cst_149 = arith.constant dense<0.000000e+00> : vector<20x4xf32>
    %287 = tpu.matmul %260, %286, %cst_149 {dimension_numbers = #tpu.dot_dimension_numbers<[1], [0], [0], [1], [0, 0, 1, 1], [], []>} : vector<20x24xf32>, vector<24x4xf32>, vector<20x4xf32> -> vector<20x4xf32>
    %288 = arith.mulf %257, %259 : vector<24x4xf32>
    %cst_150 = arith.constant dense<0.000000e+00> : vector<20x4xf32>
    %289 = tpu.matmul %260, %288, %cst_150 {dimension_numbers = #tpu.dot_dimension_numbers<[1], [0], [0], [1], [0, 0, 1, 1], [], []>} : vector<20x24xf32>, vector<24x4xf32>, vector<20x4xf32> -> vector<20x4xf32>
    %290 = vector.extract_strided_slice %282 {offsets = [0, 0], sizes = [6, 4], strides = [1, 1]} : vector<20x4xf32> to vector<6x4xf32>
    %cst_151 = arith.constant dense<0.000000e+00> : vector<6x1xf32>
    %291 = tpu.matmul %290, %261, %cst_151 {dimension_numbers = #tpu.dot_dimension_numbers<[1], [0], [0], [1], [0, 0, 1, 1], [], []>} : vector<6x4xf32>, vector<4x1xf32>, vector<6x1xf32> -> vector<6x1xf32>
    %292 = vector.extract_strided_slice %283 {offsets = [0, 0], sizes = [6, 4], strides = [1, 1]} : vector<20x4xf32> to vector<6x4xf32>
    %cst_152 = arith.constant dense<0.000000e+00> : vector<6x1xf32>
    %293 = tpu.matmul %292, %261, %cst_152 {dimension_numbers = #tpu.dot_dimension_numbers<[1], [0], [0], [1], [0, 0, 1, 1], [], []>} : vector<6x4xf32>, vector<4x1xf32>, vector<6x1xf32> -> vector<6x1xf32>
    %294 = vector.extract_strided_slice %285 {offsets = [0, 0], sizes = [6, 4], strides = [1, 1]} : vector<20x4xf32> to vector<6x4xf32>
    %cst_153 = arith.constant dense<0.000000e+00> : vector<6x1xf32>
    %295 = tpu.matmul %294, %261, %cst_153 {dimension_numbers = #tpu.dot_dimension_numbers<[1], [0], [0], [1], [0, 0, 1, 1], [], []>} : vector<6x4xf32>, vector<4x1xf32>, vector<6x1xf32> -> vector<6x1xf32>
    %296 = vector.extract_strided_slice %287 {offsets = [0, 0], sizes = [6, 4], strides = [1, 1]} : vector<20x4xf32> to vector<6x4xf32>
    %cst_154 = arith.constant dense<0.000000e+00> : vector<6x1xf32>
    %297 = tpu.matmul %296, %261, %cst_154 {dimension_numbers = #tpu.dot_dimension_numbers<[1], [0], [0], [1], [0, 0, 1, 1], [], []>} : vector<6x4xf32>, vector<4x1xf32>, vector<6x1xf32> -> vector<6x1xf32>
    %298 = vector.extract_strided_slice %289 {offsets = [0, 0], sizes = [6, 4], strides = [1, 1]} : vector<20x4xf32> to vector<6x4xf32>
    %cst_155 = arith.constant dense<0.000000e+00> : vector<6x1xf32>
    %299 = tpu.matmul %298, %261, %cst_155 {dimension_numbers = #tpu.dot_dimension_numbers<[1], [0], [0], [1], [0, 0, 1, 1], [], []>} : vector<6x4xf32>, vector<4x1xf32>, vector<6x1xf32> -> vector<6x1xf32>
    %300 = arith.mulf %291, %291 : vector<6x1xf32>
    %301 = arith.mulf %293, %293 : vector<6x1xf32>
    %302 = arith.mulf %291, %293 : vector<6x1xf32>
    %303 = arith.subf %295, %300 : vector<6x1xf32>
    %304 = arith.subf %297, %301 : vector<6x1xf32>
    %305 = arith.subf %299, %302 : vector<6x1xf32>
    %cst_156 = arith.constant 2.000000e+00 : f32
    %306 = vector.broadcast %cst_156 : f32 to vector<6x1xf32>
    %307 = arith.mulf %306, %305 : vector<6x1xf32>
    %308 = vector.broadcast %281 : f32 to vector<6x1xf32>
    %309 = arith.addf %307, %308 : vector<6x1xf32>
    %310 = arith.addf %303, %304 : vector<6x1xf32>
    %311 = vector.broadcast %281 : f32 to vector<6x1xf32>
    %312 = arith.addf %310, %311 : vector<6x1xf32>
    %cst_157 = arith.constant 9.99999993E-9 : f32
    %313 = vector.broadcast %cst_157 : f32 to vector<6x1xf32>
    %314 = arith.addf %312, %313 : vector<6x1xf32>
    %315 = arith.divf %309, %314 : vector<6x1xf32>
    %cst_158 = arith.constant 2.000000e+00 : f32
    %316 = vector.broadcast %cst_158 : f32 to vector<6x1xf32>
    %317 = arith.mulf %316, %302 : vector<6x1xf32>
    %318 = vector.broadcast %278 : f32 to vector<6x1xf32>
    %319 = arith.addf %317, %318 : vector<6x1xf32>
    %320 = arith.mulf %319, %309 : vector<6x1xf32>
    %321 = arith.addf %300, %301 : vector<6x1xf32>
    %322 = vector.broadcast %278 : f32 to vector<6x1xf32>
    %323 = arith.addf %321, %322 : vector<6x1xf32>
    %324 = arith.mulf %323, %314 : vector<6x1xf32>
    %cst_159 = arith.constant 9.99999997E-7 : f32
    %325 = vector.broadcast %cst_159 : f32 to vector<6x1xf32>
    %326 = arith.addf %324, %325 : vector<6x1xf32>
    %327 = arith.divf %320, %326 : vector<6x1xf32>
    %328 = vector.shape_cast %327 : vector<6x1xf32> to vector<1x6x1xf32>
    %cst_160 = arith.constant dense<0.000000e+00> : vector<1xf32>
    %329 = vector.multi_reduction <add>, %328, %cst_160 [1, 2] : vector<1x6x1xf32> to vector<1xf32>
    %330 = vector.shape_cast %329 : vector<1xf32> to vector<1x1x1xf32>
    %331 = vector.extract %330[0, 0, 0] : f32 from vector<1x1x1xf32>
    %cst_161 = arith.constant 0.166666672 : f32
    %332 = arith.mulf %331, %cst_161 : f32
    %333 = vector.broadcast %332 : f32 to vector<1x1xf32>
    %c0_162 = arith.constant 0 : index
    %c0_163 = arith.constant 0 : index
    %334 = vector.load %arg22[%c0_162, %c0_163] : memref<1x1xf32, #tpu.memory_space<vmem>>, vector<1x1xf32>
    tpu.vector_store %arg22[%c0_162, %c0_163], %333 {strides = array<i32>} : memref<1x1xf32, #tpu.memory_space<vmem>>, vector<1x1xf32>,
    %335 = vector.shape_cast %315 : vector<6x1xf32> to vector<1x6x1xf32>
    %cst_164 = arith.constant dense<0.000000e+00> : vector<1xf32>
    %336 = vector.multi_reduction <add>, %335, %cst_164 [1, 2] : vector<1x6x1xf32> to vector<1xf32>
    %337 = vector.shape_cast %336 : vector<1xf32> to vector<1x1x1xf32>
    %338 = vector.extract %337[0, 0, 0] : f32 from vector<1x1x1xf32>
    %cst_165 = arith.constant 0.166666672 : f32
    %339 = arith.mulf %338, %cst_165 : f32
    %340 = vector.broadcast %339 : f32 to vector<1x1xf32>
    %c0_166 = arith.constant 0 : index
    %c0_167 = arith.constant 0 : index
    %341 = vector.load %arg23[%c0_166, %c0_167] : memref<1x1xf32, #tpu.memory_space<vmem>>, vector<1x1xf32>
    tpu.vector_store %arg23[%c0_166, %c0_167], %340 {strides = array<i32>} : memref<1x1xf32, #tpu.memory_space<vmem>>, vector<1x1xf32>,
    %342 = vector.extract_strided_slice %282 {offsets = [8, 0], sizes = [12, 4], strides = [1, 1]} : vector<20x4xf32> to vector<12x4xf32>
    %cst_168 = arith.constant dense<0.000000e+00> : vector<12x2xf32>
    %343 = tpu.matmul %342, %262, %cst_168 {dimension_numbers = #tpu.dot_dimension_numbers<[1], [0], [0], [1], [0, 0, 1, 1], [], []>} : vector<12x4xf32>, vector<4x2xf32>, vector<12x2xf32> -> vector<12x2xf32>
    %344 = vector.extract_strided_slice %283 {offsets = [8, 0], sizes = [12, 4], strides = [1, 1]} : vector<20x4xf32> to vector<12x4xf32>
    %cst_169 = arith.constant dense<0.000000e+00> : vector<12x2xf32>
    %345 = tpu.matmul %344, %262, %cst_169 {dimension_numbers = #tpu.dot_dimension_numbers<[1], [0], [0], [1], [0, 0, 1, 1], [], []>} : vector<12x4xf32>, vector<4x2xf32>, vector<12x2xf32> -> vector<12x2xf32>
    %c0_170 = arith.constant 0 : index
    %c0_171 = arith.constant 0 : index
    %346 = vector.load %arg14[%c0_170, %c0_171] : memref<6x12xf32, #tpu.memory_space<vmem>>, vector<6x12xf32>
    %c0_172 = arith.constant 0 : index
    %c0_173 = arith.constant 0 : index
    %347 = vector.load %arg15[%c0_172, %c0_173] : memref<2x1xf32, #tpu.memory_space<vmem>>, vector<2x1xf32>
    %348 = vector.shape_cast %343 : vector<12x2xf32> to vector<1x12x2xf32>
    %cst_174 = arith.constant dense<0xFF800000> : vector<1xf32>
    %349 = vector.multi_reduction <maximumf>, %348, %cst_174 [1, 2] : vector<1x12x2xf32> to vector<1xf32>
    %350 = vector.shape_cast %349 : vector<1xf32> to vector<1x1x1xf32>
    %351 = vector.extract %350[0, 0, 0] : f32 from vector<1x1x1xf32>
    %cst_175 = arith.constant 1.280000e+02 : f32
    %352 = arith.cmpf ogt, %351, %cst_175 : f32
    %cst_176 = arith.constant 2.550000e+02 : f32
    %cst_177 = arith.constant 1.000000e+00 : f32
    %353 = arith.select %352, %cst_176, %cst_177 : f32
    %354 = vector.shape_cast %343 : vector<12x2xf32> to vector<1x12x2xf32>
    %cst_178 = arith.constant dense<0x7F800000> : vector<1xf32>
    %355 = vector.multi_reduction <minimumf>, %354, %cst_178 [1, 2] : vector<1x12x2xf32> to vector<1xf32>
    %356 = vector.shape_cast %355 : vector<1xf32> to vector<1x1x1xf32>
    %357 = vector.extract %356[0, 0, 0] : f32 from vector<1x1x1xf32>
    %cst_179 = arith.constant -5.000000e-01 : f32
    %358 = arith.cmpf olt, %357, %cst_179 : f32
    %cst_180 = arith.constant -1.000000e+00 : f32
    %cst_181 = arith.constant 0.000000e+00 : f32
    %359 = arith.select %358, %cst_180, %cst_181 : f32
    %360 = arith.subf %353, %359 : f32
    %cst_182 = arith.constant 0.00999999977 : f32
    %361 = arith.mulf %cst_182, %360 : f32
    %cst_183 = arith.constant 0.00999999977 : f32
    %362 = arith.mulf %cst_183, %360 : f32
    %363 = arith.mulf %361, %362 : f32
    %cst_184 = arith.constant 3.000000e-02 : f32
    %364 = arith.mulf %cst_184, %360 : f32
    %cst_185 = arith.constant 3.000000e-02 : f32
    %365 = arith.mulf %cst_185, %360 : f32
    %366 = arith.mulf %364, %365 : f32
    %cst_186 = arith.constant dense<0.000000e+00> : vector<6x2xf32>
    %367 = tpu.matmul %346, %343, %cst_186 {dimension_numbers = #tpu.dot_dimension_numbers<[1], [0], [0], [1], [0, 0, 1, 1], [], []>} : vector<6x12xf32>, vector<12x2xf32>, vector<6x2xf32> -> vector<6x2xf32>
    %cst_187 = arith.constant dense<0.000000e+00> : vector<6x2xf32>
    %368 = tpu.matmul %346, %345, %cst_187 {dimension_numbers = #tpu.dot_dimension_numbers<[1], [0], [0], [1], [0, 0, 1, 1], [], []>} : vector<6x12xf32>, vector<12x2xf32>, vector<6x2xf32> -> vector<6x2xf32>
    %369 = arith.mulf %343, %343 : vector<12x2xf32>
    %cst_188 = arith.constant dense<0.000000e+00> : vector<6x2xf32>
    %370 = tpu.matmul %346, %369, %cst_188 {dimension_numbers = #tpu.dot_dimension_numbers<[1], [0], [0], [1], [0, 0, 1, 1], [], []>} : vector<6x12xf32>, vector<12x2xf32>, vector<6x2xf32> -> vector<6x2xf32>
    %371 = arith.mulf %345, %345 : vector<12x2xf32>
    %cst_189 = arith.constant dense<0.000000e+00> : vector<6x2xf32>
    %372 = tpu.matmul %346, %371, %cst_189 {dimension_numbers = #tpu.dot_dimension_numbers<[1], [0], [0], [1], [0, 0, 1, 1], [], []>} : vector<6x12xf32>, vector<12x2xf32>, vector<6x2xf32> -> vector<6x2xf32>
    %373 = arith.mulf %343, %345 : vector<12x2xf32>
    %cst_190 = arith.constant dense<0.000000e+00> : vector<6x2xf32>
    %374 = tpu.matmul %346, %373, %cst_190 {dimension_numbers = #tpu.dot_dimension_numbers<[1], [0], [0], [1], [0, 0, 1, 1], [], []>} : vector<6x12xf32>, vector<12x2xf32>, vector<6x2xf32> -> vector<6x2xf32>
    %cst_191 = arith.constant dense<0.000000e+00> : vector<6x1xf32>
    %375 = tpu.matmul %367, %347, %cst_191 {dimension_numbers = #tpu.dot_dimension_numbers<[1], [0], [0], [1], [0, 0, 1, 1], [], []>} : vector<6x2xf32>, vector<2x1xf32>, vector<6x1xf32> -> vector<6x1xf32>
    %cst_192 = arith.constant dense<0.000000e+00> : vector<6x1xf32>
    %376 = tpu.matmul %368, %347, %cst_192 {dimension_numbers = #tpu.dot_dimension_numbers<[1], [0], [0], [1], [0, 0, 1, 1], [], []>} : vector<6x2xf32>, vector<2x1xf32>, vector<6x1xf32> -> vector<6x1xf32>
    %cst_193 = arith.constant dense<0.000000e+00> : vector<6x1xf32>
    %377 = tpu.matmul %370, %347, %cst_193 {dimension_numbers = #tpu.dot_dimension_numbers<[1], [0], [0], [1], [0, 0, 1, 1], [], []>} : vector<6x2xf32>, vector<2x1xf32>, vector<6x1xf32> -> vector<6x1xf32>
    %cst_194 = arith.constant dense<0.000000e+00> : vector<6x1xf32>
    %378 = tpu.matmul %372, %347, %cst_194 {dimension_numbers = #tpu.dot_dimension_numbers<[1], [0], [0], [1], [0, 0, 1, 1], [], []>} : vector<6x2xf32>, vector<2x1xf32>, vector<6x1xf32> -> vector<6x1xf32>
    %cst_195 = arith.constant dense<0.000000e+00> : vector<6x1xf32>
    %379 = tpu.matmul %374, %347, %cst_195 {dimension_numbers = #tpu.dot_dimension_numbers<[1], [0], [0], [1], [0, 0, 1, 1], [], []>} : vector<6x2xf32>, vector<2x1xf32>, vector<6x1xf32> -> vector<6x1xf32>
    %380 = arith.mulf %375, %375 : vector<6x1xf32>
    %381 = arith.mulf %376, %376 : vector<6x1xf32>
    %382 = arith.mulf %375, %376 : vector<6x1xf32>
    %383 = arith.subf %377, %380 : vector<6x1xf32>
    %384 = arith.subf %378, %381 : vector<6x1xf32>
    %385 = arith.subf %379, %382 : vector<6x1xf32>
    %cst_196 = arith.constant 2.000000e+00 : f32
    %386 = vector.broadcast %cst_196 : f32 to vector<6x1xf32>
    %387 = arith.mulf %386, %385 : vector<6x1xf32>
    %388 = vector.broadcast %366 : f32 to vector<6x1xf32>
    %389 = arith.addf %387, %388 : vector<6x1xf32>
    %390 = arith.addf %383, %384 : vector<6x1xf32>
    %391 = vector.broadcast %366 : f32 to vector<6x1xf32>
    %392 = arith.addf %390, %391 : vector<6x1xf32>
    %cst_197 = arith.constant 9.99999993E-9 : f32
    %393 = vector.broadcast %cst_197 : f32 to vector<6x1xf32>
    %394 = arith.addf %392, %393 : vector<6x1xf32>
    %395 = arith.divf %389, %394 : vector<6x1xf32>
    %cst_198 = arith.constant 2.000000e+00 : f32
    %396 = vector.broadcast %cst_198 : f32 to vector<6x1xf32>
    %397 = arith.mulf %396, %382 : vector<6x1xf32>
    %398 = vector.broadcast %363 : f32 to vector<6x1xf32>
    %399 = arith.addf %397, %398 : vector<6x1xf32>
    %400 = arith.mulf %399, %389 : vector<6x1xf32>
    %401 = arith.addf %380, %381 : vector<6x1xf32>
    %402 = vector.broadcast %363 : f32 to vector<6x1xf32>
    %403 = arith.addf %401, %402 : vector<6x1xf32>
    %404 = arith.mulf %403, %394 : vector<6x1xf32>
    %cst_199 = arith.constant 9.99999997E-7 : f32
    %405 = vector.broadcast %cst_199 : f32 to vector<6x1xf32>
    %406 = arith.addf %404, %405 : vector<6x1xf32>
    %407 = arith.divf %400, %406 : vector<6x1xf32>
    %408 = vector.shape_cast %407 : vector<6x1xf32> to vector<1x6x1xf32>
    %cst_200 = arith.constant dense<0.000000e+00> : vector<1xf32>
    %409 = vector.multi_reduction <add>, %408, %cst_200 [1, 2] : vector<1x6x1xf32> to vector<1xf32>
    %410 = vector.shape_cast %409 : vector<1xf32> to vector<1x1x1xf32>
    %411 = vector.extract %410[0, 0, 0] : f32 from vector<1x1x1xf32>
    %cst_201 = arith.constant 0.166666672 : f32
    %412 = arith.mulf %411, %cst_201 : f32
    %413 = vector.broadcast %412 : f32 to vector<1x1xf32>
    %c0_202 = arith.constant 0 : index
    %c0_203 = arith.constant 0 : index
    %414 = vector.load %arg24[%c0_202, %c0_203] : memref<1x1xf32, #tpu.memory_space<vmem>>, vector<1x1xf32>
    tpu.vector_store %arg24[%c0_202, %c0_203], %413 {strides = array<i32>} : memref<1x1xf32, #tpu.memory_space<vmem>>, vector<1x1xf32>,
    %415 = vector.shape_cast %395 : vector<6x1xf32> to vector<1x6x1xf32>
    %cst_204 = arith.constant dense<0.000000e+00> : vector<1xf32>
    %416 = vector.multi_reduction <add>, %415, %cst_204 [1, 2] : vector<1x6x1xf32> to vector<1xf32>
    %417 = vector.shape_cast %416 : vector<1xf32> to vector<1x1x1xf32>
    %418 = vector.extract %417[0, 0, 0] : f32 from vector<1x1x1xf32>
    %cst_205 = arith.constant 0.166666672 : f32
    %419 = arith.mulf %418, %cst_205 : f32
    %420 = vector.broadcast %419 : f32 to vector<1x1xf32>
    %c0_206 = arith.constant 0 : index
    %c0_207 = arith.constant 0 : index
    %421 = vector.load %arg25[%c0_206, %c0_207] : memref<1x1xf32, #tpu.memory_space<vmem>>, vector<1x1xf32>
    tpu.vector_store %arg25[%c0_206, %c0_207], %420 {strides = array<i32>} : memref<1x1xf32, #tpu.memory_space<vmem>>, vector<1x1xf32>,
    return
  }
}

</mosaic_0001>

<llo_original>
// kernel: _lambda_.1
$region0: #{_lambda_.1}
  #allocation0 [shape = 'u32[]', space=smem, size = 0x4, offset = 0x4, fixed_abs, tag = 'smem constant byte address 0x4 - core index']
  #allocation1 [shape = 'u32[72,128]{1,0:T(1,128)}', space=vmem, size = 0x9000, scoped, tag = 'internal scratch']
  %s0 = inlined_call_operand.hbm [shape: f32[192,32], index: 0, kind: input, shape index: {}]
  %s1 = inlined_call_operand.hbm [shape: f32[192,32], index: 1, kind: input, shape index: {}]
  %s2 = inlined_call_operand.hbm [shape: f32[232,192], index: 2, kind: input, shape index: {}]
  %s3 = inlined_call_operand.hbm [shape: f32[32,22], index: 3, kind: input, shape index: {}]
  %s4 = inlined_call_operand.hbm [shape: f32[32,16], index: 4, kind: input, shape index: {}]
  %s5 = inlined_call_operand.hbm [shape: f32[88,96], index: 5, kind: input, shape index: {}]
  %s6 = inlined_call_operand.hbm [shape: f32[16,6], index: 6, kind: input, shape index: {}]
  %s7 = inlined_call_operand.hbm [shape: f32[16,8], index: 7, kind: input, shape index: {}]
  %s8 = inlined_call_operand.hbm [shape: f32[32,48], index: 8, kind: input, shape index: {}]
  %s9 = inlined_call_operand.hbm [shape: f32[8,1], index: 9, kind: input, shape index: {}]
  %s10 = inlined_call_operand.vmem [shape: f32[8,4], index: 10, kind: input, shape index: {}]
  %s11 = inlined_call_operand.hbm [shape: f32[20,24], index: 11, kind: input, shape index: {}]
  %s12 = inlined_call_operand.hbm [shape: f32[4,1], index: 12, kind: input, shape index: {}]
  %s13 = inlined_call_operand.hbm [shape: f32[4,2], index: 13, kind: input, shape index: {}]
  %s14 = inlined_call_operand.vmem [shape: f32[6,12], index: 14, kind: input, shape index: {}]
  %s15 = inlined_call_operand.hbm [shape: f32[2,1], index: 15, kind: input, shape index: {}]
  %s16 = inlined_call_operand.hbm [shape: f32[1,1], index: 16, kind: output, shape index: {0}]
  %s17 = inlined_call_operand.hbm [shape: f32[1,1], index: 17, kind: output, shape index: {1}]
  %s18 = inlined_call_operand.hbm [shape: f32[1,1], index: 18, kind: output, shape index: {2}]
  %s19 = inlined_call_operand.hbm [shape: f32[1,1], index: 19, kind: output, shape index: {3}]
  %s20 = inlined_call_operand.hbm [shape: f32[1,1], index: 20, kind: output, shape index: {4}]
  %s21 = inlined_call_operand.hbm [shape: f32[1,1], index: 21, kind: output, shape index: {5}]
  %s22 = inlined_call_operand.hbm [shape: f32[1,1], index: 22, kind: output, shape index: {6}]
  %s23 = inlined_call_operand.hbm [shape: f32[1,1], index: 23, kind: output, shape index: {7}]
  %s24 = inlined_call_operand.hbm [shape: f32[1,1], index: 24, kind: output, shape index: {8}]
  %s25 = inlined_call_operand.hbm [shape: f32[1,1], index: 25, kind: output, shape index: {9}]
  %26 = xla_tuple %s16, %s17, %s18, %s19, %s20, %s21, %s22, %s23, %s24, %s25
  %s27 = sld [smem:[#allocation0]]
  $region202: #{_lambda_.1} parent=0
    _
  %s29 = ssub.s32 1, %s27
  %s30 = scalar_select 0, %s29, %s27
  $region1: #{_lambda_.1} parent=0
    #allocation2 [shape = 'u8[98304]{0}', space=vmem, size = 0x18000, scoped, tag = 'input window, operand 0, single buffered']
    #allocation3 [shape = 's32[1]{0}', space=sflag, size = 0x4, scoped, tag = 'scoped memory for _lambda_.1']
    #allocation4 [shape = 's32[1]{0}', space=sflag, size = 0x4, scoped, tag = 'scoped memory for _lambda_.1']
    #allocation5 [shape = 'u8[98304]{0}', space=vmem, size = 0x18000, scoped, tag = 'input window, operand 1, single buffered']
    #allocation6 [shape = 's32[1]{0}', space=sflag, size = 0x4, scoped, tag = 'scoped memory for _lambda_.1']
    #allocation7 [shape = 'u8[237568]{0}', space=vmem, size = 0x3a000, scoped, tag = 'input window, operand 2, single buffered']
    #allocation8 [shape = 'u8[16384]{0}', space=vmem, size = 0x4000, scoped, tag = 'input window, operand 3, single buffered']
    #allocation9 [shape = 's32[1]{0}', space=sflag, size = 0x4, scoped, tag = 'scoped memory for _lambda_.1']
    #allocation10 [shape = 'u8[16384]{0}', space=vmem, size = 0x4000, scoped, tag = 'input window, operand 4, single buffered']
    #allocation11 [shape = 'u8[45056]{0}', space=vmem, size = 0xb000, scoped, tag = 'input window, operand 5, single buffered']
    #allocation12 [shape = 's32[1]{0}', space=sflag, size = 0x4, scoped, tag = 'scoped memory for _lambda_.1']
    #allocation13 [shape = 'u8[8192]{0}', space=vmem, size = 0x2000, scoped, tag = 'input window, operand 6, single buffered']
    #allocation14 [shape = 'u8[8192]{0}', space=vmem, size = 0x2000, scoped, tag = 'input window, operand 7, single buffered']
    #allocation15 [shape = 's32[1]{0}', space=sflag, size = 0x4, scoped, tag = 'scoped memory for _lambda_.1']
    #allocation16 [shape = 'u8[16384]{0}', space=vmem, size = 0x4000, scoped, tag = 'input window, operand 8, single buffered']
    #allocation17 [shape = 'u8[4096]{0}', space=vmem, size = 0x1000, scoped, tag = 'input window, operand 9, single buffered']
    #allocation18 [shape = 's32[1]{0}', space=sflag, size = 0x4, scoped, tag = 'scoped memory for _lambda_.1']
    #allocation19 [shape = 'u8[12288]{0}', space=vmem, size = 0x3000, scoped, tag = 'input window, operand 11, single buffered']
    #allocation20 [shape = 'u8[2048]{0}', space=vmem, size = 0x800, scoped, tag = 'input window, operand 12, single buffered']
    #allocation21 [shape = 's32[1]{0}', space=sflag, size = 0x4, scoped, tag = 'scoped memory for _lambda_.1']
    #allocation22 [shape = 'u8[2048]{0}', space=vmem, size = 0x800, scoped, tag = 'input window, operand 13, single buffered']
    #allocation23 [shape = 'u8[1024]{0}', space=vmem, size = 0x400, scoped, tag = 'input window, operand 15, single buffered']
    #allocation24 [shape = 's32[1]{0}', space=sflag, size = 0x4, scoped, tag = 'scoped memory for _lambda_.1']
    #allocation25 [shape = 'u8[512]{0}', space=vmem, size = 0x400, scoped, tag = 'output window, operand 0, single buffered']
    #allocation26 [shape = 'u8[512]{0}', space=vmem, size = 0x400, scoped, tag = 'output window, operand 1, single buffered']
    #allocation27 [shape = 's32[1]{0}', space=sflag, size = 0x4, scoped, tag = 'scoped memory for _lambda_.1']
    #allocation28 [shape = 'u8[512]{0}', space=vmem, size = 0x400, scoped, tag = 'output window, operand 2, single buffered']
    #allocation29 [shape = 'u8[512]{0}', space=vmem, size = 0x400, scoped, tag = 'output window, operand 3, single buffered']
    #allocation30 [shape = 's32[1]{0}', space=sflag, size = 0x4, scoped, tag = 'scoped memory for _lambda_.1']
    #allocation31 [shape = 'u8[512]{0}', space=vmem, size = 0x400, scoped, tag = 'output window, operand 4, single buffered']
    #allocation32 [shape = 'u8[512]{0}', space=vmem, size = 0x400, scoped, tag = 'output window, operand 5, single buffered']
    #allocation33 [shape = 's32[1]{0}', space=sflag, size = 0x4, scoped, tag = 'scoped memory for _lambda_.1']
    #allocation34 [shape = 'u8[512]{0}', space=vmem, size = 0x400, scoped, tag = 'output window, operand 6, single buffered']
    #allocation35 [shape = 'u8[512]{0}', space=vmem, size = 0x400, scoped, tag = 'output window, operand 7, single buffered']
    #allocation36 [shape = 's32[1]{0}', space=sflag, size = 0x4, scoped, tag = 'scoped memory for _lambda_.1']
    #allocation37 [shape = 'u8[512]{0}', space=vmem, size = 0x400, scoped, tag = 'output window, operand 8, single buffered']
    #allocation38 [shape = 'u8[512]{0}', space=vmem, size = 0x400, scoped, tag = 'output window, operand 9, single buffered']
    #allocation39 [shape = 's32[1]{0}', space=sflag, size = 0x4, scoped, tag = 'scoped memory for _lambda_.1']
    %31 = vsyncpa [#allocation3], 0
    %32 = vsyncpa [#allocation6], 0
    %33 = vsyncpa [#allocation9], 0
    %34 = vsyncpa [#allocation12], 0
    %35 = vsyncpa [#allocation15], 0
    %36 = vsyncpa [#allocation18], 0
    %37 = vsyncpa [#allocation21], 0
    %38 = vsyncpa [#allocation24], 0
    %39 = vsyncpa [#allocation4], 0
    %40 = vsyncpa [#allocation27], 0
    %41 = vsyncpa [#allocation30], 0
    %42 = vsyncpa [#allocation33], 0
    %43 = vsyncpa [#allocation36], 0
    %44 = vsyncpa [#allocation39], 0
    // Predicated region
    $region2: #{_lambda_.1} parent=1 // pred_check
      _
    $region3: #{_lambda_.1} parent=1 // pred_check_branch
      %46 = sbr.rel (0) target = $region5
    $region4: #{_lambda_.1} parent=1 // pred_region
      %48 = vsyncadd [#allocation3], 0
      %s49 = sshll.u32 %s0, 4
      %s50 = int_to_ptr.hbm [resolvable:$true] %s49
      %s51 = sshll.u32 [#allocation2], 4
      %s52 = int_to_ptr.vmem [resolvable:$true] %s51
      %57 = dma.hbm_to_vmem [thread:$0]  %s50, 3072, %s52, [#allocation3], 128, 128, 8
    $region5: #{_lambda_.1} parent=1 // pred_fallthru
      _
    // Predicated region
    $region6: #{_lambda_.1} parent=1 // pred_check
      _
    $region7: #{_lambda_.1} parent=1 // pred_check_branch
      %59 = sbr.rel (0) target = $region9
    $region8: #{_lambda_.1} parent=1 // pred_region
      %61 = vsyncadd [#allocation6], 0
      %s62 = sshll.u32 %s1, 4
      %s63 = int_to_ptr.hbm [resolvable:$true] %s62
      %s64 = sshll.u32 [#allocation5], 4
      %s65 = int_to_ptr.vmem [resolvable:$true] %s64
      %70 = dma.hbm_to_vmem [thread:$0]  %s63, 3072, %s65, [#allocation6], 128, 128, 8
    $region9: #{_lambda_.1} parent=1 // pred_fallthru
      _
    // Predicated region
    $region10: #{_lambda_.1} parent=1 // pred_check
      _
    $region11: #{_lambda_.1} parent=1 // pred_check_branch
      %72 = sbr.rel (0) target = $region13
    $region12: #{_lambda_.1} parent=1 // pred_region
      %74 = vsyncadd [#allocation6], 0
      %s75 = sshll.u32 %s2, 4
      %s76 = int_to_ptr.hbm [resolvable:$true] %s75
      %s77 = sshll.u32 [#allocation7], 4
      %s78 = int_to_ptr.vmem [resolvable:$true] %s77
      %83 = dma.hbm_to_vmem [thread:$0]  %s76, 7424, %s78, [#allocation6], 256, 256, 16
    $region13: #{_lambda_.1} parent=1 // pred_fallthru
      _
    // Predicated region
    $region14: #{_lambda_.1} parent=1 // pred_check
      _
    $region15: #{_lambda_.1} parent=1 // pred_check_branch
      %85 = sbr.rel (0) target = $region17
    $region16: #{_lambda_.1} parent=1 // pred_region
      %87 = vsyncadd [#allocation9], 0
      %s88 = sshll.u32 %s3, 4
      %s89 = int_to_ptr.hbm [resolvable:$true] %s88
      %s90 = sshll.u32 [#allocation8], 4
      %s91 = int_to_ptr.vmem [resolvable:$true] %s90
      %96 = dma.hbm_to_vmem [thread:$0]  %s89, 512, %s91, [#allocation9], 128, 128, 8
    $region17: #{_lambda_.1} parent=1 // pred_fallthru
      _
    // Predicated region
    $region18: #{_lambda_.1} parent=1 // pred_check
      _
    $region19: #{_lambda_.1} parent=1 // pred_check_branch
      %98 = sbr.rel (0) target = $region21
    $region20: #{_lambda_.1} parent=1 // pred_region
      %100 = vsyncadd [#allocation9], 0
      %s101 = sshll.u32 %s4, 4
      %s102 = int_to_ptr.hbm [resolvable:$true] %s101
      %s103 = sshll.u32 [#allocation10], 4
      %s104 = int_to_ptr.vmem [resolvable:$true] %s103
      %109 = dma.hbm_to_vmem [thread:$0]  %s102, 512, %s104, [#allocation9], 128, 128, 8
    $region21: #{_lambda_.1} parent=1 // pred_fallthru
      _
    // Predicated region
    $region22: #{_lambda_.1} parent=1 // pred_check
      _
    $region23: #{_lambda_.1} parent=1 // pred_check_branch
      %111 = sbr.rel (0) target = $region25
    $region24: #{_lambda_.1} parent=1 // pred_region
      %113 = vsyncadd [#allocation12], 0
      %s114 = sshll.u32 %s5, 4
      %s115 = int_to_ptr.hbm [resolvable:$true] %s114
      %s116 = sshll.u32 [#allocation11], 4
      %s117 = int_to_ptr.vmem [resolvable:$true] %s116
      %122 = dma.hbm_to_vmem [thread:$0]  %s115, 1408, %s117, [#allocation12], 128, 128, 8
    $region25: #{_lambda_.1} parent=1 // pred_fallthru
      _
    // Predicated region
    $region26: #{_lambda_.1} parent=1 // pred_check
      _
    $region27: #{_lambda_.1} parent=1 // pred_check_branch
      %124 = sbr.rel (0) target = $region29
    $region28: #{_lambda_.1} parent=1 // pred_region
      %126 = vsyncadd [#allocation12], 0
      %s127 = sshll.u32 %s6, 4
      %s128 = int_to_ptr.hbm [resolvable:$true] %s127
      %s129 = sshll.u32 [#allocation13], 4
      %s130 = int_to_ptr.vmem [resolvable:$true] %s129
      %135 = dma.hbm_to_vmem [thread:$0]  %s128, 256, %s130, [#allocation12], 128, 128, 8
    $region29: #{_lambda_.1} parent=1 // pred_fallthru
      _
    // Predicated region
    $region30: #{_lambda_.1} parent=1 // pred_check
      _
    $region31: #{_lambda_.1} parent=1 // pred_check_branch
      %137 = sbr.rel (0) target = $region33
    $region32: #{_lambda_.1} parent=1 // pred_region
      %139 = vsyncadd [#allocation15], 0
      %s140 = sshll.u32 %s7, 4
      %s141 = int_to_ptr.hbm [resolvable:$true] %s140
      %s142 = sshll.u32 [#allocation14], 4
      %s143 = int_to_ptr.vmem [resolvable:$true] %s142
      %148 = dma.hbm_to_vmem [thread:$0]  %s141, 256, %s143, [#allocation15], 128, 128, 8
    $region33: #{_lambda_.1} parent=1 // pred_fallthru
      _
    // Predicated region
    $region34: #{_lambda_.1} parent=1 // pred_check
      _
    $region35: #{_lambda_.1} parent=1 // pred_check_branch
      %150 = sbr.rel (0) target = $region37
    $region36: #{_lambda_.1} parent=1 // pred_region
      %152 = vsyncadd [#allocation15], 0
      %s153 = sshll.u32 %s8, 4
      %s154 = int_to_ptr.hbm [resolvable:$true] %s153
      %s155 = sshll.u32 [#allocation16], 4
      %s156 = int_to_ptr.vmem [resolvable:$true] %s155
      %161 = dma.hbm_to_vmem [thread:$0]  %s154, 512, %s156, [#allocation15], 128, 128, 8
    $region37: #{_lambda_.1} parent=1 // pred_fallthru
      _
    // Predicated region
    $region38: #{_lambda_.1} parent=1 // pred_check
      _
    $region39: #{_lambda_.1} parent=1 // pred_check_branch
      %163 = sbr.rel (0) target = $region41
    $region40: #{_lambda_.1} parent=1 // pred_region
      %165 = vsyncadd [#allocation18], 0
      %s167 = sshll.u32 %s9, 4
      %s168 = int_to_ptr.hbm [resolvable:$true] %s167
      %s169 = sshll.u32 [#allocation17], 4
      %s170 = int_to_ptr.vmem [resolvable:$true] %s169
      %172 = dma.hbm_to_vmem [thread:$0]  %s168, 128, %s170, [#allocation18]
    $region41: #{_lambda_.1} parent=1 // pred_fallthru
      _
    // Predicated region
    $region42: #{_lambda_.1} parent=1 // pred_check
      _
    $region43: #{_lambda_.1} parent=1 // pred_check_branch
      %174 = sbr.rel (0) target = $region45
    $region44: #{_lambda_.1} parent=1 // pred_region
      _
    $region45: #{_lambda_.1} parent=1 // pred_fallthru
      _
    // Predicated region
    $region46: #{_lambda_.1} parent=1 // pred_check
      _
    $region47: #{_lambda_.1} parent=1 // pred_check_branch
      %176 = sbr.rel (0) target = $region49
    $region48: #{_lambda_.1} parent=1 // pred_region
      %178 = vsyncadd [#allocation18], 0
      %s179 = sshll.u32 %s11, 4
      %s180 = int_to_ptr.hbm [resolvable:$true] %s179
      %s181 = sshll.u32 [#allocation19], 4
      %s182 = int_to_ptr.vmem [resolvable:$true] %s181
      %187 = dma.hbm_to_vmem [thread:$0]  %s180, 384, %s182, [#allocation18], 128, 128, 8
    $region49: #{_lambda_.1} parent=1 // pred_fallthru
      _
    // Predicated region
    $region50: #{_lambda_.1} parent=1 // pred_check
      _
    $region51: #{_lambda_.1} parent=1 // pred_check_branch
      %189 = sbr.rel (0) target = $region53
    $region52: #{_lambda_.1} parent=1 // pred_region
      %191 = vsyncadd [#allocation21], 0
      %s193 = sshll.u32 %s12, 4
      %s194 = int_to_ptr.hbm [resolvable:$true] %s193
      %s195 = sshll.u32 [#allocation20], 4
      %s196 = int_to_ptr.vmem [resolvable:$true] %s195
      %198 = dma.hbm_to_vmem [thread:$0]  %s194, 64, %s196, [#allocation21]
    $region53: #{_lambda_.1} parent=1 // pred_fallthru
      _
    // Predicated region
    $region54: #{_lambda_.1} parent=1 // pred_check
      _
    $region55: #{_lambda_.1} parent=1 // pred_check_branch
      %200 = sbr.rel (0) target = $region57
    $region56: #{_lambda_.1} parent=1 // pred_region
      %202 = vsyncadd [#allocation21], 0
      %s204 = sshll.u32 %s13, 4
      %s205 = int_to_ptr.hbm [resolvable:$true] %s204
      %s206 = sshll.u32 [#allocation22], 4
      %s207 = int_to_ptr.vmem [resolvable:$true] %s206
      %209 = dma.hbm_to_vmem [thread:$0]  %s205, 64, %s207, [#allocation21]
    $region57: #{_lambda_.1} parent=1 // pred_fallthru
      _
    // Predicated region
    $region58: #{_lambda_.1} parent=1 // pred_check
      _
    $region59: #{_lambda_.1} parent=1 // pred_check_branch
      %211 = sbr.rel (0) target = $region61
    $region60: #{_lambda_.1} parent=1 // pred_region
      _
    $region61: #{_lambda_.1} parent=1 // pred_fallthru
      _
    // Predicated region
    $region62: #{_lambda_.1} parent=1 // pred_check
      _
    $region63: #{_lambda_.1} parent=1 // pred_check_branch
      %213 = sbr.rel (0) target = $region65
    $region64: #{_lambda_.1} parent=1 // pred_region
      %215 = vsyncadd [#allocation24], 0
      %s217 = sshll.u32 %s15, 4
      %s218 = int_to_ptr.hbm [resolvable:$true] %s217
      %s219 = sshll.u32 [#allocation23], 4
      %s220 = int_to_ptr.vmem [resolvable:$true] %s219
      %222 = dma.hbm_to_vmem [thread:$0]  %s218, 32, %s220, [#allocation24]
    $region65: #{_lambda_.1} parent=1 // pred_fallthru
      _
    // Predicated region
    $region66: #{_lambda_.1} parent=1 // pred_check
      _
    $region67: #{_lambda_.1} parent=1 // pred_check_branch
      %224 = sbr.rel (0) target = $region69
    $region68: #{_lambda_.1} parent=1 // pred_region
      %226 = dma.done [#allocation3], 3072
    $region69: #{_lambda_.1} parent=1 // pred_fallthru
      _
    // Predicated region
    $region70: #{_lambda_.1} parent=1 // pred_check
      _
    $region71: #{_lambda_.1} parent=1 // pred_check_branch
      %228 = sbr.rel (0) target = $region73
    $region72: #{_lambda_.1} parent=1 // pred_region
      %230 = dma.done [#allocation6], 3072
    $region73: #{_lambda_.1} parent=1 // pred_fallthru
      _
    // Predicated region
    $region74: #{_lambda_.1} parent=1 // pred_check
      _
    $region75: #{_lambda_.1} parent=1 // pred_check_branch
      %232 = sbr.rel (0) target = $region77
    $region76: #{_lambda_.1} parent=1 // pred_region
      %234 = dma.done [#allocation6], 7424
    $region77: #{_lambda_.1} parent=1 // pred_fallthru
      _
    // Predicated region
    $region78: #{_lambda_.1} parent=1 // pred_check
      _
    $region79: #{_lambda_.1} parent=1 // pred_check_branch
      %236 = sbr.rel (0) target = $region81
    $region80: #{_lambda_.1} parent=1 // pred_region
      %238 = dma.done [#allocation9], 512
    $region81: #{_lambda_.1} parent=1 // pred_fallthru
      _
    // Predicated region
    $region82: #{_lambda_.1} parent=1 // pred_check
      _
    $region83: #{_lambda_.1} parent=1 // pred_check_branch
      %240 = sbr.rel (0) target = $region85
    $region84: #{_lambda_.1} parent=1 // pred_region
      %242 = dma.done [#allocation9], 512
    $region85: #{_lambda_.1} parent=1 // pred_fallthru
      _
    // Predicated region
    $region86: #{_lambda_.1} parent=1 // pred_check
      _
    $region87: #{_lambda_.1} parent=1 // pred_check_branch
      %244 = sbr.rel (0) target = $region89
    $region88: #{_lambda_.1} parent=1 // pred_region
      %246 = dma.done [#allocation12], 1408
    $region89: #{_lambda_.1} parent=1 // pred_fallthru
      _
    // Predicated region
    $region90: #{_lambda_.1} parent=1 // pred_check
      _
    $region91: #{_lambda_.1} parent=1 // pred_check_branch
      %248 = sbr.rel (0) target = $region93
    $region92: #{_lambda_.1} parent=1 // pred_region
      %250 = dma.done [#allocation12], 256
    $region93: #{_lambda_.1} parent=1 // pred_fallthru
      _
    // Predicated region
    $region94: #{_lambda_.1} parent=1 // pred_check
      _
    $region95: #{_lambda_.1} parent=1 // pred_check_branch
      %252 = sbr.rel (0) target = $region97
    $region96: #{_lambda_.1} parent=1 // pred_region
      %254 = dma.done [#allocation15], 256
    $region97: #{_lambda_.1} parent=1 // pred_fallthru
      _
    // Predicated region
    $region98: #{_lambda_.1} parent=1 // pred_check
      _
    $region99: #{_lambda_.1} parent=1 // pred_check_branch
      %256 = sbr.rel (0) target = $region101
    $region100: #{_lambda_.1} parent=1 // pred_region
      %258 = dma.done [#allocation15], 512
    $region101: #{_lambda_.1} parent=1 // pred_fallthru
      _
    // Predicated region
    $region102: #{_lambda_.1} parent=1 // pred_check
      _
    $region103: #{_lambda_.1} parent=1 // pred_check_branch
      %260 = sbr.rel (0) target = $region105
    $region104: #{_lambda_.1} parent=1 // pred_region
      %262 = dma.done [#allocation18], 128
    $region105: #{_lambda_.1} parent=1 // pred_fallthru
      _
    // Predicated region
    $region106: #{_lambda_.1} parent=1 // pred_check
      _
    $region107: #{_lambda_.1} parent=1 // pred_check_branch
      %264 = sbr.rel (0) target = $region109
    $region108: #{_lambda_.1} parent=1 // pred_region
      %266 = dma.done [#allocation18], 384
    $region109: #{_lambda_.1} parent=1 // pred_fallthru
      _
    // Predicated region
    $region110: #{_lambda_.1} parent=1 // pred_check
      _
    $region111: #{_lambda_.1} parent=1 // pred_check_branch
      %268 = sbr.rel (0) target = $region113
    $region112: #{_lambda_.1} parent=1 // pred_region
      %270 = dma.done [#allocation21], 64
    $region113: #{_lambda_.1} parent=1 // pred_fallthru
      _
    // Predicated region
    $region114: #{_lambda_.1} parent=1 // pred_check
      _
    $region115: #{_lambda_.1} parent=1 // pred_check_branch
      %272 = sbr.rel (0) target = $region117
    $region116: #{_lambda_.1} parent=1 // pred_region
      %274 = dma.done [#allocation21], 64
    $region117: #{_lambda_.1} parent=1 // pred_fallthru
      _
    // Predicated region
    $region118: #{_lambda_.1} parent=1 // pred_check
      _
    $region119: #{_lambda_.1} parent=1 // pred_check_branch
      %276 = sbr.rel (0) target = $region121
    $region120: #{_lambda_.1} parent=1 // pred_region
      %278 = dma.done [#allocation24], 32
    $region121: #{_lambda_.1} parent=1 // pred_fallthru
      _
    %v279 = vld [vmem:[#allocation2] sm:$0xff]
    %v280 = vld [vmem:[#allocation2 + $0x8] sm:$0xff]
    %v281 = vld [vmem:[#allocation2 + $0x10] sm:$0xff]
    %v282 = vld [vmem:[#allocation2 + $0x18] sm:$0xff]
    %v283 = vld [vmem:[#allocation2 + $0x20] sm:$0xff]
    %v284 = vld [vmem:[#allocation2 + $0x28] sm:$0xff]
    %v285 = vld [vmem:[#allocation2 + $0x30] sm:$0xff]
    %v286 = vld [vmem:[#allocation2 + $0x38] sm:$0xff]
    %v287 = vld [vmem:[#allocation2 + $0x40] sm:$0xff]
    %v288 = vld [vmem:[#allocation2 + $0x48] sm:$0xff]
    %v289 = vld [vmem:[#allocation2 + $0x50] sm:$0xff]
    %v290 = vld [vmem:[#allocation2 + $0x58] sm:$0xff]
    %v291 = vld [vmem:[#allocation2 + $0x60] sm:$0xff]
    %v292 = vld [vmem:[#allocation2 + $0x68] sm:$0xff]
    %v293 = vld [vmem:[#allocation2 + $0x70] sm:$0xff]
    %v294 = vld [vmem:[#allocation2 + $0x78] sm:$0xff]
    %v295 = vld [vmem:[#allocation2 + $0x80] sm:$0xff]
    %v296 = vld [vmem:[#allocation2 + $0x88] sm:$0xff]
    %v297 = vld [vmem:[#allocation2 + $0x90] sm:$0xff]
    %v298 = vld [vmem:[#allocation2 + $0x98] sm:$0xff]
    %v299 = vld [vmem:[#allocation2 + $0xa0] sm:$0xff]
    %v300 = vld [vmem:[#allocation2 + $0xa8] sm:$0xff]
    %v301 = vld [vmem:[#allocation2 + $0xb0] sm:$0xff]
    %v302 = vld [vmem:[#allocation2 + $0xb8] sm:$0xff]
    %v303 = vld [vmem:[#allocation5] sm:$0xff]
    %v304 = vld [vmem:[#allocation5 + $0x8] sm:$0xff]
    %v305 = vld [vmem:[#allocation5 + $0x10] sm:$0xff]
    %v306 = vld [vmem:[#allocation5 + $0x18] sm:$0xff]
    %v307 = vld [vmem:[#allocation5 + $0x20] sm:$0xff]
    %v308 = vld [vmem:[#allocation5 + $0x28] sm:$0xff]
    %v309 = vld [vmem:[#allocation5 + $0x30] sm:$0xff]
    %v310 = vld [vmem:[#allocation5 + $0x38] sm:$0xff]
    %v311 = vld [vmem:[#allocation5 + $0x40] sm:$0xff]
    %v312 = vld [vmem:[#allocation5 + $0x48] sm:$0xff]
    %v313 = vld [vmem:[#allocation5 + $0x50] sm:$0xff]
    %v314 = vld [vmem:[#allocation5 + $0x58] sm:$0xff]
    %v315 = vld [vmem:[#allocation5 + $0x60] sm:$0xff]
    %v316 = vld [vmem:[#allocation5 + $0x68] sm:$0xff]
    %v317 = vld [vmem:[#allocation5 + $0x70] sm:$0xff]
    %v318 = vld [vmem:[#allocation5 + $0x78] sm:$0xff]
    %v319 = vld [vmem:[#allocation5 + $0x80] sm:$0xff]
    %v320 = vld [vmem:[#allocation5 + $0x88] sm:$0xff]
    %v321 = vld [vmem:[#allocation5 + $0x90] sm:$0xff]
    %v322 = vld [vmem:[#allocation5 + $0x98] sm:$0xff]
    %v323 = vld [vmem:[#allocation5 + $0xa0] sm:$0xff]
    %v324 = vld [vmem:[#allocation5 + $0xa8] sm:$0xff]
    %v325 = vld [vmem:[#allocation5 + $0xb0] sm:$0xff]
    %v326 = vld [vmem:[#allocation5 + $0xb8] sm:$0xff]
    %v327 = vld [vmem:[#allocation7] sm:$0xff]
    %v328 = vld [vmem:[#allocation7 + $0x8] sm:$0xff]
    %v329 = vld [vmem:[#allocation7 + $0x10] sm:$0xff]
    %v330 = vld [vmem:[#allocation7 + $0x18] sm:$0xff]
    %v331 = vld [vmem:[#allocation7 + $0x20] sm:$0xff]
    %v332 = vld [vmem:[#allocation7 + $0x28] sm:$0xff]
    %v333 = vld [vmem:[#allocation7 + $0x30] sm:$0xff]
    %v334 = vld [vmem:[#allocation7 + $0x38] sm:$0xff]
    %v335 = vld [vmem:[#allocation7 + $0x40] sm:$0xff]
    %v336 = vld [vmem:[#allocation7 + $0x48] sm:$0xff]
    %v337 = vld [vmem:[#allocation7 + $0x50] sm:$0xff]
    %v338 = vld [vmem:[#allocation7 + $0x58] sm:$0xff]
    %v339 = vld [vmem:[#allocation7 + $0x60] sm:$0xff]
    %v340 = vld [vmem:[#allocation7 + $0x68] sm:$0xff]
    %v341 = vld [vmem:[#allocation7 + $0x70] sm:$0xff]
    %v342 = vld [vmem:[#allocation7 + $0x78] sm:$0xff]
    %v343 = vld [vmem:[#allocation7 + $0x80] sm:$0xff]
    %v344 = vld [vmem:[#allocation7 + $0x88] sm:$0xff]
    %v345 = vld [vmem:[#allocation7 + $0x90] sm:$0xff]
    %v346 = vld [vmem:[#allocation7 + $0x98] sm:$0xff]
    %v347 = vld [vmem:[#allocation7 + $0xa0] sm:$0xff]
    %v348 = vld [vmem:[#allocation7 + $0xa8] sm:$0xff]
    %v349 = vld [vmem:[#allocation7 + $0xb0] sm:$0xff]
    %v350 = vld [vmem:[#allocation7 + $0xb8] sm:$0xff]
    %v351 = vld [vmem:[#allocation7 + $0xc0] sm:$0xff]
    %v352 = vld [vmem:[#allocation7 + $0xc8] sm:$0xff]
    %v353 = vld [vmem:[#allocation7 + $0xd0] sm:$0xff]
    %v354 = vld [vmem:[#allocation7 + $0xd8] sm:$0xff]
    %v355 = vld [vmem:[#allocation7 + $0xe0] sm:$0xff]
    %v356 = vld [vmem:[#allocation7 + $0xe8] sm:$0xff]
    %v357 = vld [vmem:[#allocation7 + $0xf0] sm:$0xff]
    %v358 = vld [vmem:[#allocation7 + $0xf8] sm:$0xff]
    %v359 = vld [vmem:[#allocation7 + $0x100] sm:$0xff]
    %v360 = vld [vmem:[#allocation7 + $0x108] sm:$0xff]
    %v361 = vld [vmem:[#allocation7 + $0x110] sm:$0xff]
    %v362 = vld [vmem:[#allocation7 + $0x118] sm:$0xff]
    %v363 = vld [vmem:[#allocation7 + $0x120] sm:$0xff]
    %v364 = vld [vmem:[#allocation7 + $0x128] sm:$0xff]
    %v365 = vld [vmem:[#allocation7 + $0x130] sm:$0xff]
    %v366 = vld [vmem:[#allocation7 + $0x138] sm:$0xff]
    %v367 = vld [vmem:[#allocation7 + $0x140] sm:$0xff]
    %v368 = vld [vmem:[#allocation7 + $0x148] sm:$0xff]
    %v369 = vld [vmem:[#allocation7 + $0x150] sm:$0xff]
    %v370 = vld [vmem:[#allocation7 + $0x158] sm:$0xff]
    %v371 = vld [vmem:[#allocation7 + $0x160] sm:$0xff]
    %v372 = vld [vmem:[#allocation7 + $0x168] sm:$0xff]
    %v373 = vld [vmem:[#allocation7 + $0x170] sm:$0xff]
    %v374 = vld [vmem:[#allocation7 + $0x178] sm:$0xff]
    %v375 = vld [vmem:[#allocation7 + $0x180] sm:$0xff]
    %v376 = vld [vmem:[#allocation7 + $0x188] sm:$0xff]
    %v377 = vld [vmem:[#allocation7 + $0x190] sm:$0xff]
    %v378 = vld [vmem:[#allocation7 + $0x198] sm:$0xff]
    %v379 = vld [vmem:[#allocation7 + $0x1a0] sm:$0xff]
    %v380 = vld [vmem:[#allocation7 + $0x1a8] sm:$0xff]
    %v381 = vld [vmem:[#allocation7 + $0x1b0] sm:$0xff]
    %v382 = vld [vmem:[#allocation7 + $0x1b8] sm:$0xff]
    %v383 = vld [vmem:[#allocation7 + $0x1c0] sm:$0xff]
    %v384 = vld [vmem:[#allocation7 + $0x1c8] sm:$0xff]
    %v385 = vld [vmem:[#allocation8] sm:$0xff]
    %v386 = vld [vmem:[#allocation8 + $0x8] sm:$0xff]
    %v387 = vld [vmem:[#allocation8 + $0x10] sm:$0xff]
    %v388 = vld [vmem:[#allocation8 + $0x18] sm:$0xff]
    %v389 = vld [vmem:[#allocation10] sm:$0xff]
    %v390 = vld [vmem:[#allocation10 + $0x8] sm:$0xff]
    %v391 = vld [vmem:[#allocation10 + $0x10] sm:$0xff]
    %v392 = vld [vmem:[#allocation10 + $0x18] sm:$0xff]
    %vm393 = vcmask 261120
    %v394 = vsel %vm393, %v279, -inf
    %v395 = vsel %vm393, %v280, -inf
    %v396 = vsel %vm393, %v281, -inf
    %v397 = vsel %vm393, %v282, -inf
    %v398 = vsel %vm393, %v283, -inf
    %v399 = vmax.f32 %v394, %v398
    %v400 = vsel %vm393, %v284, -inf
    %v401 = vmax.f32 %v395, %v400
    %v402 = vsel %vm393, %v285, -inf
    %v403 = vmax.f32 %v396, %v402
    %v404 = vsel %vm393, %v286, -inf
    %v405 = vmax.f32 %v397, %v404
    %v406 = vsel %vm393, %v287, -inf
    %v407 = vmax.f32 %v399, %v406
    %v408 = vsel %vm393, %v288, -inf
    %v409 = vmax.f32 %v401, %v408
    %v410 = vsel %vm393, %v289, -inf
    %v411 = vmax.f32 %v403, %v410
    %v412 = vsel %vm393, %v290, -inf
    %v413 = vmax.f32 %v405, %v412
    %v414 = vsel %vm393, %v291, -inf
    %v415 = vmax.f32 %v407, %v414
    %v416 = vsel %vm393, %v292, -inf
    %v417 = vmax.f32 %v409, %v416
    %v418 = vsel %vm393, %v293, -inf
    %v419 = vmax.f32 %v411, %v418
    %v420 = vsel %vm393, %v294, -inf
    %v421 = vmax.f32 %v413, %v420
    %v422 = vsel %vm393, %v295, -inf
    %v423 = vmax.f32 %v415, %v422
    %v424 = vsel %vm393, %v296, -inf
    %v425 = vmax.f32 %v417, %v424
    %v426 = vsel %vm393, %v297, -inf
    %v427 = vmax.f32 %v419, %v426
    %v428 = vsel %vm393, %v298, -inf
    %v429 = vmax.f32 %v421, %v428
    %v430 = vsel %vm393, %v299, -inf
    %v431 = vmax.f32 %v423, %v430
    %v432 = vsel %vm393, %v300, -inf
    %v433 = vmax.f32 %v425, %v432
    %v434 = vsel %vm393, %v301, -inf
    %v435 = vmax.f32 %v427, %v434
    %v436 = vsel %vm393, %v302, -inf
    %v437 = vmax.f32 %v429, %v436
    %v438 = vmax.f32 %v431, %v433
    %v439 = vmax.f32 %v435, %v437
    %v440 = vmax.f32 %v438, %v439
    %441 = vmax.xlane.f32.xlu0 %v440
    %v442 = vpop.xlane.xlu0 %441
    %v443 = vrot.slane %v442, 4
    %v444 = vmax.f32 %v442, %v443
    %v445 = vrot.slane %v444, 2
    %v446 = vmax.f32 %v444, %v445
    %v447 = vrot.slane %v446, 1
    %v448 = vmax.f32 %v446, %v447
    %s449 = vtos %v448
    %p450 = scmp.gt.f32.partialorder %s449, 128.0
    %s451 = scalar_select %p450, 255.0, 1.0
    %v452 = vsel %vm393, %v279, inf
    %v453 = vsel %vm393, %v280, inf
    %v454 = vsel %vm393, %v281, inf
    %v455 = vsel %vm393, %v282, inf
    %v456 = vsel %vm393, %v283, inf
    %v457 = vmin.f32 %v452, %v456
    %v458 = vsel %vm393, %v284, inf
    %v459 = vmin.f32 %v453, %v458
    %v460 = vsel %vm393, %v285, inf
    %v461 = vmin.f32 %v454, %v460
    %v462 = vsel %vm393, %v286, inf
    %v463 = vmin.f32 %v455, %v462
    %v464 = vsel %vm393, %v287, inf
    %v465 = vmin.f32 %v457, %v464
    %v466 = vsel %vm393, %v288, inf
    %v467 = vmin.f32 %v459, %v466
    %v468 = vsel %vm393, %v289, inf
    %v469 = vmin.f32 %v461, %v468
    %v470 = vsel %vm393, %v290, inf
    %v471 = vmin.f32 %v463, %v470
    %v472 = vsel %vm393, %v291, inf
    %v473 = vmin.f32 %v465, %v472
    %v474 = vsel %vm393, %v292, inf
    %v475 = vmin.f32 %v467, %v474
    %v476 = vsel %vm393, %v293, inf
    %v477 = vmin.f32 %v469, %v476
    %v478 = vsel %vm393, %v294, inf
    %v479 = vmin.f32 %v471, %v478
    %v480 = vsel %vm393, %v295, inf
    %v481 = vmin.f32 %v473, %v480
    %v482 = vsel %vm393, %v296, inf
    %v483 = vmin.f32 %v475, %v482
    %v484 = vsel %vm393, %v297, inf
    %v485 = vmin.f32 %v477, %v484
    %v486 = vsel %vm393, %v298, inf
    %v487 = vmin.f32 %v479, %v486
    %v488 = vsel %vm393, %v299, inf
    %v489 = vmin.f32 %v481, %v488
    %v490 = vsel %vm393, %v300, inf
    %v491 = vmin.f32 %v483, %v490
    %v492 = vsel %vm393, %v301, inf
    %v493 = vmin.f32 %v485, %v492
    %v494 = vsel %vm393, %v302, inf
    %v495 = vmin.f32 %v487, %v494
    %v496 = vmin.f32 %v489, %v491
    %v497 = vmin.f32 %v493, %v495
    %v498 = vmin.f32 %v496, %v497
    %499 = vmin.xlane.f32.xlu0 %v498
    %v500 = vpop.xlane.xlu0 %499
    %v501 = vrot.slane %v500, 4
    %v502 = vmin.f32 %v500, %v501
    %v503 = vrot.slane %v502, 2
    %v504 = vmin.f32 %v502, %v503
    %v505 = vrot.slane %v504, 1
    %v506 = vmin.f32 %v504, %v505
    %s507 = vtos %v506
    %p508 = scmp.lt.f32.partialorder %s507, -0.5
    %s509 = scalar_select %p508, -1.0, 0.0
    %s510 = ssub.f32 %s451, %s509
    %s511 = smul.f32 %s510, 0.01
    %s512 = smul.f32 %s511, %s511
    %s513 = smul.f32 %s510, 0.03
    %s514 = smul.f32 %s513, %s513
    %vm515 = vcmask 523264
    %v517 = vsel %vm515, %v328, 0
    %v520 = vsel %vm515, %v330, 0
    %v523 = vsel %vm515, %v332, 0
    %v526 = vsel %vm515, %v334, 0
    %v529 = vsel %vm515, %v336, 0
    %v532 = vsel %vm515, %v338, 0
    %v535 = vsel %vm515, %v340, 0
    %v538 = vsel %vm515, %v342, 0
    %v541 = vsel %vm515, %v344, 0
    %v544 = vsel %vm515, %v346, 0
    %v547 = vsel %vm515, %v348, 0
    %v550 = vsel %vm515, %v350, 0
    %v553 = vsel %vm515, %v352, 0
    %v556 = vsel %vm515, %v354, 0
    %v559 = vsel %vm515, %v356, 0
    %v562 = vsel %vm515, %v358, 0
    %v565 = vsel %vm515, %v360, 0
    %v568 = vsel %vm515, %v362, 0
    %v571 = vsel %vm515, %v364, 0
    %v574 = vsel %vm515, %v366, 0
    %v577 = vsel %vm515, %v368, 0
    %v580 = vsel %vm515, %v370, 0
    %v583 = vsel %vm515, %v372, 0
    %v586 = vsel %vm515, %v374, 0
    %v589 = vsel %vm515, %v376, 0
    %v592 = vsel %vm515, %v378, 0
    %v595 = vsel %vm515, %v380, 0
    %v598 = vsel %vm515, %v382, 0
    %v601 = vsel %vm515, %v384, 0
    %603 = vmatpush.msra.mxu0 %v294
    %604 = vmatpush.msra.mxu0 %v293
    %605 = vmatpush.msra.mxu0 %v292
    %606 = vmatpush.msra.mxu0 %v291
    %607 = vmatpush.msra.mxu0 %v290
    %608 = vmatpush.msra.mxu0 %v289
    %609 = vmatpush.msra.mxu0 %v288
    %610 = vmatpush.msra.mxu0 %v287
    %611 = vmatpush.msra.mxu0 %v286
    %612 = vmatpush.msra.mxu0 %v285
    %613 = vmatpush.msra.mxu0 %v284
    %614 = vmatpush.msra.mxu0 %v283
    %615 = vmatpush.msra.mxu0 %v282
    %616 = vmatpush.msra.mxu0 %v281
    %617 = vmatpush.msra.mxu0 %v280
    %618 = vmatpush.msra.mxu0 %v279
    %619 = vmatmul.f32.gmra.mxu0 %v327
    %v620 = vpop.f32.mrf.mxu0
    %v621 = vadd.f32 0.0, %v620
    %622 = vmatmul.f32.gmra.mxu0 %v329
    %v623 = vpop.f32.mrf.mxu0
    %v624 = vadd.f32 0.0, %v623
    %625 = vmatmul.f32.gmra.mxu0 %v331
    %v626 = vpop.f32.mrf.mxu0
    %v627 = vadd.f32 0.0, %v626
    %628 = vmatmul.f32.gmra.mxu0 %v333
    %v629 = vpop.f32.mrf.mxu0
    %v630 = vadd.f32 0.0, %v629
    %631 = vmatmul.f32.gmra.mxu0 %v335
    %v632 = vpop.f32.mrf.mxu0
    %v633 = vadd.f32 0.0, %v632
    %634 = vmatmul.f32.gmra.mxu0 %v337
    %v635 = vpop.f32.mrf.mxu0
    %v636 = vadd.f32 0.0, %v635
    %637 = vmatmul.f32.gmra.mxu0 %v339
    %v638 = vpop.f32.mrf.mxu0
    %v639 = vadd.f32 0.0, %v638
    %640 = vmatmul.f32.gmra.mxu0 %v341
    %v641 = vpop.f32.mrf.mxu0
    %v642 = vadd.f32 0.0, %v641
    %643 = vmatmul.f32.gmra.mxu0 %v343
    %v644 = vpop.f32.mrf.mxu0
    %v645 = vadd.f32 0.0, %v644
    %646 = vmatmul.f32.gmra.mxu0 %v345
    %v647 = vpop.f32.mrf.mxu0
    %v648 = vadd.f32 0.0, %v647
    %649 = vmatmul.f32.gmra.mxu0 %v347
    %v650 = vpop.f32.mrf.mxu0
    %v651 = vadd.f32 0.0, %v650
    %652 = vmatmul.f32.gmra.mxu0 %v349
    %v653 = vpop.f32.mrf.mxu0
    %v654 = vadd.f32 0.0, %v653
    %655 = vmatmul.f32.gmra.mxu0 %v351
    %v656 = vpop.f32.mrf.mxu0
    %v657 = vadd.f32 0.0, %v656
    %658 = vmatmul.f32.gmra.mxu0 %v353
    %v659 = vpop.f32.mrf.mxu0
    %v660 = vadd.f32 0.0, %v659
    %661 = vmatmul.f32.gmra.mxu0 %v355
    %v662 = vpop.f32.mrf.mxu0
    %v663 = vadd.f32 0.0, %v662
    %664 = vmatmul.f32.gmra.mxu0 %v357
    %v665 = vpop.f32.mrf.mxu0
    %v666 = vadd.f32 0.0, %v665
    %667 = vmatmul.f32.gmra.mxu0 %v359
    %v668 = vpop.f32.mrf.mxu0
    %v669 = vadd.f32 0.0, %v668
    %670 = vmatmul.f32.gmra.mxu0 %v361
    %v671 = vpop.f32.mrf.mxu0
    %v672 = vadd.f32 0.0, %v671
    %673 = vmatmul.f32.gmra.mxu0 %v363
    %v674 = vpop.f32.mrf.mxu0
    %v675 = vadd.f32 0.0, %v674
    %676 = vmatmul.f32.gmra.mxu0 %v365
    %v677 = vpop.f32.mrf.mxu0
    %v678 = vadd.f32 0.0, %v677
    %679 = vmatmul.f32.gmra.mxu0 %v367
    %v680 = vpop.f32.mrf.mxu0
    %v681 = vadd.f32 0.0, %v680
    %682 = vmatmul.f32.gmra.mxu0 %v369
    %v683 = vpop.f32.mrf.mxu0
    %v684 = vadd.f32 0.0, %v683
    %685 = vmatmul.f32.gmra.mxu0 %v371
    %v686 = vpop.f32.mrf.mxu0
    %v687 = vadd.f32 0.0, %v686
    %688 = vmatmul.f32.gmra.mxu0 %v373
    %v689 = vpop.f32.mrf.mxu0
    %v690 = vadd.f32 0.0, %v689
    %691 = vmatmul.f32.gmra.mxu0 %v375
    %v692 = vpop.f32.mrf.mxu0
    %v693 = vadd.f32 0.0, %v692
    %694 = vmatmul.f32.gmra.mxu0 %v377
    %v695 = vpop.f32.mrf.mxu0
    %v696 = vadd.f32 0.0, %v695
    %697 = vmatmul.f32.gmra.mxu0 %v379
    %v698 = vpop.f32.mrf.mxu0
    %v699 = vadd.f32 0.0, %v698
    %700 = vmatmul.f32.gmra.mxu0 %v381
    %v701 = vpop.f32.mrf.mxu0
    %v702 = vadd.f32 0.0, %v701
    %703 = vmatmul.f32.gmra.mxu0 %v383
    %v704 = vpop.f32.mrf.mxu0
    %v705 = vadd.f32 0.0, %v704
    %706 = vdwg.mxu0
    %707 = vmatpush.msra.mxu0 0.0
    %708 = vmatpush.msra.mxu0 0.0
    %709 = vmatpush.msra.mxu0 0.0
    %710 = vmatpush.msra.mxu0 0.0
    %711 = vmatpush.msra.mxu0 0.0
    %712 = vmatpush.msra.mxu0 0.0
    %713 = vmatpush.msra.mxu0 0.0
    %714 = vmatpush.msra.mxu0 0.0
    %715 = vmatpush.msra.mxu0 %v302
    %716 = vmatpush.msra.mxu0 %v301
    %717 = vmatpush.msra.mxu0 %v300
    %718 = vmatpush.msra.mxu0 %v299
    %719 = vmatpush.msra.mxu0 %v298
    %720 = vmatpush.msra.mxu0 %v297
    %721 = vmatpush.msra.mxu0 %v296
    %722 = vmatpush.msra.mxu0 %v295
    %723 = vmatmul.f32.gmra.mxu0 %v517
    %v724 = vpop.f32.mrf.mxu0
    %v725 = vadd.f32 %v621, %v724
    %726 = vmatmul.f32.gmra.mxu0 %v520
    %v727 = vpop.f32.mrf.mxu0
    %v728 = vadd.f32 %v624, %v727
    %729 = vmatmul.f32.gmra.mxu0 %v523
    %v730 = vpop.f32.mrf.mxu0
    %v731 = vadd.f32 %v627, %v730
    %732 = vmatmul.f32.gmra.mxu0 %v526
    %v733 = vpop.f32.mrf.mxu0
    %v734 = vadd.f32 %v630, %v733
    %735 = vmatmul.f32.gmra.mxu0 %v529
    %v736 = vpop.f32.mrf.mxu0
    %v737 = vadd.f32 %v633, %v736
    %738 = vmatmul.f32.gmra.mxu0 %v532
    %v739 = vpop.f32.mrf.mxu0
    %v740 = vadd.f32 %v636, %v739
    %741 = vmatmul.f32.gmra.mxu0 %v535
    %v742 = vpop.f32.mrf.mxu0
    %v743 = vadd.f32 %v639, %v742
    %744 = vmatmul.f32.gmra.mxu0 %v538
    %v745 = vpop.f32.mrf.mxu0
    %v746 = vadd.f32 %v642, %v745
    %747 = vmatmul.f32.gmra.mxu0 %v541
    %v748 = vpop.f32.mrf.mxu0
    %v749 = vadd.f32 %v645, %v748
    %750 = vmatmul.f32.gmra.mxu0 %v544
    %v751 = vpop.f32.mrf.mxu0
    %v752 = vadd.f32 %v648, %v751
    %753 = vmatmul.f32.gmra.mxu0 %v547
    %v754 = vpop.f32.mrf.mxu0
    %v755 = vadd.f32 %v651, %v754
    %756 = vmatmul.f32.gmra.mxu0 %v550
    %v757 = vpop.f32.mrf.mxu0
    %v758 = vadd.f32 %v654, %v757
    %759 = vmatmul.f32.gmra.mxu0 %v553
    %v760 = vpop.f32.mrf.mxu0
    %v761 = vadd.f32 %v657, %v760
    %762 = vmatmul.f32.gmra.mxu0 %v556
    %v763 = vpop.f32.mrf.mxu0
    %v764 = vadd.f32 %v660, %v763
    %765 = vmatmul.f32.gmra.mxu0 %v559
    %v766 = vpop.f32.mrf.mxu0
    %v767 = vadd.f32 %v663, %v766
    %768 = vmatmul.f32.gmra.mxu0 %v562
    %v769 = vpop.f32.mrf.mxu0
    %v770 = vadd.f32 %v666, %v769
    %771 = vmatmul.f32.gmra.mxu0 %v565
    %v772 = vpop.f32.mrf.mxu0
    %v773 = vadd.f32 %v669, %v772
    %774 = vmatmul.f32.gmra.mxu0 %v568
    %v775 = vpop.f32.mrf.mxu0
    %v776 = vadd.f32 %v672, %v775
    %777 = vmatmul.f32.gmra.mxu0 %v571
    %v778 = vpop.f32.mrf.mxu0
    %v779 = vadd.f32 %v675, %v778
    %780 = vmatmul.f32.gmra.mxu0 %v574
    %v781 = vpop.f32.mrf.mxu0
    %v782 = vadd.f32 %v678, %v781
    %783 = vmatmul.f32.gmra.mxu0 %v577
    %v784 = vpop.f32.mrf.mxu0
    %v785 = vadd.f32 %v681, %v784
    %786 = vmatmul.f32.gmra.mxu0 %v580
    %v787 = vpop.f32.mrf.mxu0
    %v788 = vadd.f32 %v684, %v787
    %789 = vmatmul.f32.gmra.mxu0 %v583
    %v790 = vpop.f32.mrf.mxu0
    %v791 = vadd.f32 %v687, %v790
    %792 = vmatmul.f32.gmra.mxu0 %v586
    %v793 = vpop.f32.mrf.mxu0
    %v794 = vadd.f32 %v690, %v793
    %795 = vmatmul.f32.gmra.mxu0 %v589
    %v796 = vpop.f32.mrf.mxu0
    %v797 = vadd.f32 %v693, %v796
    %798 = vmatmul.f32.gmra.mxu0 %v592
    %v799 = vpop.f32.mrf.mxu0
    %v800 = vadd.f32 %v696, %v799
    %801 = vmatmul.f32.gmra.mxu0 %v595
    %v802 = vpop.f32.mrf.mxu0
    %v803 = vadd.f32 %v699, %v802
    %804 = vmatmul.f32.gmra.mxu0 %v598
    %v805 = vpop.f32.mrf.mxu0
    %v806 = vadd.f32 %v702, %v805
    %807 = vmatmul.f32.gmra.mxu0 %v601
    %v808 = vpop.f32.mrf.mxu0
    %v809 = vadd.f32 %v705, %v808
    %810 = vdwg.mxu0
    %811 = vmatpush.msra.mxu0 %v318
    %812 = vmatpush.msra.mxu0 %v317
    %813 = vmatpush.msra.mxu0 %v316
    %814 = vmatpush.msra.mxu0 %v315
    %815 = vmatpush.msra.mxu0 %v314
    %816 = vmatpush.msra.mxu0 %v313
    %817 = vmatpush.msra.mxu0 %v312
    %818 = vmatpush.msra.mxu0 %v311
    %819 = vmatpush.msra.mxu0 %v310
    %820 = vmatpush.msra.mxu0 %v309
    %821 = vmatpush.msra.mxu0 %v308
    %822 = vmatpush.msra.mxu0 %v307
    %823 = vmatpush.msra.mxu0 %v306
    %824 = vmatpush.msra.mxu0 %v305
    %825 = vmatpush.msra.mxu0 %v304
    %826 = vmatpush.msra.mxu0 %v303
    %827 = vmatmul.f32.gmra.mxu0 %v327
    %v828 = vpop.f32.mrf.mxu0
    %v829 = vadd.f32 0.0, %v828
    %830 = vmatmul.f32.gmra.mxu0 %v329
    %v831 = vpop.f32.mrf.mxu0
    %v832 = vadd.f32 0.0, %v831
    %833 = vmatmul.f32.gmra.mxu0 %v331
    %v834 = vpop.f32.mrf.mxu0
    %v835 = vadd.f32 0.0, %v834
    %836 = vmatmul.f32.gmra.mxu0 %v333
    %v837 = vpop.f32.mrf.mxu0
    %v838 = vadd.f32 0.0, %v837
    %839 = vmatmul.f32.gmra.mxu0 %v335
    %v840 = vpop.f32.mrf.mxu0
    %v841 = vadd.f32 0.0, %v840
    %842 = vmatmul.f32.gmra.mxu0 %v337
    %v843 = vpop.f32.mrf.mxu0
    %v844 = vadd.f32 0.0, %v843
    %845 = vmatmul.f32.gmra.mxu0 %v339
    %v846 = vpop.f32.mrf.mxu0
    %v847 = vadd.f32 0.0, %v846
    %848 = vmatmul.f32.gmra.mxu0 %v341
    %v849 = vpop.f32.mrf.mxu0
    %v850 = vadd.f32 0.0, %v849
    %851 = vmatmul.f32.gmra.mxu0 %v343
    %v852 = vpop.f32.mrf.mxu0
    %v853 = vadd.f32 0.0, %v852
    %854 = vmatmul.f32.gmra.mxu0 %v345
    %v855 = vpop.f32.mrf.mxu0
    %v856 = vadd.f32 0.0, %v855
    %857 = vmatmul.f32.gmra.mxu0 %v347
    %v858 = vpop.f32.mrf.mxu0
    %v859 = vadd.f32 0.0, %v858
    %860 = vmatmul.f32.gmra.mxu0 %v349
    %v861 = vpop.f32.mrf.mxu0
    %v862 = vadd.f32 0.0, %v861
    %863 = vmatmul.f32.gmra.mxu0 %v351
    %v864 = vpop.f32.mrf.mxu0
    %v865 = vadd.f32 0.0, %v864
    %866 = vmatmul.f32.gmra.mxu0 %v353
    %v867 = vpop.f32.mrf.mxu0
    %v868 = vadd.f32 0.0, %v867
    %869 = vmatmul.f32.gmra.mxu0 %v355
    %v870 = vpop.f32.mrf.mxu0
    %v871 = vadd.f32 0.0, %v870
    %872 = vmatmul.f32.gmra.mxu0 %v357
    %v873 = vpop.f32.mrf.mxu0
    %v874 = vadd.f32 0.0, %v873
    %875 = vmatmul.f32.gmra.mxu0 %v359
    %v876 = vpop.f32.mrf.mxu0
    %v877 = vadd.f32 0.0, %v876
    %878 = vmatmul.f32.gmra.mxu0 %v361
    %v879 = vpop.f32.mrf.mxu0
    %v880 = vadd.f32 0.0, %v879
    %881 = vmatmul.f32.gmra.mxu0 %v363
    %v882 = vpop.f32.mrf.mxu0
    %v883 = vadd.f32 0.0, %v882
    %884 = vmatmul.f32.gmra.mxu0 %v365
    %v885 = vpop.f32.mrf.mxu0
    %v886 = vadd.f32 0.0, %v885
    %887 = vmatmul.f32.gmra.mxu0 %v367
    %v888 = vpop.f32.mrf.mxu0
    %v889 = vadd.f32 0.0, %v888
    %890 = vmatmul.f32.gmra.mxu0 %v369
    %v891 = vpop.f32.mrf.mxu0
    %v892 = vadd.f32 0.0, %v891
    %893 = vmatmul.f32.gmra.mxu0 %v371
    %v894 = vpop.f32.mrf.mxu0
    %v895 = vadd.f32 0.0, %v894
    %896 = vmatmul.f32.gmra.mxu0 %v373
    %v897 = vpop.f32.mrf.mxu0
    %v898 = vadd.f32 0.0, %v897
    %899 = vmatmul.f32.gmra.mxu0 %v375
    %v900 = vpop.f32.mrf.mxu0
    %v901 = vadd.f32 0.0, %v900
    %902 = vmatmul.f32.gmra.mxu0 %v377
    %v903 = vpop.f32.mrf.mxu0
    %v904 = vadd.f32 0.0, %v903
    %905 = vmatmul.f32.gmra.mxu0 %v379
    %v906 = vpop.f32.mrf.mxu0
    %v907 = vadd.f32 0.0, %v906
    %908 = vmatmul.f32.gmra.mxu0 %v381
    %v909 = vpop.f32.mrf.mxu0
    %v910 = vadd.f32 0.0, %v909
    %911 = vmatmul.f32.gmra.mxu0 %v383
    %v912 = vpop.f32.mrf.mxu0
    %v913 = vadd.f32 0.0, %v912
    %914 = vdwg.mxu0
    %915 = vmatpush.msra.mxu0 0.0
    %916 = vmatpush.msra.mxu0 0.0
    %917 = vmatpush.msra.mxu0 0.0
    %918 = vmatpush.msra.mxu0 0.0
    %919 = vmatpush.msra.mxu0 0.0
    %920 = vmatpush.msra.mxu0 0.0
    %921 = vmatpush.msra.mxu0 0.0
    %922 = vmatpush.msra.mxu0 0.0
    %923 = vmatpush.msra.mxu0 %v326
    %924 = vmatpush.msra.mxu0 %v325
    %925 = vmatpush.msra.mxu0 %v324
    %926 = vmatpush.msra.mxu0 %v323
    %927 = vmatpush.msra.mxu0 %v322
    %928 = vmatpush.msra.mxu0 %v321
    %929 = vmatpush.msra.mxu0 %v320
    %930 = vmatpush.msra.mxu0 %v319
    %931 = vmatmul.f32.gmra.mxu0 %v517
    %v932 = vpop.f32.mrf.mxu0
    %v933 = vadd.f32 %v829, %v932
    %934 = vmatmul.f32.gmra.mxu0 %v520
    %v935 = vpop.f32.mrf.mxu0
    %v936 = vadd.f32 %v832, %v935
    %937 = vmatmul.f32.gmra.mxu0 %v523
    %v938 = vpop.f32.mrf.mxu0
    %v939 = vadd.f32 %v835, %v938
    %940 = vmatmul.f32.gmra.mxu0 %v526
    %v941 = vpop.f32.mrf.mxu0
    %v942 = vadd.f32 %v838, %v941
    %943 = vmatmul.f32.gmra.mxu0 %v529
    %v944 = vpop.f32.mrf.mxu0
    %v945 = vadd.f32 %v841, %v944
    %946 = vmatmul.f32.gmra.mxu0 %v532
    %v947 = vpop.f32.mrf.mxu0
    %v948 = vadd.f32 %v844, %v947
    %949 = vmatmul.f32.gmra.mxu0 %v535
    %v950 = vpop.f32.mrf.mxu0
    %v951 = vadd.f32 %v847, %v950
    %952 = vmatmul.f32.gmra.mxu0 %v538
    %v953 = vpop.f32.mrf.mxu0
    %v954 = vadd.f32 %v850, %v953
    %955 = vmatmul.f32.gmra.mxu0 %v541
    %v956 = vpop.f32.mrf.mxu0
    %v957 = vadd.f32 %v853, %v956
    %958 = vmatmul.f32.gmra.mxu0 %v544
    %v959 = vpop.f32.mrf.mxu0
    %v960 = vadd.f32 %v856, %v959
    %961 = vmatmul.f32.gmra.mxu0 %v547
    %v962 = vpop.f32.mrf.mxu0
    %v963 = vadd.f32 %v859, %v962
    %964 = vmatmul.f32.gmra.mxu0 %v550
    %v965 = vpop.f32.mrf.mxu0
    %v966 = vadd.f32 %v862, %v965
    %967 = vmatmul.f32.gmra.mxu0 %v553
    %v968 = vpop.f32.mrf.mxu0
    %v969 = vadd.f32 %v865, %v968
    %970 = vmatmul.f32.gmra.mxu0 %v556
    %v971 = vpop.f32.mrf.mxu0
    %v972 = vadd.f32 %v868, %v971
    %973 = vmatmul.f32.gmra.mxu0 %v559
    %v974 = vpop.f32.mrf.mxu0
    %v975 = vadd.f32 %v871, %v974
    %976 = vmatmul.f32.gmra.mxu0 %v562
    %v977 = vpop.f32.mrf.mxu0
    %v978 = vadd.f32 %v874, %v977
    %979 = vmatmul.f32.gmra.mxu0 %v565
    %v980 = vpop.f32.mrf.mxu0
    %v981 = vadd.f32 %v877, %v980
    %982 = vmatmul.f32.gmra.mxu0 %v568
    %v983 = vpop.f32.mrf.mxu0
    %v984 = vadd.f32 %v880, %v983
    %985 = vmatmul.f32.gmra.mxu0 %v571
    %v986 = vpop.f32.mrf.mxu0
    %v987 = vadd.f32 %v883, %v986
    %988 = vmatmul.f32.gmra.mxu0 %v574
    %v989 = vpop.f32.mrf.mxu0
    %v990 = vadd.f32 %v886, %v989
    %991 = vmatmul.f32.gmra.mxu0 %v577
    %v992 = vpop.f32.mrf.mxu0
    %v993 = vadd.f32 %v889, %v992
    %994 = vmatmul.f32.gmra.mxu0 %v580
    %v995 = vpop.f32.mrf.mxu0
    %v996 = vadd.f32 %v892, %v995
    %997 = vmatmul.f32.gmra.mxu0 %v583
    %v998 = vpop.f32.mrf.mxu0
    %v999 = vadd.f32 %v895, %v998
    %1000 = vmatmul.f32.gmra.mxu0 %v586
    %v1001 = vpop.f32.mrf.mxu0
    %v1002 = vadd.f32 %v898, %v1001
    %1003 = vmatmul.f32.gmra.mxu0 %v589
    %v1004 = vpop.f32.mrf.mxu0
    %v1005 = vadd.f32 %v901, %v1004
    %1006 = vmatmul.f32.gmra.mxu0 %v592
    %v1007 = vpop.f32.mrf.mxu0
    %v1008 = vadd.f32 %v904, %v1007
    %1009 = vmatmul.f32.gmra.mxu0 %v595
    %v1010 = vpop.f32.mrf.mxu0
    %v1011 = vadd.f32 %v907, %v1010
    %1012 = vmatmul.f32.gmra.mxu0 %v598
    %v1013 = vpop.f32.mrf.mxu0
    %v1014 = vadd.f32 %v910, %v1013
    %1015 = vmatmul.f32.gmra.mxu0 %v601
    %v1016 = vpop.f32.mrf.mxu0
    %v1017 = vadd.f32 %v913, %v1016
    %1018 = vdwg.mxu0
    %v1019 = vmul.f32 %v279, %v279
    %v1020 = vmul.f32 %v280, %v280
    %v1021 = vmul.f32 %v281, %v281
    %v1022 = vmul.f32 %v282, %v282
    %v1023 = vmul.f32 %v283, %v283
    %v1024 = vmul.f32 %v284, %v284
    %v1025 = vmul.f32 %v285, %v285
    %v1026 = vmul.f32 %v286, %v286
    %v1027 = vmul.f32 %v287, %v287
    %v1028 = vmul.f32 %v288, %v288
    %v1029 = vmul.f32 %v289, %v289
    %v1030 = vmul.f32 %v290, %v290
    %v1031 = vmul.f32 %v291, %v291
    %v1032 = vmul.f32 %v292, %v292
    %v1033 = vmul.f32 %v293, %v293
    %v1034 = vmul.f32 %v294, %v294
    %v1035 = vmul.f32 %v295, %v295
    %v1036 = vmul.f32 %v296, %v296
    %v1037 = vmul.f32 %v297, %v297
    %v1038 = vmul.f32 %v298, %v298
    %v1039 = vmul.f32 %v299, %v299
    %v1040 = vmul.f32 %v300, %v300
    %v1041 = vmul.f32 %v301, %v301
    %v1042 = vmul.f32 %v302, %v302
    %1043 = vmatpush.msra.mxu0 %v1034
    %1044 = vmatpush.msra.mxu0 %v1033
    %1045 = vmatpush.msra.mxu0 %v1032
    %1046 = vmatpush.msra.mxu0 %v1031
    %1047 = vmatpush.msra.mxu0 %v1030
    %1048 = vmatpush.msra.mxu0 %v1029
    %1049 = vmatpush.msra.mxu0 %v1028
    %1050 = vmatpush.msra.mxu0 %v1027
    %1051 = vmatpush.msra.mxu0 %v1026
    %1052 = vmatpush.msra.mxu0 %v1025
    %1053 = vmatpush.msra.mxu0 %v1024
    %1054 = vmatpush.msra.mxu0 %v1023
    %1055 = vmatpush.msra.mxu0 %v1022
    %1056 = vmatpush.msra.mxu0 %v1021
    %1057 = vmatpush.msra.mxu0 %v1020
    %1058 = vmatpush.msra.mxu0 %v1019
    %1059 = vmatmul.f32.gmra.mxu0 %v327
    %v1060 = vpop.f32.mrf.mxu0
    %v1061 = vadd.f32 0.0, %v1060
    %1062 = vmatmul.f32.gmra.mxu0 %v329
    %v1063 = vpop.f32.mrf.mxu0
    %v1064 = vadd.f32 0.0, %v1063
    %1065 = vmatmul.f32.gmra.mxu0 %v331
    %v1066 = vpop.f32.mrf.mxu0
    %v1067 = vadd.f32 0.0, %v1066
    %1068 = vmatmul.f32.gmra.mxu0 %v333
    %v1069 = vpop.f32.mrf.mxu0
    %v1070 = vadd.f32 0.0, %v1069
    %1071 = vmatmul.f32.gmra.mxu0 %v335
    %v1072 = vpop.f32.mrf.mxu0
    %v1073 = vadd.f32 0.0, %v1072
    %1074 = vmatmul.f32.gmra.mxu0 %v337
    %v1075 = vpop.f32.mrf.mxu0
    %v1076 = vadd.f32 0.0, %v1075
    %1077 = vmatmul.f32.gmra.mxu0 %v339
    %v1078 = vpop.f32.mrf.mxu0
    %v1079 = vadd.f32 0.0, %v1078
    %1080 = vmatmul.f32.gmra.mxu0 %v341
    %v1081 = vpop.f32.mrf.mxu0
    %v1082 = vadd.f32 0.0, %v1081
    %1083 = vmatmul.f32.gmra.mxu0 %v343
    %v1084 = vpop.f32.mrf.mxu0
    %v1085 = vadd.f32 0.0, %v1084
    %1086 = vmatmul.f32.gmra.mxu0 %v345
    %v1087 = vpop.f32.mrf.mxu0
    %v1088 = vadd.f32 0.0, %v1087
    %1089 = vmatmul.f32.gmra.mxu0 %v347
    %v1090 = vpop.f32.mrf.mxu0
    %v1091 = vadd.f32 0.0, %v1090
    %1092 = vmatmul.f32.gmra.mxu0 %v349
    %v1093 = vpop.f32.mrf.mxu0
    %v1094 = vadd.f32 0.0, %v1093
    %1095 = vmatmul.f32.gmra.mxu0 %v351
    %v1096 = vpop.f32.mrf.mxu0
    %v1097 = vadd.f32 0.0, %v1096
    %1098 = vmatmul.f32.gmra.mxu0 %v353
    %v1099 = vpop.f32.mrf.mxu0
    %v1100 = vadd.f32 0.0, %v1099
    %1101 = vmatmul.f32.gmra.mxu0 %v355
    %v1102 = vpop.f32.mrf.mxu0
    %v1103 = vadd.f32 0.0, %v1102
    %1104 = vmatmul.f32.gmra.mxu0 %v357
    %v1105 = vpop.f32.mrf.mxu0
    %v1106 = vadd.f32 0.0, %v1105
    %1107 = vmatmul.f32.gmra.mxu0 %v359
    %v1108 = vpop.f32.mrf.mxu0
    %v1109 = vadd.f32 0.0, %v1108
    %1110 = vmatmul.f32.gmra.mxu0 %v361
    %v1111 = vpop.f32.mrf.mxu0
    %1112 = vmatmul.f32.gmra.mxu0 %v363
    %v1113 = vpop.f32.mrf.mxu0
    %1114 = vmatmul.f32.gmra.mxu0 %v365
    %v1115 = vpop.f32.mrf.mxu0
    %1116 = vmatmul.f32.gmra.mxu0 %v367
    %v1117 = vpop.f32.mrf.mxu0
    %1118 = vmatmul.f32.gmra.mxu0 %v369
    %v1119 = vpop.f32.mrf.mxu0
    %1120 = vmatmul.f32.gmra.mxu0 %v371
    %v1121 = vpop.f32.mrf.mxu0
    %1122 = vmatmul.f32.gmra.mxu0 %v373
    %v1123 = vpop.f32.mrf.mxu0
    %1124 = vmatmul.f32.gmra.mxu0 %v375
    %v1125 = vpop.f32.mrf.mxu0
    %1126 = vmatmul.f32.gmra.mxu0 %v377
    %v1127 = vpop.f32.mrf.mxu0
    %1128 = vmatmul.f32.gmra.mxu0 %v379
    %v1129 = vpop.f32.mrf.mxu0
    %1130 = vmatmul.f32.gmra.mxu0 %v381
    %v1131 = vpop.f32.mrf.mxu0
    %1132 = vmatmul.f32.gmra.mxu0 %v383
    %v1133 = vpop.f32.mrf.mxu0
    %1134 = vdwg.mxu0
    %1135 = vmatpush.msra.mxu0 0.0
    %1136 = vmatpush.msra.mxu0 0.0
    %1137 = vmatpush.msra.mxu0 0.0
    %1138 = vmatpush.msra.mxu0 0.0
    %1139 = vmatpush.msra.mxu0 0.0
    %1140 = vmatpush.msra.mxu0 0.0
    %1141 = vmatpush.msra.mxu0 0.0
    %1142 = vmatpush.msra.mxu0 0.0
    %1143 = vmatpush.msra.mxu0 %v1042
    %1144 = vmatpush.msra.mxu0 %v1041
    %1145 = vmatpush.msra.mxu0 %v1040
    %1146 = vmatpush.msra.mxu0 %v1039
    %1147 = vmatpush.msra.mxu0 %v1038
    %1148 = vmatpush.msra.mxu0 %v1037
    %1149 = vmatpush.msra.mxu0 %v1036
    %1150 = vmatpush.msra.mxu0 %v1035
    %1151 = vmatmul.f32.gmra.mxu0 %v517
    %v1152 = vpop.f32.mrf.mxu0
    %v1153 = vadd.f32 %v1061, %v1152
    %1154 = vmatmul.f32.gmra.mxu0 %v520
    %v1155 = vpop.f32.mrf.mxu0
    %v1156 = vadd.f32 %v1064, %v1155
    %1157 = vmatmul.f32.gmra.mxu0 %v523
    %v1158 = vpop.f32.mrf.mxu0
    %v1159 = vadd.f32 %v1067, %v1158
    %1160 = vmatmul.f32.gmra.mxu0 %v526
    %v1161 = vpop.f32.mrf.mxu0
    %v1162 = vadd.f32 %v1070, %v1161
    %1163 = vmatmul.f32.gmra.mxu0 %v529
    %v1164 = vpop.f32.mrf.mxu0
    %v1165 = vadd.f32 %v1073, %v1164
    %1166 = vmatmul.f32.gmra.mxu0 %v532
    %v1167 = vpop.f32.mrf.mxu0
    %v1168 = vadd.f32 %v1076, %v1167
    %1169 = vmatmul.f32.gmra.mxu0 %v535
    %v1170 = vpop.f32.mrf.mxu0
    %v1171 = vadd.f32 %v1079, %v1170
    %1172 = vmatmul.f32.gmra.mxu0 %v538
    %v1173 = vpop.f32.mrf.mxu0
    %v1174 = vadd.f32 %v1082, %v1173
    %1175 = vmatmul.f32.gmra.mxu0 %v541
    %v1176 = vpop.f32.mrf.mxu0
    %v1177 = vadd.f32 %v1085, %v1176
    %1178 = vmatmul.f32.gmra.mxu0 %v544
    %v1179 = vpop.f32.mrf.mxu0
    %v1180 = vadd.f32 %v1088, %v1179
    %1181 = vmatmul.f32.gmra.mxu0 %v547
    %v1182 = vpop.f32.mrf.mxu0
    %v1183 = vadd.f32 %v1091, %v1182
    %1184 = vmatmul.f32.gmra.mxu0 %v550
    %v1185 = vpop.f32.mrf.mxu0
    %v1186 = vadd.f32 %v1094, %v1185
    %1187 = vmatmul.f32.gmra.mxu0 %v553
    %v1188 = vpop.f32.mrf.mxu0
    %v1189 = vadd.f32 %v1097, %v1188
    %1190 = vmatmul.f32.gmra.mxu0 %v556
    %v1191 = vpop.f32.mrf.mxu0
    %v1192 = vadd.f32 %v1100, %v1191
    %1193 = vmatmul.f32.gmra.mxu0 %v559
    %v1194 = vpop.f32.mrf.mxu0
    %v1195 = vadd.f32 %v1103, %v1194
    %1196 = vmatmul.f32.gmra.mxu0 %v562
    %v1197 = vpop.f32.mrf.mxu0
    %v1198 = vadd.f32 %v1106, %v1197
    %1199 = vmatmul.f32.gmra.mxu0 %v565
    %v1200 = vpop.f32.mrf.mxu0
    %v1201 = vadd.f32 %v1109, %v1200
    %1202 = vmatmul.f32.gmra.mxu0 %v568
    %v1203 = vpop.f32.mrf.mxu0
    %1204 = vmatmul.f32.gmra.mxu0 %v571
    %v1205 = vpop.f32.mrf.mxu0
    %1206 = vmatmul.f32.gmra.mxu0 %v574
    %v1207 = vpop.f32.mrf.mxu0
    %1208 = vmatmul.f32.gmra.mxu0 %v577
    %v1209 = vpop.f32.mrf.mxu0
    %1210 = vmatmul.f32.gmra.mxu0 %v580
    %v1211 = vpop.f32.mrf.mxu0
    %1212 = vmatmul.f32.gmra.mxu0 %v583
    %v1213 = vpop.f32.mrf.mxu0
    %1214 = vmatmul.f32.gmra.mxu0 %v586
    %v1215 = vpop.f32.mrf.mxu0
    %1216 = vmatmul.f32.gmra.mxu0 %v589
    %v1217 = vpop.f32.mrf.mxu0
    %1218 = vmatmul.f32.gmra.mxu0 %v592
    %v1219 = vpop.f32.mrf.mxu0
    %1220 = vmatmul.f32.gmra.mxu0 %v595
    %v1221 = vpop.f32.mrf.mxu0
    %1222 = vmatmul.f32.gmra.mxu0 %v598
    %v1223 = vpop.f32.mrf.mxu0
    %1224 = vmatmul.f32.gmra.mxu0 %v601
    %v1225 = vpop.f32.mrf.mxu0
    %1226 = vdwg.mxu0
    %v1227 = vmul.f32 %v303, %v303
    %v1228 = vmul.f32 %v304, %v304
    %v1229 = vmul.f32 %v305, %v305
    %v1230 = vmul.f32 %v306, %v306
    %v1231 = vmul.f32 %v307, %v307
    %v1232 = vmul.f32 %v308, %v308
    %v1233 = vmul.f32 %v309, %v309
    %v1234 = vmul.f32 %v310, %v310
    %v1235 = vmul.f32 %v311, %v311
    %v1236 = vmul.f32 %v312, %v312
    %v1237 = vmul.f32 %v313, %v313
    %v1238 = vmul.f32 %v314, %v314
    %v1239 = vmul.f32 %v315, %v315
    %v1240 = vmul.f32 %v316, %v316
    %v1241 = vmul.f32 %v317, %v317
    %v1242 = vmul.f32 %v318, %v318
    %v1243 = vmul.f32 %v319, %v319
    %v1244 = vmul.f32 %v320, %v320
    %v1245 = vmul.f32 %v321, %v321
    %v1246 = vmul.f32 %v322, %v322
    %v1247 = vmul.f32 %v323, %v323
    %v1248 = vmul.f32 %v324, %v324
    %v1249 = vmul.f32 %v325, %v325
    %v1250 = vmul.f32 %v326, %v326
    %1251 = vmatpush.msra.mxu0 %v1242
    %1252 = vmatpush.msra.mxu0 %v1241
    %1253 = vmatpush.msra.mxu0 %v1240
    %1254 = vmatpush.msra.mxu0 %v1239
    %1255 = vmatpush.msra.mxu0 %v1238
    %1256 = vmatpush.msra.mxu0 %v1237
    %1257 = vmatpush.msra.mxu0 %v1236
    %1258 = vmatpush.msra.mxu0 %v1235
    %1259 = vmatpush.msra.mxu0 %v1234
    %1260 = vmatpush.msra.mxu0 %v1233
    %1261 = vmatpush.msra.mxu0 %v1232
    %1262 = vmatpush.msra.mxu0 %v1231
    %1263 = vmatpush.msra.mxu0 %v1230
    %1264 = vmatpush.msra.mxu0 %v1229
    %1265 = vmatpush.msra.mxu0 %v1228
    %1266 = vmatpush.msra.mxu0 %v1227
    %1267 = vmatmul.f32.gmra.mxu0 %v327
    %v1268 = vpop.f32.mrf.mxu0
    %v1269 = vadd.f32 0.0, %v1268
    %1270 = vmatmul.f32.gmra.mxu0 %v329
    %v1271 = vpop.f32.mrf.mxu0
    %v1272 = vadd.f32 0.0, %v1271
    %1273 = vmatmul.f32.gmra.mxu0 %v331
    %v1274 = vpop.f32.mrf.mxu0
    %v1275 = vadd.f32 0.0, %v1274
    %1276 = vmatmul.f32.gmra.mxu0 %v333
    %v1277 = vpop.f32.mrf.mxu0
    %v1278 = vadd.f32 0.0, %v1277
    %1279 = vmatmul.f32.gmra.mxu0 %v335
    %v1280 = vpop.f32.mrf.mxu0
    %v1281 = vadd.f32 0.0, %v1280
    %1282 = vmatmul.f32.gmra.mxu0 %v337
    %v1283 = vpop.f32.mrf.mxu0
    %v1284 = vadd.f32 0.0, %v1283
    %1285 = vmatmul.f32.gmra.mxu0 %v339
    %v1286 = vpop.f32.mrf.mxu0
    %v1287 = vadd.f32 0.0, %v1286
    %1288 = vmatmul.f32.gmra.mxu0 %v341
    %v1289 = vpop.f32.mrf.mxu0
    %v1290 = vadd.f32 0.0, %v1289
    %1291 = vmatmul.f32.gmra.mxu0 %v343
    %v1292 = vpop.f32.mrf.mxu0
    %v1293 = vadd.f32 0.0, %v1292
    %1294 = vmatmul.f32.gmra.mxu0 %v345
    %v1295 = vpop.f32.mrf.mxu0
    %v1296 = vadd.f32 0.0, %v1295
    %1297 = vmatmul.f32.gmra.mxu0 %v347
    %v1298 = vpop.f32.mrf.mxu0
    %v1299 = vadd.f32 0.0, %v1298
    %1300 = vmatmul.f32.gmra.mxu0 %v349
    %v1301 = vpop.f32.mrf.mxu0
    %v1302 = vadd.f32 0.0, %v1301
    %1303 = vmatmul.f32.gmra.mxu0 %v351
    %v1304 = vpop.f32.mrf.mxu0
    %v1305 = vadd.f32 0.0, %v1304
    %1306 = vmatmul.f32.gmra.mxu0 %v353
    %v1307 = vpop.f32.mrf.mxu0
    %v1308 = vadd.f32 0.0, %v1307
    %1309 = vmatmul.f32.gmra.mxu0 %v355
    %v1310 = vpop.f32.mrf.mxu0
    %v1311 = vadd.f32 0.0, %v1310
    %1312 = vmatmul.f32.gmra.mxu0 %v357
    %v1313 = vpop.f32.mrf.mxu0
    %v1314 = vadd.f32 0.0, %v1313
    %1315 = vmatmul.f32.gmra.mxu0 %v359
    %v1316 = vpop.f32.mrf.mxu0
    %v1317 = vadd.f32 0.0, %v1316
    %1318 = vmatmul.f32.gmra.mxu0 %v361
    %v1319 = vpop.f32.mrf.mxu0
    %1320 = vmatmul.f32.gmra.mxu0 %v363
    %v1321 = vpop.f32.mrf.mxu0
    %1322 = vmatmul.f32.gmra.mxu0 %v365
    %v1323 = vpop.f32.mrf.mxu0
    %1324 = vmatmul.f32.gmra.mxu0 %v367
    %v1325 = vpop.f32.mrf.mxu0
    %1326 = vmatmul.f32.gmra.mxu0 %v369
    %v1327 = vpop.f32.mrf.mxu0
    %1328 = vmatmul.f32.gmra.mxu0 %v371
    %v1329 = vpop.f32.mrf.mxu0
    %1330 = vmatmul.f32.gmra.mxu0 %v373
    %v1331 = vpop.f32.mrf.mxu0
    %1332 = vmatmul.f32.gmra.mxu0 %v375
    %v1333 = vpop.f32.mrf.mxu0
    %1334 = vmatmul.f32.gmra.mxu0 %v377
    %v1335 = vpop.f32.mrf.mxu0
    %1336 = vmatmul.f32.gmra.mxu0 %v379
    %v1337 = vpop.f32.mrf.mxu0
    %1338 = vmatmul.f32.gmra.mxu0 %v381
    %v1339 = vpop.f32.mrf.mxu0
    %1340 = vmatmul.f32.gmra.mxu0 %v383
    %v1341 = vpop.f32.mrf.mxu0
    %1342 = vdwg.mxu0
    %1343 = vmatpush.msra.mxu0 0.0
    %1344 = vmatpush.msra.mxu0 0.0
    %1345 = vmatpush.msra.mxu0 0.0
    %1346 = vmatpush.msra.mxu0 0.0
    %1347 = vmatpush.msra.mxu0 0.0
    %1348 = vmatpush.msra.mxu0 0.0
    %1349 = vmatpush.msra.mxu0 0.0
    %1350 = vmatpush.msra.mxu0 0.0
    %1351 = vmatpush.msra.mxu0 %v1250
    %1352 = vmatpush.msra.mxu0 %v1249
    %1353 = vmatpush.msra.mxu0 %v1248
    %1354 = vmatpush.msra.mxu0 %v1247
    %1355 = vmatpush.msra.mxu0 %v1246
    %1356 = vmatpush.msra.mxu0 %v1245
    %1357 = vmatpush.msra.mxu0 %v1244
    %1358 = vmatpush.msra.mxu0 %v1243
    %1359 = vmatmul.f32.gmra.mxu0 %v517
    %v1360 = vpop.f32.mrf.mxu0
    %v1361 = vadd.f32 %v1269, %v1360
    %1362 = vmatmul.f32.gmra.mxu0 %v520
    %v1363 = vpop.f32.mrf.mxu0
    %v1364 = vadd.f32 %v1272, %v1363
    %1365 = vmatmul.f32.gmra.mxu0 %v523
    %v1366 = vpop.f32.mrf.mxu0
    %v1367 = vadd.f32 %v1275, %v1366
    %1368 = vmatmul.f32.gmra.mxu0 %v526
    %v1369 = vpop.f32.mrf.mxu0
    %v1370 = vadd.f32 %v1278, %v1369
    %1371 = vmatmul.f32.gmra.mxu0 %v529
    %v1372 = vpop.f32.mrf.mxu0
    %v1373 = vadd.f32 %v1281, %v1372
    %1374 = vmatmul.f32.gmra.mxu0 %v532
    %v1375 = vpop.f32.mrf.mxu0
    %v1376 = vadd.f32 %v1284, %v1375
    %1377 = vmatmul.f32.gmra.mxu0 %v535
    %v1378 = vpop.f32.mrf.mxu0
    %v1379 = vadd.f32 %v1287, %v1378
    %1380 = vmatmul.f32.gmra.mxu0 %v538
    %v1381 = vpop.f32.mrf.mxu0
    %v1382 = vadd.f32 %v1290, %v1381
    %1383 = vmatmul.f32.gmra.mxu0 %v541
    %v1384 = vpop.f32.mrf.mxu0
    %v1385 = vadd.f32 %v1293, %v1384
    %1386 = vmatmul.f32.gmra.mxu0 %v544
    %v1387 = vpop.f32.mrf.mxu0
    %v1388 = vadd.f32 %v1296, %v1387
    %1389 = vmatmul.f32.gmra.mxu0 %v547
    %v1390 = vpop.f32.mrf.mxu0
    %v1391 = vadd.f32 %v1299, %v1390
    %1392 = vmatmul.f32.gmra.mxu0 %v550
    %v1393 = vpop.f32.mrf.mxu0
    %v1394 = vadd.f32 %v1302, %v1393
    %1395 = vmatmul.f32.gmra.mxu0 %v553
    %v1396 = vpop.f32.mrf.mxu0
    %v1397 = vadd.f32 %v1305, %v1396
    %1398 = vmatmul.f32.gmra.mxu0 %v556
    %v1399 = vpop.f32.mrf.mxu0
    %v1400 = vadd.f32 %v1308, %v1399
    %1401 = vmatmul.f32.gmra.mxu0 %v559
    %v1402 = vpop.f32.mrf.mxu0
    %v1403 = vadd.f32 %v1311, %v1402
    %1404 = vmatmul.f32.gmra.mxu0 %v562
    %v1405 = vpop.f32.mrf.mxu0
    %v1406 = vadd.f32 %v1314, %v1405
    %1407 = vmatmul.f32.gmra.mxu0 %v565
    %v1408 = vpop.f32.mrf.mxu0
    %v1409 = vadd.f32 %v1317, %v1408
    %1410 = vmatmul.f32.gmra.mxu0 %v568
    %v1411 = vpop.f32.mrf.mxu0
    %1412 = vmatmul.f32.gmra.mxu0 %v571
    %v1413 = vpop.f32.mrf.mxu0
    %1414 = vmatmul.f32.gmra.mxu0 %v574
    %v1415 = vpop.f32.mrf.mxu0
    %1416 = vmatmul.f32.gmra.mxu0 %v577
    %v1417 = vpop.f32.mrf.mxu0
    %1418 = vmatmul.f32.gmra.mxu0 %v580
    %v1419 = vpop.f32.mrf.mxu0
    %1420 = vmatmul.f32.gmra.mxu0 %v583
    %v1421 = vpop.f32.mrf.mxu0
    %1422 = vmatmul.f32.gmra.mxu0 %v586
    %v1423 = vpop.f32.mrf.mxu0
    %1424 = vmatmul.f32.gmra.mxu0 %v589
    %v1425 = vpop.f32.mrf.mxu0
    %1426 = vmatmul.f32.gmra.mxu0 %v592
    %v1427 = vpop.f32.mrf.mxu0
    %1428 = vmatmul.f32.gmra.mxu0 %v595
    %v1429 = vpop.f32.mrf.mxu0
    %1430 = vmatmul.f32.gmra.mxu0 %v598
    %v1431 = vpop.f32.mrf.mxu0
    %1432 = vmatmul.f32.gmra.mxu0 %v601
    %v1433 = vpop.f32.mrf.mxu0
    %1434 = vdwg.mxu0
    %v1435 = vmul.f32 %v279, %v303
    %v1436 = vmul.f32 %v280, %v304
    %v1437 = vmul.f32 %v281, %v305
    %v1438 = vmul.f32 %v282, %v306
    %v1439 = vmul.f32 %v283, %v307
    %v1440 = vmul.f32 %v284, %v308
    %v1441 = vmul.f32 %v285, %v309
    %v1442 = vmul.f32 %v286, %v310
    %v1443 = vmul.f32 %v287, %v311
    %v1444 = vmul.f32 %v288, %v312
    %v1445 = vmul.f32 %v289, %v313
    %v1446 = vmul.f32 %v290, %v314
    %v1447 = vmul.f32 %v291, %v315
    %v1448 = vmul.f32 %v292, %v316
    %v1449 = vmul.f32 %v293, %v317
    %v1450 = vmul.f32 %v294, %v318
    %v1451 = vmul.f32 %v295, %v319
    %v1452 = vmul.f32 %v296, %v320
    %v1453 = vmul.f32 %v297, %v321
    %v1454 = vmul.f32 %v298, %v322
    %v1455 = vmul.f32 %v299, %v323
    %v1456 = vmul.f32 %v300, %v324
    %v1457 = vmul.f32 %v301, %v325
    %v1458 = vmul.f32 %v302, %v326
    %1459 = vmatpush.msra.mxu0 %v1450
    %1460 = vmatpush.msra.mxu0 %v1449
    %1461 = vmatpush.msra.mxu0 %v1448
    %1462 = vmatpush.msra.mxu0 %v1447
    %1463 = vmatpush.msra.mxu0 %v1446
    %1464 = vmatpush.msra.mxu0 %v1445
    %1465 = vmatpush.msra.mxu0 %v1444
    %1466 = vmatpush.msra.mxu0 %v1443
    %1467 = vmatpush.msra.mxu0 %v1442
    %1468 = vmatpush.msra.mxu0 %v1441
    %1469 = vmatpush.msra.mxu0 %v1440
    %1470 = vmatpush.msra.mxu0 %v1439
    %1471 = vmatpush.msra.mxu0 %v1438
    %1472 = vmatpush.msra.mxu0 %v1437
    %1473 = vmatpush.msra.mxu0 %v1436
    %1474 = vmatpush.msra.mxu0 %v1435
    %1475 = vmatmul.f32.gmra.mxu0 %v327
    %v1476 = vpop.f32.mrf.mxu0
    %v1477 = vadd.f32 0.0, %v1476
    %1478 = vmatmul.f32.gmra.mxu0 %v329
    %v1479 = vpop.f32.mrf.mxu0
    %v1480 = vadd.f32 0.0, %v1479
    %1481 = vmatmul.f32.gmra.mxu0 %v331
    %v1482 = vpop.f32.mrf.mxu0
    %v1483 = vadd.f32 0.0, %v1482
    %1484 = vmatmul.f32.gmra.mxu0 %v333
    %v1485 = vpop.f32.mrf.mxu0
    %v1486 = vadd.f32 0.0, %v1485
    %1487 = vmatmul.f32.gmra.mxu0 %v335
    %v1488 = vpop.f32.mrf.mxu0
    %v1489 = vadd.f32 0.0, %v1488
    %1490 = vmatmul.f32.gmra.mxu0 %v337
    %v1491 = vpop.f32.mrf.mxu0
    %v1492 = vadd.f32 0.0, %v1491
    %1493 = vmatmul.f32.gmra.mxu0 %v339
    %v1494 = vpop.f32.mrf.mxu0
    %v1495 = vadd.f32 0.0, %v1494
    %1496 = vmatmul.f32.gmra.mxu0 %v341
    %v1497 = vpop.f32.mrf.mxu0
    %v1498 = vadd.f32 0.0, %v1497
    %1499 = vmatmul.f32.gmra.mxu0 %v343
    %v1500 = vpop.f32.mrf.mxu0
    %v1501 = vadd.f32 0.0, %v1500
    %1502 = vmatmul.f32.gmra.mxu0 %v345
    %v1503 = vpop.f32.mrf.mxu0
    %v1504 = vadd.f32 0.0, %v1503
    %1505 = vmatmul.f32.gmra.mxu0 %v347
    %v1506 = vpop.f32.mrf.mxu0
    %v1507 = vadd.f32 0.0, %v1506
    %1508 = vmatmul.f32.gmra.mxu0 %v349
    %v1509 = vpop.f32.mrf.mxu0
    %v1510 = vadd.f32 0.0, %v1509
    %1511 = vmatmul.f32.gmra.mxu0 %v351
    %v1512 = vpop.f32.mrf.mxu0
    %v1513 = vadd.f32 0.0, %v1512
    %1514 = vmatmul.f32.gmra.mxu0 %v353
    %v1515 = vpop.f32.mrf.mxu0
    %v1516 = vadd.f32 0.0, %v1515
    %1517 = vmatmul.f32.gmra.mxu0 %v355
    %v1518 = vpop.f32.mrf.mxu0
    %v1519 = vadd.f32 0.0, %v1518
    %1520 = vmatmul.f32.gmra.mxu0 %v357
    %v1521 = vpop.f32.mrf.mxu0
    %v1522 = vadd.f32 0.0, %v1521
    %1523 = vmatmul.f32.gmra.mxu0 %v359
    %v1524 = vpop.f32.mrf.mxu0
    %v1525 = vadd.f32 0.0, %v1524
    %1526 = vmatmul.f32.gmra.mxu0 %v361
    %v1527 = vpop.f32.mrf.mxu0
    %1528 = vmatmul.f32.gmra.mxu0 %v363
    %v1529 = vpop.f32.mrf.mxu0
    %1530 = vmatmul.f32.gmra.mxu0 %v365
    %v1531 = vpop.f32.mrf.mxu0
    %1532 = vmatmul.f32.gmra.mxu0 %v367
    %v1533 = vpop.f32.mrf.mxu0
    %1534 = vmatmul.f32.gmra.mxu0 %v369
    %v1535 = vpop.f32.mrf.mxu0
    %1536 = vmatmul.f32.gmra.mxu0 %v371
    %v1537 = vpop.f32.mrf.mxu0
    %1538 = vmatmul.f32.gmra.mxu0 %v373
    %v1539 = vpop.f32.mrf.mxu0
    %1540 = vmatmul.f32.gmra.mxu0 %v375
    %v1541 = vpop.f32.mrf.mxu0
    %1542 = vmatmul.f32.gmra.mxu0 %v377
    %v1543 = vpop.f32.mrf.mxu0
    %1544 = vmatmul.f32.gmra.mxu0 %v379
    %v1545 = vpop.f32.mrf.mxu0
    %1546 = vmatmul.f32.gmra.mxu0 %v381
    %v1547 = vpop.f32.mrf.mxu0
    %1548 = vmatmul.f32.gmra.mxu0 %v383
    %v1549 = vpop.f32.mrf.mxu0
    %1550 = vdwg.mxu0
    %1551 = vmatpush.msra.mxu0 0.0
    %1552 = vmatpush.msra.mxu0 0.0
    %1553 = vmatpush.msra.mxu0 0.0
    %1554 = vmatpush.msra.mxu0 0.0
    %1555 = vmatpush.msra.mxu0 0.0
    %1556 = vmatpush.msra.mxu0 0.0
    %1557 = vmatpush.msra.mxu0 0.0
    %1558 = vmatpush.msra.mxu0 0.0
    %1559 = vmatpush.msra.mxu0 %v1458
    %1560 = vmatpush.msra.mxu0 %v1457
    %1561 = vmatpush.msra.mxu0 %v1456
    %1562 = vmatpush.msra.mxu0 %v1455
    %1563 = vmatpush.msra.mxu0 %v1454
    %1564 = vmatpush.msra.mxu0 %v1453
    %1565 = vmatpush.msra.mxu0 %v1452
    %1566 = vmatpush.msra.mxu0 %v1451
    %1567 = vmatmul.f32.gmra.mxu0 %v517
    %v1568 = vpop.f32.mrf.mxu0
    %v1569 = vadd.f32 %v1477, %v1568
    %1570 = vmatmul.f32.gmra.mxu0 %v520
    %v1571 = vpop.f32.mrf.mxu0
    %v1572 = vadd.f32 %v1480, %v1571
    %1573 = vmatmul.f32.gmra.mxu0 %v523
    %v1574 = vpop.f32.mrf.mxu0
    %v1575 = vadd.f32 %v1483, %v1574
    %1576 = vmatmul.f32.gmra.mxu0 %v526
    %v1577 = vpop.f32.mrf.mxu0
    %v1578 = vadd.f32 %v1486, %v1577
    %1579 = vmatmul.f32.gmra.mxu0 %v529
    %v1580 = vpop.f32.mrf.mxu0
    %v1581 = vadd.f32 %v1489, %v1580
    %1582 = vmatmul.f32.gmra.mxu0 %v532
    %v1583 = vpop.f32.mrf.mxu0
    %v1584 = vadd.f32 %v1492, %v1583
    %1585 = vmatmul.f32.gmra.mxu0 %v535
    %v1586 = vpop.f32.mrf.mxu0
    %v1587 = vadd.f32 %v1495, %v1586
    %1588 = vmatmul.f32.gmra.mxu0 %v538
    %v1589 = vpop.f32.mrf.mxu0
    %v1590 = vadd.f32 %v1498, %v1589
    %1591 = vmatmul.f32.gmra.mxu0 %v541
    %v1592 = vpop.f32.mrf.mxu0
    %v1593 = vadd.f32 %v1501, %v1592
    %1594 = vmatmul.f32.gmra.mxu0 %v544
    %v1595 = vpop.f32.mrf.mxu0
    %v1596 = vadd.f32 %v1504, %v1595
    %1597 = vmatmul.f32.gmra.mxu0 %v547
    %v1598 = vpop.f32.mrf.mxu0
    %v1599 = vadd.f32 %v1507, %v1598
    %1600 = vmatmul.f32.gmra.mxu0 %v550
    %v1601 = vpop.f32.mrf.mxu0
    %v1602 = vadd.f32 %v1510, %v1601
    %1603 = vmatmul.f32.gmra.mxu0 %v553
    %v1604 = vpop.f32.mrf.mxu0
    %v1605 = vadd.f32 %v1513, %v1604
    %1606 = vmatmul.f32.gmra.mxu0 %v556
    %v1607 = vpop.f32.mrf.mxu0
    %v1608 = vadd.f32 %v1516, %v1607
    %1609 = vmatmul.f32.gmra.mxu0 %v559
    %v1610 = vpop.f32.mrf.mxu0
    %v1611 = vadd.f32 %v1519, %v1610
    %1612 = vmatmul.f32.gmra.mxu0 %v562
    %v1613 = vpop.f32.mrf.mxu0
    %v1614 = vadd.f32 %v1522, %v1613
    %1615 = vmatmul.f32.gmra.mxu0 %v565
    %v1616 = vpop.f32.mrf.mxu0
    %v1617 = vadd.f32 %v1525, %v1616
    %1618 = vmatmul.f32.gmra.mxu0 %v568
    %v1619 = vpop.f32.mrf.mxu0
    %1620 = vmatmul.f32.gmra.mxu0 %v571
    %v1621 = vpop.f32.mrf.mxu0
    %1622 = vmatmul.f32.gmra.mxu0 %v574
    %v1623 = vpop.f32.mrf.mxu0
    %1624 = vmatmul.f32.gmra.mxu0 %v577
    %v1625 = vpop.f32.mrf.mxu0
    %1626 = vmatmul.f32.gmra.mxu0 %v580
    %v1627 = vpop.f32.mrf.mxu0
    %1628 = vmatmul.f32.gmra.mxu0 %v583
    %v1629 = vpop.f32.mrf.mxu0
    %1630 = vmatmul.f32.gmra.mxu0 %v586
    %v1631 = vpop.f32.mrf.mxu0
    %1632 = vmatmul.f32.gmra.mxu0 %v589
    %v1633 = vpop.f32.mrf.mxu0
    %1634 = vmatmul.f32.gmra.mxu0 %v592
    %v1635 = vpop.f32.mrf.mxu0
    %1636 = vmatmul.f32.gmra.mxu0 %v595
    %v1637 = vpop.f32.mrf.mxu0
    %1638 = vmatmul.f32.gmra.mxu0 %v598
    %v1639 = vpop.f32.mrf.mxu0
    %1640 = vmatmul.f32.gmra.mxu0 %v601
    %v1641 = vpop.f32.mrf.mxu0
    %1642 = vdwg.mxu0
    %v1644 = vsel %vm393, %v725, 0
    %v1647 = vsel %vm393, %v728, 0
    %v1650 = vsel %vm393, %v731, 0
    %v1653 = vsel %vm393, %v734, 0
    %v1656 = vsel %vm393, %v737, 0
    %v1659 = vsel %vm393, %v740, 0
    %v1662 = vsel %vm393, %v743, 0
    %v1665 = vsel %vm393, %v746, 0
    %v1668 = vsel %vm393, %v749, 0
    %v1671 = vsel %vm393, %v752, 0
    %v1674 = vsel %vm393, %v755, 0
    %v1677 = vsel %vm393, %v758, 0
    %v1680 = vsel %vm393, %v761, 0
    %v1683 = vsel %vm393, %v764, 0
    %v1686 = vsel %vm393, %v767, 0
    %v1689 = vsel %vm393, %v770, 0
    %v1692 = vsel %vm393, %v773, 0
    %1694 = vmatpush.msra.mxu0 0.0
    %1695 = vmatpush.msra.mxu0 0.0
    %1696 = vmatpush.msra.mxu0 0.0
    %1697 = vmatpush.msra.mxu0 0.0
    %1698 = vmatpush.msra.mxu0 0.0
    %1699 = vmatpush.msra.mxu0 0.0
    %1700 = vmatpush.msra.mxu0 0.0
    %1701 = vmatpush.msra.mxu0 0.0
    %1702 = vmatpush.msra.mxu0 0.0
    %1703 = vmatpush.msra.mxu0 0.0
    %1704 = vmatpush.msra.mxu0 0.0
    %1705 = vmatpush.msra.mxu0 0.0
    %1706 = vmatpush.msra.mxu0 %v388
    %1707 = vmatpush.msra.mxu0 %v387
    %1708 = vmatpush.msra.mxu0 %v386
    %1709 = vmatpush.msra.mxu0 %v385
    %1710 = vmatmul.f32.gmra.mxu0 %v1644
    %v1711 = vpop.f32.mrf.mxu0
    %v1712 = vadd.f32 0.0, %v1711
    %1713 = vmatmul.f32.gmra.mxu0 %v1647
    %v1714 = vpop.f32.mrf.mxu0
    %v1715 = vadd.f32 0.0, %v1714
    %1716 = vmatmul.f32.gmra.mxu0 %v1650
    %v1717 = vpop.f32.mrf.mxu0
    %v1718 = vadd.f32 0.0, %v1717
    %1719 = vmatmul.f32.gmra.mxu0 %v1653
    %v1720 = vpop.f32.mrf.mxu0
    %v1721 = vadd.f32 0.0, %v1720
    %1722 = vmatmul.f32.gmra.mxu0 %v1656
    %v1723 = vpop.f32.mrf.mxu0
    %v1724 = vadd.f32 0.0, %v1723
    %1725 = vmatmul.f32.gmra.mxu0 %v1659
    %v1726 = vpop.f32.mrf.mxu0
    %v1727 = vadd.f32 0.0, %v1726
    %1728 = vmatmul.f32.gmra.mxu0 %v1662
    %v1729 = vpop.f32.mrf.mxu0
    %v1730 = vadd.f32 0.0, %v1729
    %1731 = vmatmul.f32.gmra.mxu0 %v1665
    %v1732 = vpop.f32.mrf.mxu0
    %v1733 = vadd.f32 0.0, %v1732
    %1734 = vmatmul.f32.gmra.mxu0 %v1668
    %v1735 = vpop.f32.mrf.mxu0
    %v1736 = vadd.f32 0.0, %v1735
    %1737 = vmatmul.f32.gmra.mxu0 %v1671
    %v1738 = vpop.f32.mrf.mxu0
    %v1739 = vadd.f32 0.0, %v1738
    %1740 = vmatmul.f32.gmra.mxu0 %v1674
    %v1741 = vpop.f32.mrf.mxu0
    %v1742 = vadd.f32 0.0, %v1741
    %1743 = vmatmul.f32.gmra.mxu0 %v1677
    %v1744 = vpop.f32.mrf.mxu0
    %v1745 = vadd.f32 0.0, %v1744
    %1746 = vmatmul.f32.gmra.mxu0 %v1680
    %v1747 = vpop.f32.mrf.mxu0
    %v1748 = vadd.f32 0.0, %v1747
    %1749 = vmatmul.f32.gmra.mxu0 %v1683
    %v1750 = vpop.f32.mrf.mxu0
    %v1751 = vadd.f32 0.0, %v1750
    %1752 = vmatmul.f32.gmra.mxu0 %v1686
    %v1753 = vpop.f32.mrf.mxu0
    %v1754 = vadd.f32 0.0, %v1753
    %1755 = vmatmul.f32.gmra.mxu0 %v1689
    %v1756 = vpop.f32.mrf.mxu0
    %v1757 = vadd.f32 0.0, %v1756
    %1758 = vmatmul.f32.gmra.mxu0 %v1692
    %v1759 = vpop.f32.mrf.mxu0
    %v1760 = vadd.f32 0.0, %v1759
    %1761 = vdwg.mxu0
    %v1763 = vsel %vm393, %v933, 0
    %v1766 = vsel %vm393, %v936, 0
    %v1769 = vsel %vm393, %v939, 0
    %v1772 = vsel %vm393, %v942, 0
    %v1775 = vsel %vm393, %v945, 0
    %v1778 = vsel %vm393, %v948, 0
    %v1781 = vsel %vm393, %v951, 0
    %v1784 = vsel %vm393, %v954, 0
    %v1787 = vsel %vm393, %v957, 0
    %v1790 = vsel %vm393, %v960, 0
    %v1793 = vsel %vm393, %v963, 0
    %v1796 = vsel %vm393, %v966, 0
    %v1799 = vsel %vm393, %v969, 0
    %v1802 = vsel %vm393, %v972, 0
    %v1805 = vsel %vm393, %v975, 0
    %v1808 = vsel %vm393, %v978, 0
    %v1811 = vsel %vm393, %v981, 0
    %1813 = vmatpush.msra.mxu0 0.0
    %1814 = vmatpush.msra.mxu0 0.0
    %1815 = vmatpush.msra.mxu0 0.0
    %1816 = vmatpush.msra.mxu0 0.0
    %1817 = vmatpush.msra.mxu0 0.0
    %1818 = vmatpush.msra.mxu0 0.0
    %1819 = vmatpush.msra.mxu0 0.0
    %1820 = vmatpush.msra.mxu0 0.0
    %1821 = vmatpush.msra.mxu0 0.0
    %1822 = vmatpush.msra.mxu0 0.0
    %1823 = vmatpush.msra.mxu0 0.0
    %1824 = vmatpush.msra.mxu0 0.0
    %1825 = vmatpush.msra.mxu0 %v388
    %1826 = vmatpush.msra.mxu0 %v387
    %1827 = vmatpush.msra.mxu0 %v386
    %1828 = vmatpush.msra.mxu0 %v385
    %1829 = vmatmul.f32.gmra.mxu0 %v1763
    %v1830 = vpop.f32.mrf.mxu0
    %v1831 = vadd.f32 0.0, %v1830
    %1832 = vmatmul.f32.gmra.mxu0 %v1766
    %v1833 = vpop.f32.mrf.mxu0
    %v1834 = vadd.f32 0.0, %v1833
    %1835 = vmatmul.f32.gmra.mxu0 %v1769
    %v1836 = vpop.f32.mrf.mxu0
    %v1837 = vadd.f32 0.0, %v1836
    %1838 = vmatmul.f32.gmra.mxu0 %v1772
    %v1839 = vpop.f32.mrf.mxu0
    %v1840 = vadd.f32 0.0, %v1839
    %1841 = vmatmul.f32.gmra.mxu0 %v1775
    %v1842 = vpop.f32.mrf.mxu0
    %v1843 = vadd.f32 0.0, %v1842
    %1844 = vmatmul.f32.gmra.mxu0 %v1778
    %v1845 = vpop.f32.mrf.mxu0
    %v1846 = vadd.f32 0.0, %v1845
    %1847 = vmatmul.f32.gmra.mxu0 %v1781
    %v1848 = vpop.f32.mrf.mxu0
    %v1849 = vadd.f32 0.0, %v1848
    %1850 = vmatmul.f32.gmra.mxu0 %v1784
    %v1851 = vpop.f32.mrf.mxu0
    %v1852 = vadd.f32 0.0, %v1851
    %1853 = vmatmul.f32.gmra.mxu0 %v1787
    %v1854 = vpop.f32.mrf.mxu0
    %v1855 = vadd.f32 0.0, %v1854
    %1856 = vmatmul.f32.gmra.mxu0 %v1790
    %v1857 = vpop.f32.mrf.mxu0
    %v1858 = vadd.f32 0.0, %v1857
    %1859 = vmatmul.f32.gmra.mxu0 %v1793
    %v1860 = vpop.f32.mrf.mxu0
    %v1861 = vadd.f32 0.0, %v1860
    %1862 = vmatmul.f32.gmra.mxu0 %v1796
    %v1863 = vpop.f32.mrf.mxu0
    %v1864 = vadd.f32 0.0, %v1863
    %1865 = vmatmul.f32.gmra.mxu0 %v1799
    %v1866 = vpop.f32.mrf.mxu0
    %v1867 = vadd.f32 0.0, %v1866
    %1868 = vmatmul.f32.gmra.mxu0 %v1802
    %v1869 = vpop.f32.mrf.mxu0
    %v1870 = vadd.f32 0.0, %v1869
    %1871 = vmatmul.f32.gmra.mxu0 %v1805
    %v1872 = vpop.f32.mrf.mxu0
    %v1873 = vadd.f32 0.0, %v1872
    %1874 = vmatmul.f32.gmra.mxu0 %v1808
    %v1875 = vpop.f32.mrf.mxu0
    %v1876 = vadd.f32 0.0, %v1875
    %1877 = vmatmul.f32.gmra.mxu0 %v1811
    %v1878 = vpop.f32.mrf.mxu0
    %v1879 = vadd.f32 0.0, %v1878
    %1880 = vdwg.mxu0
    %v1882 = vsel %vm393, %v1153, 0
    %v1885 = vsel %vm393, %v1156, 0
    %v1888 = vsel %vm393, %v1159, 0
    %v1891 = vsel %vm393, %v1162, 0
    %v1894 = vsel %vm393, %v1165, 0
    %v1897 = vsel %vm393, %v1168, 0
    %v1900 = vsel %vm393, %v1171, 0
    %v1903 = vsel %vm393, %v1174, 0
    %v1906 = vsel %vm393, %v1177, 0
    %v1909 = vsel %vm393, %v1180, 0
    %v1912 = vsel %vm393, %v1183, 0
    %v1915 = vsel %vm393, %v1186, 0
    %v1918 = vsel %vm393, %v1189, 0
    %v1921 = vsel %vm393, %v1192, 0
    %v1924 = vsel %vm393, %v1195, 0
    %v1927 = vsel %vm393, %v1198, 0
    %v1930 = vsel %vm393, %v1201, 0
    %1932 = vmatpush.msra.mxu0 0.0
    %1933 = vmatpush.msra.mxu0 0.0
    %1934 = vmatpush.msra.mxu0 0.0
    %1935 = vmatpush.msra.mxu0 0.0
    %1936 = vmatpush.msra.mxu0 0.0
    %1937 = vmatpush.msra.mxu0 0.0
    %1938 = vmatpush.msra.mxu0 0.0
    %1939 = vmatpush.msra.mxu0 0.0
    %1940 = vmatpush.msra.mxu0 0.0
    %1941 = vmatpush.msra.mxu0 0.0
    %1942 = vmatpush.msra.mxu0 0.0
    %1943 = vmatpush.msra.mxu0 0.0
    %1944 = vmatpush.msra.mxu0 %v388
    %1945 = vmatpush.msra.mxu0 %v387
    %1946 = vmatpush.msra.mxu0 %v386
    %1947 = vmatpush.msra.mxu0 %v385
    %1948 = vmatmul.f32.gmra.mxu0 %v1882
    %v1949 = vpop.f32.mrf.mxu0
    %v1950 = vadd.f32 0.0, %v1949
    %1951 = vmatmul.f32.gmra.mxu0 %v1885
    %v1952 = vpop.f32.mrf.mxu0
    %v1953 = vadd.f32 0.0, %v1952
    %1954 = vmatmul.f32.gmra.mxu0 %v1888
    %v1955 = vpop.f32.mrf.mxu0
    %v1956 = vadd.f32 0.0, %v1955
    %1957 = vmatmul.f32.gmra.mxu0 %v1891
    %v1958 = vpop.f32.mrf.mxu0
    %v1959 = vadd.f32 0.0, %v1958
    %1960 = vmatmul.f32.gmra.mxu0 %v1894
    %v1961 = vpop.f32.mrf.mxu0
    %v1962 = vadd.f32 0.0, %v1961
    %1963 = vmatmul.f32.gmra.mxu0 %v1897
    %v1964 = vpop.f32.mrf.mxu0
    %v1965 = vadd.f32 0.0, %v1964
    %1966 = vmatmul.f32.gmra.mxu0 %v1900
    %v1967 = vpop.f32.mrf.mxu0
    %v1968 = vadd.f32 0.0, %v1967
    %1969 = vmatmul.f32.gmra.mxu0 %v1903
    %v1970 = vpop.f32.mrf.mxu0
    %v1971 = vadd.f32 0.0, %v1970
    %1972 = vmatmul.f32.gmra.mxu0 %v1906
    %v1973 = vpop.f32.mrf.mxu0
    %v1974 = vadd.f32 0.0, %v1973
    %1975 = vmatmul.f32.gmra.mxu0 %v1909
    %v1976 = vpop.f32.mrf.mxu0
    %v1977 = vadd.f32 0.0, %v1976
    %1978 = vmatmul.f32.gmra.mxu0 %v1912
    %v1979 = vpop.f32.mrf.mxu0
    %v1980 = vadd.f32 0.0, %v1979
    %1981 = vmatmul.f32.gmra.mxu0 %v1915
    %v1982 = vpop.f32.mrf.mxu0
    %v1983 = vadd.f32 0.0, %v1982
    %1984 = vmatmul.f32.gmra.mxu0 %v1918
    %v1985 = vpop.f32.mrf.mxu0
    %v1986 = vadd.f32 0.0, %v1985
    %1987 = vmatmul.f32.gmra.mxu0 %v1921
    %v1988 = vpop.f32.mrf.mxu0
    %v1989 = vadd.f32 0.0, %v1988
    %1990 = vmatmul.f32.gmra.mxu0 %v1924
    %v1991 = vpop.f32.mrf.mxu0
    %v1992 = vadd.f32 0.0, %v1991
    %1993 = vmatmul.f32.gmra.mxu0 %v1927
    %v1994 = vpop.f32.mrf.mxu0
    %v1995 = vadd.f32 0.0, %v1994
    %1996 = vmatmul.f32.gmra.mxu0 %v1930
    %v1997 = vpop.f32.mrf.mxu0
    %v1998 = vadd.f32 0.0, %v1997
    %1999 = vdwg.mxu0
    %v2001 = vsel %vm393, %v1361, 0
    %v2004 = vsel %vm393, %v1364, 0
    %v2007 = vsel %vm393, %v1367, 0
    %v2010 = vsel %vm393, %v1370, 0
    %v2013 = vsel %vm393, %v1373, 0
    %v2016 = vsel %vm393, %v1376, 0
    %v2019 = vsel %vm393, %v1379, 0
    %v2022 = vsel %vm393, %v1382, 0
    %v2025 = vsel %vm393, %v1385, 0
    %v2028 = vsel %vm393, %v1388, 0
    %v2031 = vsel %vm393, %v1391, 0
    %v2034 = vsel %vm393, %v1394, 0
    %v2037 = vsel %vm393, %v1397, 0
    %v2040 = vsel %vm393, %v1400, 0
    %v2043 = vsel %vm393, %v1403, 0
    %v2046 = vsel %vm393, %v1406, 0
    %v2049 = vsel %vm393, %v1409, 0
    %2051 = vmatpush.msra.mxu0 0.0
    %2052 = vmatpush.msra.mxu0 0.0
    %2053 = vmatpush.msra.mxu0 0.0
    %2054 = vmatpush.msra.mxu0 0.0
    %2055 = vmatpush.msra.mxu0 0.0
    %2056 = vmatpush.msra.mxu0 0.0
    %2057 = vmatpush.msra.mxu0 0.0
    %2058 = vmatpush.msra.mxu0 0.0
    %2059 = vmatpush.msra.mxu0 0.0
    %2060 = vmatpush.msra.mxu0 0.0
    %2061 = vmatpush.msra.mxu0 0.0
    %2062 = vmatpush.msra.mxu0 0.0
    %2063 = vmatpush.msra.mxu0 %v388
    %2064 = vmatpush.msra.mxu0 %v387
    %2065 = vmatpush.msra.mxu0 %v386
    %2066 = vmatpush.msra.mxu0 %v385
    %2067 = vmatmul.f32.gmra.mxu0 %v2001
    %v2068 = vpop.f32.mrf.mxu0
    %v2069 = vadd.f32 0.0, %v2068
    %2070 = vmatmul.f32.gmra.mxu0 %v2004
    %v2071 = vpop.f32.mrf.mxu0
    %v2072 = vadd.f32 0.0, %v2071
    %2073 = vmatmul.f32.gmra.mxu0 %v2007
    %v2074 = vpop.f32.mrf.mxu0
    %v2075 = vadd.f32 0.0, %v2074
    %2076 = vmatmul.f32.gmra.mxu0 %v2010
    %v2077 = vpop.f32.mrf.mxu0
    %v2078 = vadd.f32 0.0, %v2077
    %2079 = vmatmul.f32.gmra.mxu0 %v2013
    %v2080 = vpop.f32.mrf.mxu0
    %v2081 = vadd.f32 0.0, %v2080
    %2082 = vmatmul.f32.gmra.mxu0 %v2016
    %v2083 = vpop.f32.mrf.mxu0
    %v2084 = vadd.f32 0.0, %v2083
    %2085 = vmatmul.f32.gmra.mxu0 %v2019
    %v2086 = vpop.f32.mrf.mxu0
    %v2087 = vadd.f32 0.0, %v2086
    %2088 = vmatmul.f32.gmra.mxu0 %v2022
    %v2089 = vpop.f32.mrf.mxu0
    %v2090 = vadd.f32 0.0, %v2089
    %2091 = vmatmul.f32.gmra.mxu0 %v2025
    %v2092 = vpop.f32.mrf.mxu0
    %v2093 = vadd.f32 0.0, %v2092
    %2094 = vmatmul.f32.gmra.mxu0 %v2028
    %v2095 = vpop.f32.mrf.mxu0
    %v2096 = vadd.f32 0.0, %v2095
    %2097 = vmatmul.f32.gmra.mxu0 %v2031
    %v2098 = vpop.f32.mrf.mxu0
    %v2099 = vadd.f32 0.0, %v2098
    %2100 = vmatmul.f32.gmra.mxu0 %v2034
    %v2101 = vpop.f32.mrf.mxu0
    %v2102 = vadd.f32 0.0, %v2101
    %2103 = vmatmul.f32.gmra.mxu0 %v2037
    %v2104 = vpop.f32.mrf.mxu0
    %v2105 = vadd.f32 0.0, %v2104
    %2106 = vmatmul.f32.gmra.mxu0 %v2040
    %v2107 = vpop.f32.mrf.mxu0
    %v2108 = vadd.f32 0.0, %v2107
    %2109 = vmatmul.f32.gmra.mxu0 %v2043
    %v2110 = vpop.f32.mrf.mxu0
    %v2111 = vadd.f32 0.0, %v2110
    %2112 = vmatmul.f32.gmra.mxu0 %v2046
    %v2113 = vpop.f32.mrf.mxu0
    %v2114 = vadd.f32 0.0, %v2113
    %2115 = vmatmul.f32.gmra.mxu0 %v2049
    %v2116 = vpop.f32.mrf.mxu0
    %v2117 = vadd.f32 0.0, %v2116
    %2118 = vdwg.mxu0
    %v2120 = vsel %vm393, %v1569, 0
    %v2123 = vsel %vm393, %v1572, 0
    %v2126 = vsel %vm393, %v1575, 0
    %v2129 = vsel %vm393, %v1578, 0
    %v2132 = vsel %vm393, %v1581, 0
    %v2135 = vsel %vm393, %v1584, 0
    %v2138 = vsel %vm393, %v1587, 0
    %v2141 = vsel %vm393, %v1590, 0
    %v2144 = vsel %vm393, %v1593, 0
    %v2147 = vsel %vm393, %v1596, 0
    %v2150 = vsel %vm393, %v1599, 0
    %v2153 = vsel %vm393, %v1602, 0
    %v2156 = vsel %vm393, %v1605, 0
    %v2159 = vsel %vm393, %v1608, 0
    %v2162 = vsel %vm393, %v1611, 0
    %v2165 = vsel %vm393, %v1614, 0
    %v2168 = vsel %vm393, %v1617, 0
    %2170 = vmatpush.msra.mxu0 0.0
    %2171 = vmatpush.msra.mxu0 0.0
    %2172 = vmatpush.msra.mxu0 0.0
    %2173 = vmatpush.msra.mxu0 0.0
    %2174 = vmatpush.msra.mxu0 0.0
    %2175 = vmatpush.msra.mxu0 0.0
    %2176 = vmatpush.msra.mxu0 0.0
    %2177 = vmatpush.msra.mxu0 0.0
    %2178 = vmatpush.msra.mxu0 0.0
    %2179 = vmatpush.msra.mxu0 0.0
    %2180 = vmatpush.msra.mxu0 0.0
    %2181 = vmatpush.msra.mxu0 0.0
    %2182 = vmatpush.msra.mxu0 %v388
    %2183 = vmatpush.msra.mxu0 %v387
    %2184 = vmatpush.msra.mxu0 %v386
    %2185 = vmatpush.msra.mxu0 %v385
    %2186 = vmatmul.f32.gmra.mxu0 %v2120
    %v2187 = vpop.f32.mrf.mxu0
    %v2188 = vadd.f32 0.0, %v2187
    %2189 = vmatmul.f32.gmra.mxu0 %v2123
    %v2190 = vpop.f32.mrf.mxu0
    %v2191 = vadd.f32 0.0, %v2190
    %2192 = vmatmul.f32.gmra.mxu0 %v2126
    %v2193 = vpop.f32.mrf.mxu0
    %v2194 = vadd.f32 0.0, %v2193
    %2195 = vmatmul.f32.gmra.mxu0 %v2129
    %v2196 = vpop.f32.mrf.mxu0
    %v2197 = vadd.f32 0.0, %v2196
    %2198 = vmatmul.f32.gmra.mxu0 %v2132
    %v2199 = vpop.f32.mrf.mxu0
    %v2200 = vadd.f32 0.0, %v2199
    %2201 = vmatmul.f32.gmra.mxu0 %v2135
    %v2202 = vpop.f32.mrf.mxu0
    %v2203 = vadd.f32 0.0, %v2202
    %2204 = vmatmul.f32.gmra.mxu0 %v2138
    %v2205 = vpop.f32.mrf.mxu0
    %v2206 = vadd.f32 0.0, %v2205
    %2207 = vmatmul.f32.gmra.mxu0 %v2141
    %v2208 = vpop.f32.mrf.mxu0
    %v2209 = vadd.f32 0.0, %v2208
    %2210 = vmatmul.f32.gmra.mxu0 %v2144
    %v2211 = vpop.f32.mrf.mxu0
    %v2212 = vadd.f32 0.0, %v2211
    %2213 = vmatmul.f32.gmra.mxu0 %v2147
    %v2214 = vpop.f32.mrf.mxu0
    %v2215 = vadd.f32 0.0, %v2214
    %2216 = vmatmul.f32.gmra.mxu0 %v2150
    %v2217 = vpop.f32.mrf.mxu0
    %v2218 = vadd.f32 0.0, %v2217
    %2219 = vmatmul.f32.gmra.mxu0 %v2153
    %v2220 = vpop.f32.mrf.mxu0
    %v2221 = vadd.f32 0.0, %v2220
    %2222 = vmatmul.f32.gmra.mxu0 %v2156
    %v2223 = vpop.f32.mrf.mxu0
    %v2224 = vadd.f32 0.0, %v2223
    %2225 = vmatmul.f32.gmra.mxu0 %v2159
    %v2226 = vpop.f32.mrf.mxu0
    %v2227 = vadd.f32 0.0, %v2226
    %2228 = vmatmul.f32.gmra.mxu0 %v2162
    %v2229 = vpop.f32.mrf.mxu0
    %v2230 = vadd.f32 0.0, %v2229
    %2231 = vmatmul.f32.gmra.mxu0 %v2165
    %v2232 = vpop.f32.mrf.mxu0
    %v2233 = vadd.f32 0.0, %v2232
    %2234 = vmatmul.f32.gmra.mxu0 %v2168
    %v2235 = vpop.f32.mrf.mxu0
    %v2236 = vadd.f32 0.0, %v2235
    %2237 = vdwg.mxu0
    %v2238 = vmul.f32 %v1712, %v1712
    %v2239 = vmul.f32 %v1715, %v1715
    %v2240 = vmul.f32 %v1718, %v1718
    %v2241 = vmul.f32 %v1721, %v1721
    %v2242 = vmul.f32 %v1724, %v1724
    %v2243 = vmul.f32 %v1727, %v1727
    %v2244 = vmul.f32 %v1730, %v1730
    %v2245 = vmul.f32 %v1733, %v1733
    %v2246 = vmul.f32 %v1736, %v1736
    %v2247 = vmul.f32 %v1739, %v1739
    %v2248 = vmul.f32 %v1742, %v1742
    %v2249 = vmul.f32 %v1745, %v1745
    %v2250 = vmul.f32 %v1748, %v1748
    %v2251 = vmul.f32 %v1751, %v1751
    %v2252 = vmul.f32 %v1754, %v1754
    %v2253 = vmul.f32 %v1757, %v1757
    %v2254 = vmul.f32 %v1760, %v1760
    %v2255 = vmul.f32 %v1831, %v1831
    %v2256 = vmul.f32 %v1834, %v1834
    %v2257 = vmul.f32 %v1837, %v1837
    %v2258 = vmul.f32 %v1840, %v1840
    %v2259 = vmul.f32 %v1843, %v1843
    %v2260 = vmul.f32 %v1846, %v1846
    %v2261 = vmul.f32 %v1849, %v1849
    %v2262 = vmul.f32 %v1852, %v1852
    %v2263 = vmul.f32 %v1855, %v1855
    %v2264 = vmul.f32 %v1858, %v1858
    %v2265 = vmul.f32 %v1861, %v1861
    %v2266 = vmul.f32 %v1864, %v1864
    %v2267 = vmul.f32 %v1867, %v1867
    %v2268 = vmul.f32 %v1870, %v1870
    %v2269 = vmul.f32 %v1873, %v1873
    %v2270 = vmul.f32 %v1876, %v1876
    %v2271 = vmul.f32 %v1879, %v1879
    %v2272 = vmul.f32 %v1712, %v1831
    %v2273 = vmul.f32 %v1715, %v1834
    %v2274 = vmul.f32 %v1718, %v1837
    %v2275 = vmul.f32 %v1721, %v1840
    %v2276 = vmul.f32 %v1724, %v1843
    %v2277 = vmul.f32 %v1727, %v1846
    %v2278 = vmul.f32 %v1730, %v1849
    %v2279 = vmul.f32 %v1733, %v1852
    %v2280 = vmul.f32 %v1736, %v1855
    %v2281 = vmul.f32 %v1739, %v1858
    %v2282 = vmul.f32 %v1742, %v1861
    %v2283 = vmul.f32 %v1745, %v1864
    %v2284 = vmul.f32 %v1748, %v1867
    %v2285 = vmul.f32 %v1751, %v1870
    %v2286 = vmul.f32 %v1754, %v1873
    %v2287 = vmul.f32 %v1757, %v1876
    %v2288 = vmul.f32 %v1760, %v1879
    %v2289 = vsub.f32 %v1950, %v2238
    %v2290 = vsub.f32 %v1953, %v2239
    %v2291 = vsub.f32 %v1956, %v2240
    %v2292 = vsub.f32 %v1959, %v2241
    %v2293 = vsub.f32 %v1962, %v2242
    %v2294 = vsub.f32 %v1965, %v2243
    %v2295 = vsub.f32 %v1968, %v2244
    %v2296 = vsub.f32 %v1971, %v2245
    %v2297 = vsub.f32 %v1974, %v2246
    %v2298 = vsub.f32 %v1977, %v2247
    %v2299 = vsub.f32 %v1980, %v2248
    %v2300 = vsub.f32 %v1983, %v2249
    %v2301 = vsub.f32 %v1986, %v2250
    %v2302 = vsub.f32 %v1989, %v2251
    %v2303 = vsub.f32 %v1992, %v2252
    %v2304 = vsub.f32 %v1995, %v2253
    %v2305 = vsub.f32 %v1998, %v2254
    %v2306 = vsub.f32 %v2069, %v2255
    %v2307 = vsub.f32 %v2072, %v2256
    %v2308 = vsub.f32 %v2075, %v2257
    %v2309 = vsub.f32 %v2078, %v2258
    %v2310 = vsub.f32 %v2081, %v2259
    %v2311 = vsub.f32 %v2084, %v2260
    %v2312 = vsub.f32 %v2087, %v2261
    %v2313 = vsub.f32 %v2090, %v2262
    %v2314 = vsub.f32 %v2093, %v2263
    %v2315 = vsub.f32 %v2096, %v2264
    %v2316 = vsub.f32 %v2099, %v2265
    %v2317 = vsub.f32 %v2102, %v2266
    %v2318 = vsub.f32 %v2105, %v2267
    %v2319 = vsub.f32 %v2108, %v2268
    %v2320 = vsub.f32 %v2111, %v2269
    %v2321 = vsub.f32 %v2114, %v2270
    %v2322 = vsub.f32 %v2117, %v2271
    %v2323 = vsub.f32 %v2188, %v2272
    %v2324 = vsub.f32 %v2191, %v2273
    %v2325 = vsub.f32 %v2194, %v2274
    %v2326 = vsub.f32 %v2197, %v2275
    %v2327 = vsub.f32 %v2200, %v2276
    %v2328 = vsub.f32 %v2203, %v2277
    %v2329 = vsub.f32 %v2206, %v2278
    %v2330 = vsub.f32 %v2209, %v2279
    %v2331 = vsub.f32 %v2212, %v2280
    %v2332 = vsub.f32 %v2215, %v2281
    %v2333 = vsub.f32 %v2218, %v2282
    %v2334 = vsub.f32 %v2221, %v2283
    %v2335 = vsub.f32 %v2224, %v2284
    %v2336 = vsub.f32 %v2227, %v2285
    %v2337 = vsub.f32 %v2230, %v2286
    %v2338 = vsub.f32 %v2233, %v2287
    %v2339 = vsub.f32 %v2236, %v2288
    %v2340 = vmul.f32 %v2323, 2.0
    %v2341 = vmul.f32 %v2324, 2.0
    %v2342 = vmul.f32 %v2325, 2.0
    %v2343 = vmul.f32 %v2326, 2.0
    %v2344 = vmul.f32 %v2327, 2.0
    %v2345 = vmul.f32 %v2328, 2.0
    %v2346 = vmul.f32 %v2329, 2.0
    %v2347 = vmul.f32 %v2330, 2.0
    %v2348 = vmul.f32 %v2331, 2.0
    %v2349 = vmul.f32 %v2332, 2.0
    %v2350 = vmul.f32 %v2333, 2.0
    %v2351 = vmul.f32 %v2334, 2.0
    %v2352 = vmul.f32 %v2335, 2.0
    %v2353 = vmul.f32 %v2336, 2.0
    %v2354 = vmul.f32 %v2337, 2.0
    %v2355 = vmul.f32 %v2338, 2.0
    %v2356 = vmul.f32 %v2339, 2.0
    %v2357 = vstv %s514
    %v2358 = vadd.f32 %v2340, %v2357
    %v2359 = vadd.f32 %v2341, %v2357
    %v2360 = vadd.f32 %v2342, %v2357
    %v2361 = vadd.f32 %v2343, %v2357
    %v2362 = vadd.f32 %v2344, %v2357
    %v2363 = vadd.f32 %v2345, %v2357
    %v2364 = vadd.f32 %v2346, %v2357
    %v2365 = vadd.f32 %v2347, %v2357
    %v2366 = vadd.f32 %v2348, %v2357
    %v2367 = vadd.f32 %v2349, %v2357
    %v2368 = vadd.f32 %v2350, %v2357
    %v2369 = vadd.f32 %v2351, %v2357
    %v2370 = vadd.f32 %v2352, %v2357
    %v2371 = vadd.f32 %v2353, %v2357
    %v2372 = vadd.f32 %v2354, %v2357
    %v2373 = vadd.f32 %v2355, %v2357
    %v2374 = vadd.f32 %v2356, %v2357
    %v2375 = vadd.f32 %v2289, %v2306
    %v2376 = vadd.f32 %v2290, %v2307
    %v2377 = vadd.f32 %v2291, %v2308
    %v2378 = vadd.f32 %v2292, %v2309
    %v2379 = vadd.f32 %v2293, %v2310
    %v2380 = vadd.f32 %v2294, %v2311
    %v2381 = vadd.f32 %v2295, %v2312
    %v2382 = vadd.f32 %v2296, %v2313
    %v2383 = vadd.f32 %v2297, %v2314
    %v2384 = vadd.f32 %v2298, %v2315
    %v2385 = vadd.f32 %v2299, %v2316
    %v2386 = vadd.f32 %v2300, %v2317
    %v2387 = vadd.f32 %v2301, %v2318
    %v2388 = vadd.f32 %v2302, %v2319
    %v2389 = vadd.f32 %v2303, %v2320
    %v2390 = vadd.f32 %v2304, %v2321
    %v2391 = vadd.f32 %v2305, %v2322
    %v2392 = vadd.f32 %v2375, %v2357
    %v2393 = vadd.f32 %v2376, %v2357
    %v2394 = vadd.f32 %v2377, %v2357
    %v2395 = vadd.f32 %v2378, %v2357
    %v2396 = vadd.f32 %v2379, %v2357
    %v2397 = vadd.f32 %v2380, %v2357
    %v2398 = vadd.f32 %v2381, %v2357
    %v2399 = vadd.f32 %v2382, %v2357
    %v2400 = vadd.f32 %v2383, %v2357
    %v2401 = vadd.f32 %v2384, %v2357
    %v2402 = vadd.f32 %v2385, %v2357
    %v2403 = vadd.f32 %v2386, %v2357
    %v2404 = vadd.f32 %v2387, %v2357
    %v2405 = vadd.f32 %v2388, %v2357
    %v2406 = vadd.f32 %v2389, %v2357
    %v2407 = vadd.f32 %v2390, %v2357
    %v2408 = vadd.f32 %v2391, %v2357
    %v2409 = vadd.f32 %v2392, 1e-08
    %v2410 = vadd.f32 %v2393, 1e-08
    %v2411 = vadd.f32 %v2394, 1e-08
    %v2412 = vadd.f32 %v2395, 1e-08
    %v2413 = vadd.f32 %v2396, 1e-08
    %v2414 = vadd.f32 %v2397, 1e-08
    %v2415 = vadd.f32 %v2398, 1e-08
    %v2416 = vadd.f32 %v2399, 1e-08
    %v2417 = vadd.f32 %v2400, 1e-08
    %v2418 = vadd.f32 %v2401, 1e-08
    %v2419 = vadd.f32 %v2402, 1e-08
    %v2420 = vadd.f32 %v2403, 1e-08
    %v2421 = vadd.f32 %v2404, 1e-08
    %v2422 = vadd.f32 %v2405, 1e-08
    %v2423 = vadd.f32 %v2406, 1e-08
    %v2424 = vadd.f32 %v2407, 1e-08
    %v2425 = vadd.f32 %v2408, 1e-08
    %v2426 = vrcp.pop %v2409
    %v2427 = vmul.f32 %v2409, %v2426
    %v2428 = vsub.f32 1.0, %v2427
    %v2429 = vmul.f32 %v2426, %v2428
    %v2430 = vadd.f32 %v2426, %v2429
    %vm2431 = vweird.f32 %v2409
    %vm2432 = vweird.f32 %v2426
    %vm2433 = vmor %vm2431, %vm2432
    %v2434 = vsel %vm2433, %v2426, %v2430
    %v2435 = vand.u32 2147483647, %v2409
    %vm2436 = vcmp.eq.f32.partialorder %v2435, 8.507059e+37
    %v2437 = vand.u32 %v2409, 2147483648
    %v2438 = vor.u32 1.1754944e-38, %v2437
    %v2439 = vsel %vm2436, %v2438, %v2434
    %v2440 = vmul.f32 %v2358, %v2439
    %v2441 = vrcp.pop %v2410
    %v2442 = vmul.f32 %v2410, %v2441
    %v2443 = vsub.f32 1.0, %v2442
    %v2444 = vmul.f32 %v2441, %v2443
    %v2445 = vadd.f32 %v2441, %v2444
    %vm2446 = vweird.f32 %v2410
    %vm2447 = vweird.f32 %v2441
    %vm2448 = vmor %vm2446, %vm2447
    %v2449 = vsel %vm2448, %v2441, %v2445
    %v2450 = vand.u32 2147483647, %v2410
    %vm2451 = vcmp.eq.f32.partialorder %v2450, 8.507059e+37
    %v2452 = vand.u32 %v2410, 2147483648
    %v2453 = vor.u32 1.1754944e-38, %v2452
    %v2454 = vsel %vm2451, %v2453, %v2449
    %v2455 = vmul.f32 %v2359, %v2454
    %v2456 = vrcp.pop %v2411
    %v2457 = vmul.f32 %v2411, %v2456
    %v2458 = vsub.f32 1.0, %v2457
    %v2459 = vmul.f32 %v2456, %v2458
    %v2460 = vadd.f32 %v2456, %v2459
    %vm2461 = vweird.f32 %v2411
    %vm2462 = vweird.f32 %v2456
    %vm2463 = vmor %vm2461, %vm2462
    %v2464 = vsel %vm2463, %v2456, %v2460
    %v2465 = vand.u32 2147483647, %v2411
    %vm2466 = vcmp.eq.f32.partialorder %v2465, 8.507059e+37
    %v2467 = vand.u32 %v2411, 2147483648
    %v2468 = vor.u32 1.1754944e-38, %v2467
    %v2469 = vsel %vm2466, %v2468, %v2464
    %v2470 = vmul.f32 %v2360, %v2469
    %v2471 = vrcp.pop %v2412
    %v2472 = vmul.f32 %v2412, %v2471
    %v2473 = vsub.f32 1.0, %v2472
    %v2474 = vmul.f32 %v2471, %v2473
    %v2475 = vadd.f32 %v2471, %v2474
    %vm2476 = vweird.f32 %v2412
    %vm2477 = vweird.f32 %v2471
    %vm2478 = vmor %vm2476, %vm2477
    %v2479 = vsel %vm2478, %v2471, %v2475
    %v2480 = vand.u32 2147483647, %v2412
    %vm2481 = vcmp.eq.f32.partialorder %v2480, 8.507059e+37
    %v2482 = vand.u32 %v2412, 2147483648
    %v2483 = vor.u32 1.1754944e-38, %v2482
    %v2484 = vsel %vm2481, %v2483, %v2479
    %v2485 = vmul.f32 %v2361, %v2484
    %v2486 = vrcp.pop %v2413
    %v2487 = vmul.f32 %v2413, %v2486
    %v2488 = vsub.f32 1.0, %v2487
    %v2489 = vmul.f32 %v2486, %v2488
    %v2490 = vadd.f32 %v2486, %v2489
    %vm2491 = vweird.f32 %v2413
    %vm2492 = vweird.f32 %v2486
    %vm2493 = vmor %vm2491, %vm2492
    %v2494 = vsel %vm2493, %v2486, %v2490
    %v2495 = vand.u32 2147483647, %v2413
    %vm2496 = vcmp.eq.f32.partialorder %v2495, 8.507059e+37
    %v2497 = vand.u32 %v2413, 2147483648
    %v2498 = vor.u32 1.1754944e-38, %v2497
    %v2499 = vsel %vm2496, %v2498, %v2494
    %v2500 = vmul.f32 %v2362, %v2499
    %v2501 = vrcp.pop %v2414
    %v2502 = vmul.f32 %v2414, %v2501
    %v2503 = vsub.f32 1.0, %v2502
    %v2504 = vmul.f32 %v2501, %v2503
    %v2505 = vadd.f32 %v2501, %v2504
    %vm2506 = vweird.f32 %v2414
    %vm2507 = vweird.f32 %v2501
    %vm2508 = vmor %vm2506, %vm2507
    %v2509 = vsel %vm2508, %v2501, %v2505
    %v2510 = vand.u32 2147483647, %v2414
    %vm2511 = vcmp.eq.f32.partialorder %v2510, 8.507059e+37
    %v2512 = vand.u32 %v2414, 2147483648
    %v2513 = vor.u32 1.1754944e-38, %v2512
    %v2514 = vsel %vm2511, %v2513, %v2509
    %v2515 = vmul.f32 %v2363, %v2514
    %v2516 = vrcp.pop %v2415
    %v2517 = vmul.f32 %v2415, %v2516
    %v2518 = vsub.f32 1.0, %v2517
    %v2519 = vmul.f32 %v2516, %v2518
    %v2520 = vadd.f32 %v2516, %v2519
    %vm2521 = vweird.f32 %v2415
    %vm2522 = vweird.f32 %v2516
    %vm2523 = vmor %vm2521, %vm2522
    %v2524 = vsel %vm2523, %v2516, %v2520
    %v2525 = vand.u32 2147483647, %v2415
    %vm2526 = vcmp.eq.f32.partialorder %v2525, 8.507059e+37
    %v2527 = vand.u32 %v2415, 2147483648
    %v2528 = vor.u32 1.1754944e-38, %v2527
    %v2529 = vsel %vm2526, %v2528, %v2524
    %v2530 = vmul.f32 %v2364, %v2529
    %v2531 = vrcp.pop %v2416
    %v2532 = vmul.f32 %v2416, %v2531
    %v2533 = vsub.f32 1.0, %v2532
    %v2534 = vmul.f32 %v2531, %v2533
    %v2535 = vadd.f32 %v2531, %v2534
    %vm2536 = vweird.f32 %v2416
    %vm2537 = vweird.f32 %v2531
    %vm2538 = vmor %vm2536, %vm2537
    %v2539 = vsel %vm2538, %v2531, %v2535
    %v2540 = vand.u32 2147483647, %v2416
    %vm2541 = vcmp.eq.f32.partialorder %v2540, 8.507059e+37
    %v2542 = vand.u32 %v2416, 2147483648
    %v2543 = vor.u32 1.1754944e-38, %v2542
    %v2544 = vsel %vm2541, %v2543, %v2539
    %v2545 = vmul.f32 %v2365, %v2544
    %v2546 = vrcp.pop %v2417
    %v2547 = vmul.f32 %v2417, %v2546
    %v2548 = vsub.f32 1.0, %v2547
    %v2549 = vmul.f32 %v2546, %v2548
    %v2550 = vadd.f32 %v2546, %v2549
    %vm2551 = vweird.f32 %v2417
    %vm2552 = vweird.f32 %v2546
    %vm2553 = vmor %vm2551, %vm2552
    %v2554 = vsel %vm2553, %v2546, %v2550
    %v2555 = vand.u32 2147483647, %v2417
    %vm2556 = vcmp.eq.f32.partialorder %v2555, 8.507059e+37
    %v2557 = vand.u32 %v2417, 2147483648
    %v2558 = vor.u32 1.1754944e-38, %v2557
    %v2559 = vsel %vm2556, %v2558, %v2554
    %v2560 = vmul.f32 %v2366, %v2559
    %v2561 = vrcp.pop %v2418
    %v2562 = vmul.f32 %v2418, %v2561
    %v2563 = vsub.f32 1.0, %v2562
    %v2564 = vmul.f32 %v2561, %v2563
    %v2565 = vadd.f32 %v2561, %v2564
    %vm2566 = vweird.f32 %v2418
    %vm2567 = vweird.f32 %v2561
    %vm2568 = vmor %vm2566, %vm2567
    %v2569 = vsel %vm2568, %v2561, %v2565
    %v2570 = vand.u32 2147483647, %v2418
    %vm2571 = vcmp.eq.f32.partialorder %v2570, 8.507059e+37
    %v2572 = vand.u32 %v2418, 2147483648
    %v2573 = vor.u32 1.1754944e-38, %v2572
    %v2574 = vsel %vm2571, %v2573, %v2569
    %v2575 = vmul.f32 %v2367, %v2574
    %v2576 = vrcp.pop %v2419
    %v2577 = vmul.f32 %v2419, %v2576
    %v2578 = vsub.f32 1.0, %v2577
    %v2579 = vmul.f32 %v2576, %v2578
    %v2580 = vadd.f32 %v2576, %v2579
    %vm2581 = vweird.f32 %v2419
    %vm2582 = vweird.f32 %v2576
    %vm2583 = vmor %vm2581, %vm2582
    %v2584 = vsel %vm2583, %v2576, %v2580
    %v2585 = vand.u32 2147483647, %v2419
    %vm2586 = vcmp.eq.f32.partialorder %v2585, 8.507059e+37
    %v2587 = vand.u32 %v2419, 2147483648
    %v2588 = vor.u32 1.1754944e-38, %v2587
    %v2589 = vsel %vm2586, %v2588, %v2584
    %v2590 = vmul.f32 %v2368, %v2589
    %v2591 = vrcp.pop %v2420
    %v2592 = vmul.f32 %v2420, %v2591
    %v2593 = vsub.f32 1.0, %v2592
    %v2594 = vmul.f32 %v2591, %v2593
    %v2595 = vadd.f32 %v2591, %v2594
    %vm2596 = vweird.f32 %v2420
    %vm2597 = vweird.f32 %v2591
    %vm2598 = vmor %vm2596, %vm2597
    %v2599 = vsel %vm2598, %v2591, %v2595
    %v2600 = vand.u32 2147483647, %v2420
    %vm2601 = vcmp.eq.f32.partialorder %v2600, 8.507059e+37
    %v2602 = vand.u32 %v2420, 2147483648
    %v2603 = vor.u32 1.1754944e-38, %v2602
    %v2604 = vsel %vm2601, %v2603, %v2599
    %v2605 = vmul.f32 %v2369, %v2604
    %v2606 = vrcp.pop %v2421
    %v2607 = vmul.f32 %v2421, %v2606
    %v2608 = vsub.f32 1.0, %v2607
    %v2609 = vmul.f32 %v2606, %v2608
    %v2610 = vadd.f32 %v2606, %v2609
    %vm2611 = vweird.f32 %v2421
    %vm2612 = vweird.f32 %v2606
    %vm2613 = vmor %vm2611, %vm2612
    %v2614 = vsel %vm2613, %v2606, %v2610
    %v2615 = vand.u32 2147483647, %v2421
    %vm2616 = vcmp.eq.f32.partialorder %v2615, 8.507059e+37
    %v2617 = vand.u32 %v2421, 2147483648
    %v2618 = vor.u32 1.1754944e-38, %v2617
    %v2619 = vsel %vm2616, %v2618, %v2614
    %v2620 = vmul.f32 %v2370, %v2619
    %v2621 = vrcp.pop %v2422
    %v2622 = vmul.f32 %v2422, %v2621
    %v2623 = vsub.f32 1.0, %v2622
    %v2624 = vmul.f32 %v2621, %v2623
    %v2625 = vadd.f32 %v2621, %v2624
    %vm2626 = vweird.f32 %v2422
    %vm2627 = vweird.f32 %v2621
    %vm2628 = vmor %vm2626, %vm2627
    %v2629 = vsel %vm2628, %v2621, %v2625
    %v2630 = vand.u32 2147483647, %v2422
    %vm2631 = vcmp.eq.f32.partialorder %v2630, 8.507059e+37
    %v2632 = vand.u32 %v2422, 2147483648
    %v2633 = vor.u32 1.1754944e-38, %v2632
    %v2634 = vsel %vm2631, %v2633, %v2629
    %v2635 = vmul.f32 %v2371, %v2634
    %v2636 = vrcp.pop %v2423
    %v2637 = vmul.f32 %v2423, %v2636
    %v2638 = vsub.f32 1.0, %v2637
    %v2639 = vmul.f32 %v2636, %v2638
    %v2640 = vadd.f32 %v2636, %v2639
    %vm2641 = vweird.f32 %v2423
    %vm2642 = vweird.f32 %v2636
    %vm2643 = vmor %vm2641, %vm2642
    %v2644 = vsel %vm2643, %v2636, %v2640
    %v2645 = vand.u32 2147483647, %v2423
    %vm2646 = vcmp.eq.f32.partialorder %v2645, 8.507059e+37
    %v2647 = vand.u32 %v2423, 2147483648
    %v2648 = vor.u32 1.1754944e-38, %v2647
    %v2649 = vsel %vm2646, %v2648, %v2644
    %v2650 = vmul.f32 %v2372, %v2649
    %v2651 = vrcp.pop %v2424
    %v2652 = vmul.f32 %v2424, %v2651
    %v2653 = vsub.f32 1.0, %v2652
    %v2654 = vmul.f32 %v2651, %v2653
    %v2655 = vadd.f32 %v2651, %v2654
    %vm2656 = vweird.f32 %v2424
    %vm2657 = vweird.f32 %v2651
    %vm2658 = vmor %vm2656, %vm2657
    %v2659 = vsel %vm2658, %v2651, %v2655
    %v2660 = vand.u32 2147483647, %v2424
    %vm2661 = vcmp.eq.f32.partialorder %v2660, 8.507059e+37
    %v2662 = vand.u32 %v2424, 2147483648
    %v2663 = vor.u32 1.1754944e-38, %v2662
    %v2664 = vsel %vm2661, %v2663, %v2659
    %v2665 = vmul.f32 %v2373, %v2664
    %v2666 = vrcp.pop %v2425
    %v2667 = vmul.f32 %v2425, %v2666
    %v2668 = vsub.f32 1.0, %v2667
    %v2669 = vmul.f32 %v2666, %v2668
    %v2670 = vadd.f32 %v2666, %v2669
    %vm2671 = vweird.f32 %v2425
    %vm2672 = vweird.f32 %v2666
    %vm2673 = vmor %vm2671, %vm2672
    %v2674 = vsel %vm2673, %v2666, %v2670
    %v2675 = vand.u32 2147483647, %v2425
    %vm2676 = vcmp.eq.f32.partialorder %v2675, 8.507059e+37
    %v2677 = vand.u32 %v2425, 2147483648
    %v2678 = vor.u32 1.1754944e-38, %v2677
    %v2679 = vsel %vm2676, %v2678, %v2674
    %v2680 = vmul.f32 %v2374, %v2679
    %v2681 = vmul.f32 %v2272, 2.0
    %v2682 = vmul.f32 %v2273, 2.0
    %v2683 = vmul.f32 %v2274, 2.0
    %v2684 = vmul.f32 %v2275, 2.0
    %v2685 = vmul.f32 %v2276, 2.0
    %v2686 = vmul.f32 %v2277, 2.0
    %v2687 = vmul.f32 %v2278, 2.0
    %v2688 = vmul.f32 %v2279, 2.0
    %v2689 = vmul.f32 %v2280, 2.0
    %v2690 = vmul.f32 %v2281, 2.0
    %v2691 = vmul.f32 %v2282, 2.0
    %v2692 = vmul.f32 %v2283, 2.0
    %v2693 = vmul.f32 %v2284, 2.0
    %v2694 = vmul.f32 %v2285, 2.0
    %v2695 = vmul.f32 %v2286, 2.0
    %v2696 = vmul.f32 %v2287, 2.0
    %v2697 = vmul.f32 %v2288, 2.0
    %v2698 = vstv %s512
    %v2699 = vadd.f32 %v2681, %v2698
    %v2700 = vadd.f32 %v2682, %v2698
    %v2701 = vadd.f32 %v2683, %v2698
    %v2702 = vadd.f32 %v2684, %v2698
    %v2703 = vadd.f32 %v2685, %v2698
    %v2704 = vadd.f32 %v2686, %v2698
    %v2705 = vadd.f32 %v2687, %v2698
    %v2706 = vadd.f32 %v2688, %v2698
    %v2707 = vadd.f32 %v2689, %v2698
    %v2708 = vadd.f32 %v2690, %v2698
    %v2709 = vadd.f32 %v2691, %v2698
    %v2710 = vadd.f32 %v2692, %v2698
    %v2711 = vadd.f32 %v2693, %v2698
    %v2712 = vadd.f32 %v2694, %v2698
    %v2713 = vadd.f32 %v2695, %v2698
    %v2714 = vadd.f32 %v2696, %v2698
    %v2715 = vadd.f32 %v2697, %v2698
    %v2716 = vmul.f32 %v2699, %v2358
    %v2717 = vmul.f32 %v2700, %v2359
    %v2718 = vmul.f32 %v2701, %v2360
    %v2719 = vmul.f32 %v2702, %v2361
    %v2720 = vmul.f32 %v2703, %v2362
    %v2721 = vmul.f32 %v2704, %v2363
    %v2722 = vmul.f32 %v2705, %v2364
    %v2723 = vmul.f32 %v2706, %v2365
    %v2724 = vmul.f32 %v2707, %v2366
    %v2725 = vmul.f32 %v2708, %v2367
    %v2726 = vmul.f32 %v2709, %v2368
    %v2727 = vmul.f32 %v2710, %v2369
    %v2728 = vmul.f32 %v2711, %v2370
    %v2729 = vmul.f32 %v2712, %v2371
    %v2730 = vmul.f32 %v2713, %v2372
    %v2731 = vmul.f32 %v2714, %v2373
    %v2732 = vmul.f32 %v2715, %v2374
    %v2733 = vadd.f32 %v2238, %v2255
    %v2734 = vadd.f32 %v2239, %v2256
    %v2735 = vadd.f32 %v2240, %v2257
    %v2736 = vadd.f32 %v2241, %v2258
    %v2737 = vadd.f32 %v2242, %v2259
    %v2738 = vadd.f32 %v2243, %v2260
    %v2739 = vadd.f32 %v2244, %v2261
    %v2740 = vadd.f32 %v2245, %v2262
    %v2741 = vadd.f32 %v2246, %v2263
    %v2742 = vadd.f32 %v2247, %v2264
    %v2743 = vadd.f32 %v2248, %v2265
    %v2744 = vadd.f32 %v2249, %v2266
    %v2745 = vadd.f32 %v2250, %v2267
    %v2746 = vadd.f32 %v2251, %v2268
    %v2747 = vadd.f32 %v2252, %v2269
    %v2748 = vadd.f32 %v2253, %v2270
    %v2749 = vadd.f32 %v2254, %v2271
    %v2750 = vadd.f32 %v2733, %v2698
    %v2751 = vadd.f32 %v2734, %v2698
    %v2752 = vadd.f32 %v2735, %v2698
    %v2753 = vadd.f32 %v2736, %v2698
    %v2754 = vadd.f32 %v2737, %v2698
    %v2755 = vadd.f32 %v2738, %v2698
    %v2756 = vadd.f32 %v2739, %v2698
    %v2757 = vadd.f32 %v2740, %v2698
    %v2758 = vadd.f32 %v2741, %v2698
    %v2759 = vadd.f32 %v2742, %v2698
    %v2760 = vadd.f32 %v2743, %v2698
    %v2761 = vadd.f32 %v2744, %v2698
    %v2762 = vadd.f32 %v2745, %v2698
    %v2763 = vadd.f32 %v2746, %v2698
    %v2764 = vadd.f32 %v2747, %v2698
    %v2765 = vadd.f32 %v2748, %v2698
    %v2766 = vadd.f32 %v2749, %v2698
    %v2767 = vmul.f32 %v2750, %v2409
    %v2768 = vmul.f32 %v2751, %v2410
    %v2769 = vmul.f32 %v2752, %v2411
    %v2770 = vmul.f32 %v2753, %v2412
    %v2771 = vmul.f32 %v2754, %v2413
    %v2772 = vmul.f32 %v2755, %v2414
    %v2773 = vmul.f32 %v2756, %v2415
    %v2774 = vmul.f32 %v2757, %v2416
    %v2775 = vmul.f32 %v2758, %v2417
    %v2776 = vmul.f32 %v2759, %v2418
    %v2777 = vmul.f32 %v2760, %v2419
    %v2778 = vmul.f32 %v2761, %v2420
    %v2779 = vmul.f32 %v2762, %v2421
    %v2780 = vmul.f32 %v2763, %v2422
    %v2781 = vmul.f32 %v2764, %v2423
    %v2782 = vmul.f32 %v2765, %v2424
    %v2783 = vmul.f32 %v2766, %v2425
    %v2784 = vadd.f32 %v2767, 1e-06
    %v2785 = vadd.f32 %v2768, 1e-06
    %v2786 = vadd.f32 %v2769, 1e-06
    %v2787 = vadd.f32 %v2770, 1e-06
    %v2788 = vadd.f32 %v2771, 1e-06
    %v2789 = vadd.f32 %v2772, 1e-06
    %v2790 = vadd.f32 %v2773, 1e-06
    %v2791 = vadd.f32 %v2774, 1e-06
    %v2792 = vadd.f32 %v2775, 1e-06
    %v2793 = vadd.f32 %v2776, 1e-06
    %v2794 = vadd.f32 %v2777, 1e-06
    %v2795 = vadd.f32 %v2778, 1e-06
    %v2796 = vadd.f32 %v2779, 1e-06
    %v2797 = vadd.f32 %v2780, 1e-06
    %v2798 = vadd.f32 %v2781, 1e-06
    %v2799 = vadd.f32 %v2782, 1e-06
    %v2800 = vadd.f32 %v2783, 1e-06
    %v2801 = vrcp.pop %v2784
    %v2802 = vmul.f32 %v2784, %v2801
    %v2803 = vsub.f32 1.0, %v2802
    %v2804 = vmul.f32 %v2801, %v2803
    %v2805 = vadd.f32 %v2801, %v2804
    %vm2806 = vweird.f32 %v2784
    %vm2807 = vweird.f32 %v2801
    %vm2808 = vmor %vm2806, %vm2807
    %v2809 = vsel %vm2808, %v2801, %v2805
    %v2810 = vand.u32 2147483647, %v2784
    %vm2811 = vcmp.eq.f32.partialorder %v2810, 8.507059e+37
    %v2812 = vand.u32 %v2784, 2147483648
    %v2813 = vor.u32 1.1754944e-38, %v2812
    %v2814 = vsel %vm2811, %v2813, %v2809
    %v2815 = vmul.f32 %v2716, %v2814
    %v2816 = vrcp.pop %v2785
    %v2817 = vmul.f32 %v2785, %v2816
    %v2818 = vsub.f32 1.0, %v2817
    %v2819 = vmul.f32 %v2816, %v2818
    %v2820 = vadd.f32 %v2816, %v2819
    %vm2821 = vweird.f32 %v2785
    %vm2822 = vweird.f32 %v2816
    %vm2823 = vmor %vm2821, %vm2822
    %v2824 = vsel %vm2823, %v2816, %v2820
    %v2825 = vand.u32 2147483647, %v2785
    %vm2826 = vcmp.eq.f32.partialorder %v2825, 8.507059e+37
    %v2827 = vand.u32 %v2785, 2147483648
    %v2828 = vor.u32 1.1754944e-38, %v2827
    %v2829 = vsel %vm2826, %v2828, %v2824
    %v2830 = vmul.f32 %v2717, %v2829
    %v2831 = vrcp.pop %v2786
    %v2832 = vmul.f32 %v2786, %v2831
    %v2833 = vsub.f32 1.0, %v2832
    %v2834 = vmul.f32 %v2831, %v2833
    %v2835 = vadd.f32 %v2831, %v2834
    %vm2836 = vweird.f32 %v2786
    %vm2837 = vweird.f32 %v2831
    %vm2838 = vmor %vm2836, %vm2837
    %v2839 = vsel %vm2838, %v2831, %v2835
    %v2840 = vand.u32 2147483647, %v2786
    %vm2841 = vcmp.eq.f32.partialorder %v2840, 8.507059e+37
    %v2842 = vand.u32 %v2786, 2147483648
    %v2843 = vor.u32 1.1754944e-38, %v2842
    %v2844 = vsel %vm2841, %v2843, %v2839
    %v2845 = vmul.f32 %v2718, %v2844
    %v2846 = vrcp.pop %v2787
    %v2847 = vmul.f32 %v2787, %v2846
    %v2848 = vsub.f32 1.0, %v2847
    %v2849 = vmul.f32 %v2846, %v2848
    %v2850 = vadd.f32 %v2846, %v2849
    %vm2851 = vweird.f32 %v2787
    %vm2852 = vweird.f32 %v2846
    %vm2853 = vmor %vm2851, %vm2852
    %v2854 = vsel %vm2853, %v2846, %v2850
    %v2855 = vand.u32 2147483647, %v2787
    %vm2856 = vcmp.eq.f32.partialorder %v2855, 8.507059e+37
    %v2857 = vand.u32 %v2787, 2147483648
    %v2858 = vor.u32 1.1754944e-38, %v2857
    %v2859 = vsel %vm2856, %v2858, %v2854
    %v2860 = vmul.f32 %v2719, %v2859
    %v2861 = vrcp.pop %v2788
    %v2862 = vmul.f32 %v2788, %v2861
    %v2863 = vsub.f32 1.0, %v2862
    %v2864 = vmul.f32 %v2861, %v2863
    %v2865 = vadd.f32 %v2861, %v2864
    %vm2866 = vweird.f32 %v2788
    %vm2867 = vweird.f32 %v2861
    %vm2868 = vmor %vm2866, %vm2867
    %v2869 = vsel %vm2868, %v2861, %v2865
    %v2870 = vand.u32 2147483647, %v2788
    %vm2871 = vcmp.eq.f32.partialorder %v2870, 8.507059e+37
    %v2872 = vand.u32 %v2788, 2147483648
    %v2873 = vor.u32 1.1754944e-38, %v2872
    %v2874 = vsel %vm2871, %v2873, %v2869
    %v2875 = vmul.f32 %v2720, %v2874
    %v2876 = vrcp.pop %v2789
    %v2877 = vmul.f32 %v2789, %v2876
    %v2878 = vsub.f32 1.0, %v2877
    %v2879 = vmul.f32 %v2876, %v2878
    %v2880 = vadd.f32 %v2876, %v2879
    %vm2881 = vweird.f32 %v2789
    %vm2882 = vweird.f32 %v2876
    %vm2883 = vmor %vm2881, %vm2882
    %v2884 = vsel %vm2883, %v2876, %v2880
    %v2885 = vand.u32 2147483647, %v2789
    %vm2886 = vcmp.eq.f32.partialorder %v2885, 8.507059e+37
    %v2887 = vand.u32 %v2789, 2147483648
    %v2888 = vor.u32 1.1754944e-38, %v2887
    %v2889 = vsel %vm2886, %v2888, %v2884
    %v2890 = vmul.f32 %v2721, %v2889
    %v2891 = vrcp.pop %v2790
    %v2892 = vmul.f32 %v2790, %v2891
    %v2893 = vsub.f32 1.0, %v2892
    %v2894 = vmul.f32 %v2891, %v2893
    %v2895 = vadd.f32 %v2891, %v2894
    %vm2896 = vweird.f32 %v2790
    %vm2897 = vweird.f32 %v2891
    %vm2898 = vmor %vm2896, %vm2897
    %v2899 = vsel %vm2898, %v2891, %v2895
    %v2900 = vand.u32 2147483647, %v2790
    %vm2901 = vcmp.eq.f32.partialorder %v2900, 8.507059e+37
    %v2902 = vand.u32 %v2790, 2147483648
    %v2903 = vor.u32 1.1754944e-38, %v2902
    %v2904 = vsel %vm2901, %v2903, %v2899
    %v2905 = vmul.f32 %v2722, %v2904
    %v2906 = vrcp.pop %v2791
    %v2907 = vmul.f32 %v2791, %v2906
    %v2908 = vsub.f32 1.0, %v2907
    %v2909 = vmul.f32 %v2906, %v2908
    %v2910 = vadd.f32 %v2906, %v2909
    %vm2911 = vweird.f32 %v2791
    %vm2912 = vweird.f32 %v2906
    %vm2913 = vmor %vm2911, %vm2912
    %v2914 = vsel %vm2913, %v2906, %v2910
    %v2915 = vand.u32 2147483647, %v2791
    %vm2916 = vcmp.eq.f32.partialorder %v2915, 8.507059e+37
    %v2917 = vand.u32 %v2791, 2147483648
    %v2918 = vor.u32 1.1754944e-38, %v2917
    %v2919 = vsel %vm2916, %v2918, %v2914
    %v2920 = vmul.f32 %v2723, %v2919
    %v2921 = vrcp.pop %v2792
    %v2922 = vmul.f32 %v2792, %v2921
    %v2923 = vsub.f32 1.0, %v2922
    %v2924 = vmul.f32 %v2921, %v2923
    %v2925 = vadd.f32 %v2921, %v2924
    %vm2926 = vweird.f32 %v2792
    %vm2927 = vweird.f32 %v2921
    %vm2928 = vmor %vm2926, %vm2927
    %v2929 = vsel %vm2928, %v2921, %v2925
    %v2930 = vand.u32 2147483647, %v2792
    %vm2931 = vcmp.eq.f32.partialorder %v2930, 8.507059e+37
    %v2932 = vand.u32 %v2792, 2147483648
    %v2933 = vor.u32 1.1754944e-38, %v2932
    %v2934 = vsel %vm2931, %v2933, %v2929
    %v2935 = vmul.f32 %v2724, %v2934
    %v2936 = vrcp.pop %v2793
    %v2937 = vmul.f32 %v2793, %v2936
    %v2938 = vsub.f32 1.0, %v2937
    %v2939 = vmul.f32 %v2936, %v2938
    %v2940 = vadd.f32 %v2936, %v2939
    %vm2941 = vweird.f32 %v2793
    %vm2942 = vweird.f32 %v2936
    %vm2943 = vmor %vm2941, %vm2942
    %v2944 = vsel %vm2943, %v2936, %v2940
    %v2945 = vand.u32 2147483647, %v2793
    %vm2946 = vcmp.eq.f32.partialorder %v2945, 8.507059e+37
    %v2947 = vand.u32 %v2793, 2147483648
    %v2948 = vor.u32 1.1754944e-38, %v2947
    %v2949 = vsel %vm2946, %v2948, %v2944
    %v2950 = vmul.f32 %v2725, %v2949
    %v2951 = vrcp.pop %v2794
    %v2952 = vmul.f32 %v2794, %v2951
    %v2953 = vsub.f32 1.0, %v2952
    %v2954 = vmul.f32 %v2951, %v2953
    %v2955 = vadd.f32 %v2951, %v2954
    %vm2956 = vweird.f32 %v2794
    %vm2957 = vweird.f32 %v2951
    %vm2958 = vmor %vm2956, %vm2957
    %v2959 = vsel %vm2958, %v2951, %v2955
    %v2960 = vand.u32 2147483647, %v2794
    %vm2961 = vcmp.eq.f32.partialorder %v2960, 8.507059e+37
    %v2962 = vand.u32 %v2794, 2147483648
    %v2963 = vor.u32 1.1754944e-38, %v2962
    %v2964 = vsel %vm2961, %v2963, %v2959
    %v2965 = vmul.f32 %v2726, %v2964
    %v2966 = vrcp.pop %v2795
    %v2967 = vmul.f32 %v2795, %v2966
    %v2968 = vsub.f32 1.0, %v2967
    %v2969 = vmul.f32 %v2966, %v2968
    %v2970 = vadd.f32 %v2966, %v2969
    %vm2971 = vweird.f32 %v2795
    %vm2972 = vweird.f32 %v2966
    %vm2973 = vmor %vm2971, %vm2972
    %v2974 = vsel %vm2973, %v2966, %v2970
    %v2975 = vand.u32 2147483647, %v2795
    %vm2976 = vcmp.eq.f32.partialorder %v2975, 8.507059e+37
    %v2977 = vand.u32 %v2795, 2147483648
    %v2978 = vor.u32 1.1754944e-38, %v2977
    %v2979 = vsel %vm2976, %v2978, %v2974
    %v2980 = vmul.f32 %v2727, %v2979
    %v2981 = vrcp.pop %v2796
    %v2982 = vmul.f32 %v2796, %v2981
    %v2983 = vsub.f32 1.0, %v2982
    %v2984 = vmul.f32 %v2981, %v2983
    %v2985 = vadd.f32 %v2981, %v2984
    %vm2986 = vweird.f32 %v2796
    %vm2987 = vweird.f32 %v2981
    %vm2988 = vmor %vm2986, %vm2987
    %v2989 = vsel %vm2988, %v2981, %v2985
    %v2990 = vand.u32 2147483647, %v2796
    %vm2991 = vcmp.eq.f32.partialorder %v2990, 8.507059e+37
    %v2992 = vand.u32 %v2796, 2147483648
    %v2993 = vor.u32 1.1754944e-38, %v2992
    %v2994 = vsel %vm2991, %v2993, %v2989
    %v2995 = vmul.f32 %v2728, %v2994
    %v2996 = vrcp.pop %v2797
    %v2997 = vmul.f32 %v2797, %v2996
    %v2998 = vsub.f32 1.0, %v2997
    %v2999 = vmul.f32 %v2996, %v2998
    %v3000 = vadd.f32 %v2996, %v2999
    %vm3001 = vweird.f32 %v2797
    %vm3002 = vweird.f32 %v2996
    %vm3003 = vmor %vm3001, %vm3002
    %v3004 = vsel %vm3003, %v2996, %v3000
    %v3005 = vand.u32 2147483647, %v2797
    %vm3006 = vcmp.eq.f32.partialorder %v3005, 8.507059e+37
    %v3007 = vand.u32 %v2797, 2147483648
    %v3008 = vor.u32 1.1754944e-38, %v3007
    %v3009 = vsel %vm3006, %v3008, %v3004
    %v3010 = vmul.f32 %v2729, %v3009
    %v3011 = vrcp.pop %v2798
    %v3012 = vmul.f32 %v2798, %v3011
    %v3013 = vsub.f32 1.0, %v3012
    %v3014 = vmul.f32 %v3011, %v3013
    %v3015 = vadd.f32 %v3011, %v3014
    %vm3016 = vweird.f32 %v2798
    %vm3017 = vweird.f32 %v3011
    %vm3018 = vmor %vm3016, %vm3017
    %v3019 = vsel %vm3018, %v3011, %v3015
    %v3020 = vand.u32 2147483647, %v2798
    %vm3021 = vcmp.eq.f32.partialorder %v3020, 8.507059e+37
    %v3022 = vand.u32 %v2798, 2147483648
    %v3023 = vor.u32 1.1754944e-38, %v3022
    %v3024 = vsel %vm3021, %v3023, %v3019
    %v3025 = vmul.f32 %v2730, %v3024
    %v3026 = vrcp.pop %v2799
    %v3027 = vmul.f32 %v2799, %v3026
    %v3028 = vsub.f32 1.0, %v3027
    %v3029 = vmul.f32 %v3026, %v3028
    %v3030 = vadd.f32 %v3026, %v3029
    %vm3031 = vweird.f32 %v2799
    %vm3032 = vweird.f32 %v3026
    %vm3033 = vmor %vm3031, %vm3032
    %v3034 = vsel %vm3033, %v3026, %v3030
    %v3035 = vand.u32 2147483647, %v2799
    %vm3036 = vcmp.eq.f32.partialorder %v3035, 8.507059e+37
    %v3037 = vand.u32 %v2799, 2147483648
    %v3038 = vor.u32 1.1754944e-38, %v3037
    %v3039 = vsel %vm3036, %v3038, %v3034
    %v3040 = vmul.f32 %v2731, %v3039
    %v3041 = vrcp.pop %v2800
    %v3042 = vmul.f32 %v2800, %v3041
    %v3043 = vsub.f32 1.0, %v3042
    %v3044 = vmul.f32 %v3041, %v3043
    %v3045 = vadd.f32 %v3041, %v3044
    %vm3046 = vweird.f32 %v2800
    %vm3047 = vweird.f32 %v3041
    %vm3048 = vmor %vm3046, %vm3047
    %v3049 = vsel %vm3048, %v3041, %v3045
    %v3050 = vand.u32 2147483647, %v2800
    %vm3051 = vcmp.eq.f32.partialorder %v3050, 8.507059e+37
    %v3052 = vand.u32 %v2800, 2147483648
    %v3053 = vor.u32 1.1754944e-38, %v3052
    %v3054 = vsel %vm3051, %v3053, %v3049
    %v3055 = vmul.f32 %v2732, %v3054
    %vm3056 = vcmask 179200
    %v3057 = vsel %vm3056, %v2815, 0.0
    %v3058 = vsel %vm3056, %v2830, 0.0
    %v3059 = vadd.f32 %v3057, %v3058
    %v3060 = vsel %vm3056, %v2845, 0.0
    %v3061 = vadd.f32 %v3059, %v3060
    %v3062 = vsel %vm3056, %v2860, 0.0
    %v3063 = vadd.f32 %v3061, %v3062
    %v3064 = vsel %vm3056, %v2875, 0.0
    %v3065 = vadd.f32 %v3063, %v3064
    %v3066 = vsel %vm3056, %v2890, 0.0
    %v3067 = vadd.f32 %v3065, %v3066
    %v3068 = vsel %vm3056, %v2905, 0.0
    %v3069 = vadd.f32 %v3067, %v3068
    %v3070 = vsel %vm3056, %v2920, 0.0
    %v3071 = vadd.f32 %v3069, %v3070
    %v3072 = vsel %vm3056, %v2935, 0.0
    %v3073 = vadd.f32 %v3071, %v3072
    %v3074 = vsel %vm3056, %v2950, 0.0
    %v3075 = vadd.f32 %v3073, %v3074
    %v3076 = vsel %vm3056, %v2965, 0.0
    %v3077 = vadd.f32 %v3075, %v3076
    %v3078 = vsel %vm3056, %v2980, 0.0
    %v3079 = vadd.f32 %v3077, %v3078
    %v3080 = vsel %vm3056, %v2995, 0.0
    %v3081 = vadd.f32 %v3079, %v3080
    %v3082 = vsel %vm3056, %v3010, 0.0
    %v3083 = vadd.f32 %v3081, %v3082
    %v3084 = vsel %vm3056, %v3025, 0.0
    %v3085 = vadd.f32 %v3083, %v3084
    %v3086 = vsel %vm3056, %v3040, 0.0
    %v3087 = vadd.f32 %v3085, %v3086
    %vm3088 = vcmask 175104
    %v3089 = vsel %vm3088, %v3055, 0.0
    %v3090 = vadd.f32 %v3087, %v3089
    %3091 = vadd.xlane.f32.xlu0 %v3090
    %v3092 = vpop.xlane.xlu0 %3091
    %v3093 = vrot.slane %v3092, 4
    %v3094 = vadd.f32 %v3092, %v3093
    %v3095 = vrot.slane %v3094, 2
    %v3096 = vadd.f32 %v3094, %v3095
    %v3097 = vrot.slane %v3096, 1
    %v3098 = vadd.f32 %v3096, %v3097
    %s3099 = vtos %v3098
    %s3100 = smul.f32 %s3099, 0.00034435262
    %v3101 = vstv %s3100
    %vm3102 = vcmask 0
    %3103 = vst.msk [vmem:[#allocation25] sm:$0x1] %vm3102, %v3101
    %v3104 = vsel %vm3056, %v2440, 0.0
    %v3105 = vsel %vm3056, %v2455, 0.0
    %v3106 = vadd.f32 %v3104, %v3105
    %v3107 = vsel %vm3056, %v2470, 0.0
    %v3108 = vadd.f32 %v3106, %v3107
    %v3109 = vsel %vm3056, %v2485, 0.0
    %v3110 = vadd.f32 %v3108, %v3109
    %v3111 = vsel %vm3056, %v2500, 0.0
    %v3112 = vadd.f32 %v3110, %v3111
    %v3113 = vsel %vm3056, %v2515, 0.0
    %v3114 = vadd.f32 %v3112, %v3113
    %v3115 = vsel %vm3056, %v2530, 0.0
    %v3116 = vadd.f32 %v3114, %v3115
    %v3117 = vsel %vm3056, %v2545, 0.0
    %v3118 = vadd.f32 %v3116, %v3117
    %v3119 = vsel %vm3056, %v2560, 0.0
    %v3120 = vadd.f32 %v3118, %v3119
    %v3121 = vsel %vm3056, %v2575, 0.0
    %v3122 = vadd.f32 %v3120, %v3121
    %v3123 = vsel %vm3056, %v2590, 0.0
    %v3124 = vadd.f32 %v3122, %v3123
    %v3125 = vsel %vm3056, %v2605, 0.0
    %v3126 = vadd.f32 %v3124, %v3125
    %v3127 = vsel %vm3056, %v2620, 0.0
    %v3128 = vadd.f32 %v3126, %v3127
    %v3129 = vsel %vm3056, %v2635, 0.0
    %v3130 = vadd.f32 %v3128, %v3129
    %v3131 = vsel %vm3056, %v2650, 0.0
    %v3132 = vadd.f32 %v3130, %v3131
    %v3133 = vsel %vm3056, %v2665, 0.0
    %v3134 = vadd.f32 %v3132, %v3133
    %v3135 = vsel %vm3088, %v2680, 0.0
    %v3136 = vadd.f32 %v3134, %v3135
    %3137 = vadd.xlane.f32.xlu0 %v3136
    %v3138 = vpop.xlane.xlu0 %3137
    %v3139 = vrot.slane %v3138, 4
    %v3140 = vadd.f32 %v3138, %v3139
    %v3141 = vrot.slane %v3140, 2
    %v3142 = vadd.f32 %v3140, %v3141
    %v3143 = vrot.slane %v3142, 1
    %v3144 = vadd.f32 %v3142, %v3143
    %s3145 = vtos %v3144
    %s3146 = smul.f32 %s3145, 0.00034435262
    %v3147 = vstv %s3146
    %3148 = vst.msk [vmem:[#allocation26] sm:$0x1] %vm3102, %v3147
    %v3150 = vsel %vm393, %v776, 0
    %v3153 = vsel %vm393, %v779, 0
    %v3156 = vsel %vm393, %v782, 0
    %v3159 = vsel %vm393, %v785, 0
    %v3162 = vsel %vm393, %v788, 0
    %v3165 = vsel %vm393, %v791, 0
    %v3168 = vsel %vm393, %v794, 0
    %v3171 = vsel %vm393, %v797, 0
    %v3174 = vsel %vm393, %v800, 0
    %v3177 = vsel %vm393, %v803, 0
    %v3180 = vsel %vm393, %v806, 0
    %v3183 = vsel %vm393, %v809, 0
    %3185 = vmatpush.msra.mxu0 0.0
    %3186 = vmatpush.msra.mxu0 0.0
    %3187 = vmatpush.msra.mxu0 0.0
    %3188 = vmatpush.msra.mxu0 0.0
    %3189 = vmatpush.msra.mxu0 0.0
    %3190 = vmatpush.msra.mxu0 0.0
    %3191 = vmatpush.msra.mxu0 0.0
    %3192 = vmatpush.msra.mxu0 0.0
    %3193 = vmatpush.msra.mxu0 0.0
    %3194 = vmatpush.msra.mxu0 0.0
    %3195 = vmatpush.msra.mxu0 0.0
    %3196 = vmatpush.msra.mxu0 0.0
    %3197 = vmatpush.msra.mxu0 %v392
    %3198 = vmatpush.msra.mxu0 %v391
    %3199 = vmatpush.msra.mxu0 %v390
    %3200 = vmatpush.msra.mxu0 %v389
    %3201 = vmatmul.f32.gmra.mxu0 %v3150
    %v3202 = vpop.f32.mrf.mxu0
    %v3203 = vadd.f32 0.0, %v3202
    %3204 = vmatmul.f32.gmra.mxu0 %v3153
    %v3205 = vpop.f32.mrf.mxu0
    %v3206 = vadd.f32 0.0, %v3205
    %3207 = vmatmul.f32.gmra.mxu0 %v3156
    %v3208 = vpop.f32.mrf.mxu0
    %v3209 = vadd.f32 0.0, %v3208
    %3210 = vmatmul.f32.gmra.mxu0 %v3159
    %v3211 = vpop.f32.mrf.mxu0
    %v3212 = vadd.f32 0.0, %v3211
    %3213 = vmatmul.f32.gmra.mxu0 %v3162
    %v3214 = vpop.f32.mrf.mxu0
    %v3215 = vadd.f32 0.0, %v3214
    %3216 = vmatmul.f32.gmra.mxu0 %v3165
    %v3217 = vpop.f32.mrf.mxu0
    %v3218 = vadd.f32 0.0, %v3217
    %3219 = vmatmul.f32.gmra.mxu0 %v3168
    %v3220 = vpop.f32.mrf.mxu0
    %v3221 = vadd.f32 0.0, %v3220
    %3222 = vmatmul.f32.gmra.mxu0 %v3171
    %v3223 = vpop.f32.mrf.mxu0
    %v3224 = vadd.f32 0.0, %v3223
    %3225 = vmatmul.f32.gmra.mxu0 %v3174
    %v3226 = vpop.f32.mrf.mxu0
    %v3227 = vadd.f32 0.0, %v3226
    %3228 = vmatmul.f32.gmra.mxu0 %v3177
    %v3229 = vpop.f32.mrf.mxu0
    %v3230 = vadd.f32 0.0, %v3229
    %3231 = vmatmul.f32.gmra.mxu0 %v3180
    %v3232 = vpop.f32.mrf.mxu0
    %v3233 = vadd.f32 0.0, %v3232
    %3234 = vmatmul.f32.gmra.mxu0 %v3183
    %v3235 = vpop.f32.mrf.mxu0
    %v3236 = vadd.f32 0.0, %v3235
    %3237 = vdwg.mxu0
    %v3239 = vsel %vm393, %v984, 0
    %v3242 = vsel %vm393, %v987, 0
    %v3245 = vsel %vm393, %v990, 0
    %v3248 = vsel %vm393, %v993, 0
    %v3251 = vsel %vm393, %v996, 0
    %v3254 = vsel %vm393, %v999, 0
    %v3257 = vsel %vm393, %v1002, 0
    %v3260 = vsel %vm393, %v1005, 0
    %v3263 = vsel %vm393, %v1008, 0
    %v3266 = vsel %vm393, %v1011, 0
    %v3269 = vsel %vm393, %v1014, 0
    %v3272 = vsel %vm393, %v1017, 0
    %3274 = vmatpush.msra.mxu0 0.0
    %3275 = vmatpush.msra.mxu0 0.0
    %3276 = vmatpush.msra.mxu0 0.0
    %3277 = vmatpush.msra.mxu0 0.0
    %3278 = vmatpush.msra.mxu0 0.0
    %3279 = vmatpush.msra.mxu0 0.0
    %3280 = vmatpush.msra.mxu0 0.0
    %3281 = vmatpush.msra.mxu0 0.0
    %3282 = vmatpush.msra.mxu0 0.0
    %3283 = vmatpush.msra.mxu0 0.0
    %3284 = vmatpush.msra.mxu0 0.0
    %3285 = vmatpush.msra.mxu0 0.0
    %3286 = vmatpush.msra.mxu0 %v392
    %3287 = vmatpush.msra.mxu0 %v391
    %3288 = vmatpush.msra.mxu0 %v390
    %3289 = vmatpush.msra.mxu0 %v389
    %3290 = vmatmul.f32.gmra.mxu0 %v3239
    %v3291 = vpop.f32.mrf.mxu0
    %v3292 = vadd.f32 0.0, %v3291
    %3293 = vmatmul.f32.gmra.mxu0 %v3242
    %v3294 = vpop.f32.mrf.mxu0
    %v3295 = vadd.f32 0.0, %v3294
    %3296 = vmatmul.f32.gmra.mxu0 %v3245
    %v3297 = vpop.f32.mrf.mxu0
    %v3298 = vadd.f32 0.0, %v3297
    %3299 = vmatmul.f32.gmra.mxu0 %v3248
    %v3300 = vpop.f32.mrf.mxu0
    %v3301 = vadd.f32 0.0, %v3300
    %3302 = vmatmul.f32.gmra.mxu0 %v3251
    %v3303 = vpop.f32.mrf.mxu0
    %v3304 = vadd.f32 0.0, %v3303
    %3305 = vmatmul.f32.gmra.mxu0 %v3254
    %v3306 = vpop.f32.mrf.mxu0
    %v3307 = vadd.f32 0.0, %v3306
    %3308 = vmatmul.f32.gmra.mxu0 %v3257
    %v3309 = vpop.f32.mrf.mxu0
    %v3310 = vadd.f32 0.0, %v3309
    %3311 = vmatmul.f32.gmra.mxu0 %v3260
    %v3312 = vpop.f32.mrf.mxu0
    %v3313 = vadd.f32 0.0, %v3312
    %3314 = vmatmul.f32.gmra.mxu0 %v3263
    %v3315 = vpop.f32.mrf.mxu0
    %v3316 = vadd.f32 0.0, %v3315
    %3317 = vmatmul.f32.gmra.mxu0 %v3266
    %v3318 = vpop.f32.mrf.mxu0
    %v3319 = vadd.f32 0.0, %v3318
    %3320 = vmatmul.f32.gmra.mxu0 %v3269
    %v3321 = vpop.f32.mrf.mxu0
    %v3322 = vadd.f32 0.0, %v3321
    %3323 = vmatmul.f32.gmra.mxu0 %v3272
    %v3324 = vpop.f32.mrf.mxu0
    %v3325 = vadd.f32 0.0, %v3324
    %3326 = vdwg.mxu0
    %v3327 = vld [vmem:[#allocation11] sm:$0xff]
    %v3328 = vld [vmem:[#allocation11 + $0x8] sm:$0xff]
    %v3329 = vld [vmem:[#allocation11 + $0x10] sm:$0xff]
    %v3330 = vld [vmem:[#allocation11 + $0x18] sm:$0xff]
    %v3331 = vld [vmem:[#allocation11 + $0x20] sm:$0xff]
    %v3332 = vld [vmem:[#allocation11 + $0x28] sm:$0xff]
    %v3333 = vld [vmem:[#allocation11 + $0x30] sm:$0xff]
    %v3334 = vld [vmem:[#allocation11 + $0x38] sm:$0xff]
    %v3335 = vld [vmem:[#allocation11 + $0x40] sm:$0xff]
    %v3336 = vld [vmem:[#allocation11 + $0x48] sm:$0xff]
    %v3337 = vld [vmem:[#allocation11 + $0x50] sm:$0xff]
    %v3338 = vld [vmem:[#allocation13] sm:$0xff]
    %v3339 = vld [vmem:[#allocation13 + $0x8] sm:$0xff]
    %v3340 = vld [vmem:[#allocation14] sm:$0xff]
    %v3341 = vld [vmem:[#allocation14 + $0x8] sm:$0xff]
    %vm3342 = vcmask 130048
    %v3343 = vsel %vm3342, %v3203, -inf
    %v3344 = vsel %vm3342, %v3206, -inf
    %v3345 = vsel %vm3342, %v3209, -inf
    %v3346 = vsel %vm3342, %v3212, -inf
    %v3347 = vsel %vm3342, %v3215, -inf
    %v3348 = vmax.f32 %v3343, %v3347
    %v3349 = vsel %vm3342, %v3218, -inf
    %v3350 = vmax.f32 %v3344, %v3349
    %v3351 = vsel %vm3342, %v3221, -inf
    %v3352 = vmax.f32 %v3345, %v3351
    %v3353 = vsel %vm3342, %v3224, -inf
    %v3354 = vmax.f32 %v3346, %v3353
    %v3355 = vsel %vm3342, %v3227, -inf
    %v3356 = vmax.f32 %v3348, %v3355
    %v3357 = vsel %vm3342, %v3230, -inf
    %v3358 = vmax.f32 %v3350, %v3357
    %v3359 = vsel %vm3342, %v3233, -inf
    %v3360 = vmax.f32 %v3352, %v3359
    %v3361 = vsel %vm3342, %v3236, -inf
    %v3362 = vmax.f32 %v3354, %v3361
    %v3363 = vmax.f32 %v3356, %v3358
    %v3364 = vmax.f32 %v3360, %v3362
    %v3365 = vmax.f32 %v3363, %v3364
    %3366 = vmax.xlane.f32.xlu0 %v3365
    %v3367 = vpop.xlane.xlu0 %3366
    %v3368 = vrot.slane %v3367, 4
    %v3369 = vmax.f32 %v3367, %v3368
    %v3370 = vrot.slane %v3369, 2
    %v3371 = vmax.f32 %v3369, %v3370
    %v3372 = vrot.slane %v3371, 1
    %v3373 = vmax.f32 %v3371, %v3372
    %s3374 = vtos %v3373
    %p3375 = scmp.gt.f32.partialorder %s3374, 128.0
    %s3376 = scalar_select %p3375, 255.0, 1.0
    %v3377 = vsel %vm3342, %v3203, inf
    %v3378 = vsel %vm3342, %v3206, inf
    %v3379 = vsel %vm3342, %v3209, inf
    %v3380 = vsel %vm3342, %v3212, inf
    %v3381 = vsel %vm3342, %v3215, inf
    %v3382 = vmin.f32 %v3377, %v3381
    %v3383 = vsel %vm3342, %v3218, inf
    %v3384 = vmin.f32 %v3378, %v3383
    %v3385 = vsel %vm3342, %v3221, inf
    %v3386 = vmin.f32 %v3379, %v3385
    %v3387 = vsel %vm3342, %v3224, inf
    %v3388 = vmin.f32 %v3380, %v3387
    %v3389 = vsel %vm3342, %v3227, inf
    %v3390 = vmin.f32 %v3382, %v3389
    %v3391 = vsel %vm3342, %v3230, inf
    %v3392 = vmin.f32 %v3384, %v3391
    %v3393 = vsel %vm3342, %v3233, inf
    %v3394 = vmin.f32 %v3386, %v3393
    %v3395 = vsel %vm3342, %v3236, inf
    %v3396 = vmin.f32 %v3388, %v3395
    %v3397 = vmin.f32 %v3390, %v3392
    %v3398 = vmin.f32 %v3394, %v3396
    %v3399 = vmin.f32 %v3397, %v3398
    %3400 = vmin.xlane.f32.xlu0 %v3399
    %v3401 = vpop.xlane.xlu0 %3400
    %v3402 = vrot.slane %v3401, 4
    %v3403 = vmin.f32 %v3401, %v3402
    %v3404 = vrot.slane %v3403, 2
    %v3405 = vmin.f32 %v3403, %v3404
    %v3406 = vrot.slane %v3405, 1
    %v3407 = vmin.f32 %v3405, %v3406
    %s3408 = vtos %v3407
    %p3409 = scmp.lt.f32.partialorder %s3408, -0.5
    %s3410 = scalar_select %p3409, -1.0, 0.0
    %s3411 = ssub.f32 %s3376, %s3410
    %s3412 = smul.f32 %s3411, 0.01
    %s3413 = smul.f32 %s3412, %s3412
    %s3414 = smul.f32 %s3411, 0.03
    %s3415 = smul.f32 %s3414, %s3414
    %vm3416 = vcmask 785408
    %v3418 = vsel %vm3416, %v3327, 0
    %v3421 = vsel %vm3416, %v3328, 0
    %v3424 = vsel %vm3416, %v3329, 0
    %v3427 = vsel %vm3416, %v3330, 0
    %v3430 = vsel %vm3416, %v3331, 0
    %v3433 = vsel %vm3416, %v3332, 0
    %v3436 = vsel %vm3416, %v3333, 0
    %v3439 = vsel %vm3416, %v3334, 0
    %v3442 = vsel %vm3416, %v3335, 0
    %v3445 = vsel %vm3416, %v3336, 0
    %v3448 = vsel %vm3416, %v3337, 0
    %3450 = vmatpush.msra.mxu0 0.0
    %3451 = vmatpush.msra.mxu0 0.0
    %3452 = vmatpush.msra.mxu0 0.0
    %3453 = vmatpush.msra.mxu0 0.0
    %3454 = vmatpush.msra.mxu0 %v3236
    %3455 = vmatpush.msra.mxu0 %v3233
    %3456 = vmatpush.msra.mxu0 %v3230
    %3457 = vmatpush.msra.mxu0 %v3227
    %3458 = vmatpush.msra.mxu0 %v3224
    %3459 = vmatpush.msra.mxu0 %v3221
    %3460 = vmatpush.msra.mxu0 %v3218
    %3461 = vmatpush.msra.mxu0 %v3215
    %3462 = vmatpush.msra.mxu0 %v3212
    %3463 = vmatpush.msra.mxu0 %v3209
    %3464 = vmatpush.msra.mxu0 %v3206
    %3465 = vmatpush.msra.mxu0 %v3203
    %3466 = vmatmul.f32.gmra.mxu0 %v3418
    %v3467 = vpop.f32.mrf.mxu0
    %v3468 = vadd.f32 0.0, %v3467
    %3469 = vmatmul.f32.gmra.mxu0 %v3421
    %v3470 = vpop.f32.mrf.mxu0
    %v3471 = vadd.f32 0.0, %v3470
    %3472 = vmatmul.f32.gmra.mxu0 %v3424
    %v3473 = vpop.f32.mrf.mxu0
    %v3474 = vadd.f32 0.0, %v3473
    %3475 = vmatmul.f32.gmra.mxu0 %v3427
    %v3476 = vpop.f32.mrf.mxu0
    %v3477 = vadd.f32 0.0, %v3476
    %3478 = vmatmul.f32.gmra.mxu0 %v3430
    %v3479 = vpop.f32.mrf.mxu0
    %v3480 = vadd.f32 0.0, %v3479
    %3481 = vmatmul.f32.gmra.mxu0 %v3433
    %v3482 = vpop.f32.mrf.mxu0
    %v3483 = vadd.f32 0.0, %v3482
    %3484 = vmatmul.f32.gmra.mxu0 %v3436
    %v3485 = vpop.f32.mrf.mxu0
    %v3486 = vadd.f32 0.0, %v3485
    %3487 = vmatmul.f32.gmra.mxu0 %v3439
    %v3488 = vpop.f32.mrf.mxu0
    %v3489 = vadd.f32 0.0, %v3488
    %3490 = vmatmul.f32.gmra.mxu0 %v3442
    %v3491 = vpop.f32.mrf.mxu0
    %v3492 = vadd.f32 0.0, %v3491
    %3493 = vmatmul.f32.gmra.mxu0 %v3445
    %v3494 = vpop.f32.mrf.mxu0
    %v3495 = vadd.f32 0.0, %v3494
    %3496 = vmatmul.f32.gmra.mxu0 %v3448
    %v3497 = vpop.f32.mrf.mxu0
    %v3498 = vadd.f32 0.0, %v3497
    %3499 = vdwg.mxu0
    %3500 = vmatpush.msra.mxu0 0.0
    %3501 = vmatpush.msra.mxu0 0.0
    %3502 = vmatpush.msra.mxu0 0.0
    %3503 = vmatpush.msra.mxu0 0.0
    %3504 = vmatpush.msra.mxu0 %v3325
    %3505 = vmatpush.msra.mxu0 %v3322
    %3506 = vmatpush.msra.mxu0 %v3319
    %3507 = vmatpush.msra.mxu0 %v3316
    %3508 = vmatpush.msra.mxu0 %v3313
    %3509 = vmatpush.msra.mxu0 %v3310
    %3510 = vmatpush.msra.mxu0 %v3307
    %3511 = vmatpush.msra.mxu0 %v3304
    %3512 = vmatpush.msra.mxu0 %v3301
    %3513 = vmatpush.msra.mxu0 %v3298
    %3514 = vmatpush.msra.mxu0 %v3295
    %3515 = vmatpush.msra.mxu0 %v3292
    %3516 = vmatmul.f32.gmra.mxu0 %v3418
    %v3517 = vpop.f32.mrf.mxu0
    %v3518 = vadd.f32 0.0, %v3517
    %3519 = vmatmul.f32.gmra.mxu0 %v3421
    %v3520 = vpop.f32.mrf.mxu0
    %v3521 = vadd.f32 0.0, %v3520
    %3522 = vmatmul.f32.gmra.mxu0 %v3424
    %v3523 = vpop.f32.mrf.mxu0
    %v3524 = vadd.f32 0.0, %v3523
    %3525 = vmatmul.f32.gmra.mxu0 %v3427
    %v3526 = vpop.f32.mrf.mxu0
    %v3527 = vadd.f32 0.0, %v3526
    %3528 = vmatmul.f32.gmra.mxu0 %v3430
    %v3529 = vpop.f32.mrf.mxu0
    %v3530 = vadd.f32 0.0, %v3529
    %3531 = vmatmul.f32.gmra.mxu0 %v3433
    %v3532 = vpop.f32.mrf.mxu0
    %v3533 = vadd.f32 0.0, %v3532
    %3534 = vmatmul.f32.gmra.mxu0 %v3436
    %v3535 = vpop.f32.mrf.mxu0
    %v3536 = vadd.f32 0.0, %v3535
    %3537 = vmatmul.f32.gmra.mxu0 %v3439
    %v3538 = vpop.f32.mrf.mxu0
    %v3539 = vadd.f32 0.0, %v3538
    %3540 = vmatmul.f32.gmra.mxu0 %v3442
    %v3541 = vpop.f32.mrf.mxu0
    %v3542 = vadd.f32 0.0, %v3541
    %3543 = vmatmul.f32.gmra.mxu0 %v3445
    %v3544 = vpop.f32.mrf.mxu0
    %v3545 = vadd.f32 0.0, %v3544
    %3546 = vmatmul.f32.gmra.mxu0 %v3448
    %v3547 = vpop.f32.mrf.mxu0
    %v3548 = vadd.f32 0.0, %v3547
    %3549 = vdwg.mxu0
    %v3550 = vmul.f32 %v3203, %v3203
    %v3551 = vmul.f32 %v3206, %v3206
    %v3552 = vmul.f32 %v3209, %v3209
    %v3553 = vmul.f32 %v3212, %v3212
    %v3554 = vmul.f32 %v3215, %v3215
    %v3555 = vmul.f32 %v3218, %v3218
    %v3556 = vmul.f32 %v3221, %v3221
    %v3557 = vmul.f32 %v3224, %v3224
    %v3558 = vmul.f32 %v3227, %v3227
    %v3559 = vmul.f32 %v3230, %v3230
    %v3560 = vmul.f32 %v3233, %v3233
    %v3561 = vmul.f32 %v3236, %v3236
    %3562 = vmatpush.msra.mxu0 0.0
    %3563 = vmatpush.msra.mxu0 0.0
    %3564 = vmatpush.msra.mxu0 0.0
    %3565 = vmatpush.msra.mxu0 0.0
    %3566 = vmatpush.msra.mxu0 %v3561
    %3567 = vmatpush.msra.mxu0 %v3560
    %3568 = vmatpush.msra.mxu0 %v3559
    %3569 = vmatpush.msra.mxu0 %v3558
    %3570 = vmatpush.msra.mxu0 %v3557
    %3571 = vmatpush.msra.mxu0 %v3556
    %3572 = vmatpush.msra.mxu0 %v3555
    %3573 = vmatpush.msra.mxu0 %v3554
    %3574 = vmatpush.msra.mxu0 %v3553
    %3575 = vmatpush.msra.mxu0 %v3552
    %3576 = vmatpush.msra.mxu0 %v3551
    %3577 = vmatpush.msra.mxu0 %v3550
    %3578 = vmatmul.f32.gmra.mxu0 %v3418
    %v3579 = vpop.f32.mrf.mxu0
    %v3580 = vadd.f32 0.0, %v3579
    %3581 = vmatmul.f32.gmra.mxu0 %v3421
    %v3582 = vpop.f32.mrf.mxu0
    %v3583 = vadd.f32 0.0, %v3582
    %3584 = vmatmul.f32.gmra.mxu0 %v3424
    %v3585 = vpop.f32.mrf.mxu0
    %v3586 = vadd.f32 0.0, %v3585
    %3587 = vmatmul.f32.gmra.mxu0 %v3427
    %v3588 = vpop.f32.mrf.mxu0
    %v3589 = vadd.f32 0.0, %v3588
    %3590 = vmatmul.f32.gmra.mxu0 %v3430
    %v3591 = vpop.f32.mrf.mxu0
    %v3592 = vadd.f32 0.0, %v3591
    %3593 = vmatmul.f32.gmra.mxu0 %v3433
    %v3594 = vpop.f32.mrf.mxu0
    %3595 = vmatmul.f32.gmra.mxu0 %v3436
    %v3596 = vpop.f32.mrf.mxu0
    %3597 = vmatmul.f32.gmra.mxu0 %v3439
    %v3598 = vpop.f32.mrf.mxu0
    %3599 = vmatmul.f32.gmra.mxu0 %v3442
    %v3600 = vpop.f32.mrf.mxu0
    %3601 = vmatmul.f32.gmra.mxu0 %v3445
    %v3602 = vpop.f32.mrf.mxu0
    %3603 = vmatmul.f32.gmra.mxu0 %v3448
    %v3604 = vpop.f32.mrf.mxu0
    %3605 = vdwg.mxu0
    %v3606 = vmul.f32 %v3292, %v3292
    %v3607 = vmul.f32 %v3295, %v3295
    %v3608 = vmul.f32 %v3298, %v3298
    %v3609 = vmul.f32 %v3301, %v3301
    %v3610 = vmul.f32 %v3304, %v3304
    %v3611 = vmul.f32 %v3307, %v3307
    %v3612 = vmul.f32 %v3310, %v3310
    %v3613 = vmul.f32 %v3313, %v3313
    %v3614 = vmul.f32 %v3316, %v3316
    %v3615 = vmul.f32 %v3319, %v3319
    %v3616 = vmul.f32 %v3322, %v3322
    %v3617 = vmul.f32 %v3325, %v3325
    %3618 = vmatpush.msra.mxu0 0.0
    %3619 = vmatpush.msra.mxu0 0.0
    %3620 = vmatpush.msra.mxu0 0.0
    %3621 = vmatpush.msra.mxu0 0.0
    %3622 = vmatpush.msra.mxu0 %v3617
    %3623 = vmatpush.msra.mxu0 %v3616
    %3624 = vmatpush.msra.mxu0 %v3615
    %3625 = vmatpush.msra.mxu0 %v3614
    %3626 = vmatpush.msra.mxu0 %v3613
    %3627 = vmatpush.msra.mxu0 %v3612
    %3628 = vmatpush.msra.mxu0 %v3611
    %3629 = vmatpush.msra.mxu0 %v3610
    %3630 = vmatpush.msra.mxu0 %v3609
    %3631 = vmatpush.msra.mxu0 %v3608
    %3632 = vmatpush.msra.mxu0 %v3607
    %3633 = vmatpush.msra.mxu0 %v3606
    %3634 = vmatmul.f32.gmra.mxu0 %v3418
    %v3635 = vpop.f32.mrf.mxu0
    %v3636 = vadd.f32 0.0, %v3635
    %3637 = vmatmul.f32.gmra.mxu0 %v3421
    %v3638 = vpop.f32.mrf.mxu0
    %v3639 = vadd.f32 0.0, %v3638
    %3640 = vmatmul.f32.gmra.mxu0 %v3424
    %v3641 = vpop.f32.mrf.mxu0
    %v3642 = vadd.f32 0.0, %v3641
    %3643 = vmatmul.f32.gmra.mxu0 %v3427
    %v3644 = vpop.f32.mrf.mxu0
    %v3645 = vadd.f32 0.0, %v3644
    %3646 = vmatmul.f32.gmra.mxu0 %v3430
    %v3647 = vpop.f32.mrf.mxu0
    %v3648 = vadd.f32 0.0, %v3647
    %3649 = vmatmul.f32.gmra.mxu0 %v3433
    %v3650 = vpop.f32.mrf.mxu0
    %3651 = vmatmul.f32.gmra.mxu0 %v3436
    %v3652 = vpop.f32.mrf.mxu0
    %3653 = vmatmul.f32.gmra.mxu0 %v3439
    %v3654 = vpop.f32.mrf.mxu0
    %3655 = vmatmul.f32.gmra.mxu0 %v3442
    %v3656 = vpop.f32.mrf.mxu0
    %3657 = vmatmul.f32.gmra.mxu0 %v3445
    %v3658 = vpop.f32.mrf.mxu0
    %3659 = vmatmul.f32.gmra.mxu0 %v3448
    %v3660 = vpop.f32.mrf.mxu0
    %3661 = vdwg.mxu0
    %v3662 = vmul.f32 %v3203, %v3292
    %v3663 = vmul.f32 %v3206, %v3295
    %v3664 = vmul.f32 %v3209, %v3298
    %v3665 = vmul.f32 %v3212, %v3301
    %v3666 = vmul.f32 %v3215, %v3304
    %v3667 = vmul.f32 %v3218, %v3307
    %v3668 = vmul.f32 %v3221, %v3310
    %v3669 = vmul.f32 %v3224, %v3313
    %v3670 = vmul.f32 %v3227, %v3316
    %v3671 = vmul.f32 %v3230, %v3319
    %v3672 = vmul.f32 %v3233, %v3322
    %v3673 = vmul.f32 %v3236, %v3325
    %3674 = vmatpush.msra.mxu0 0.0
    %3675 = vmatpush.msra.mxu0 0.0
    %3676 = vmatpush.msra.mxu0 0.0
    %3677 = vmatpush.msra.mxu0 0.0
    %3678 = vmatpush.msra.mxu0 %v3673
    %3679 = vmatpush.msra.mxu0 %v3672
    %3680 = vmatpush.msra.mxu0 %v3671
    %3681 = vmatpush.msra.mxu0 %v3670
    %3682 = vmatpush.msra.mxu0 %v3669
    %3683 = vmatpush.msra.mxu0 %v3668
    %3684 = vmatpush.msra.mxu0 %v3667
    %3685 = vmatpush.msra.mxu0 %v3666
    %3686 = vmatpush.msra.mxu0 %v3665
    %3687 = vmatpush.msra.mxu0 %v3664
    %3688 = vmatpush.msra.mxu0 %v3663
    %3689 = vmatpush.msra.mxu0 %v3662
    %3690 = vmatmul.f32.gmra.mxu0 %v3418
    %v3691 = vpop.f32.mrf.mxu0
    %v3692 = vadd.f32 0.0, %v3691
    %3693 = vmatmul.f32.gmra.mxu0 %v3421
    %v3694 = vpop.f32.mrf.mxu0
    %v3695 = vadd.f32 0.0, %v3694
    %3696 = vmatmul.f32.gmra.mxu0 %v3424
    %v3697 = vpop.f32.mrf.mxu0
    %v3698 = vadd.f32 0.0, %v3697
    %3699 = vmatmul.f32.gmra.mxu0 %v3427
    %v3700 = vpop.f32.mrf.mxu0
    %v3701 = vadd.f32 0.0, %v3700
    %3702 = vmatmul.f32.gmra.mxu0 %v3430
    %v3703 = vpop.f32.mrf.mxu0
    %v3704 = vadd.f32 0.0, %v3703
    %3705 = vmatmul.f32.gmra.mxu0 %v3433
    %v3706 = vpop.f32.mrf.mxu0
    %3707 = vmatmul.f32.gmra.mxu0 %v3436
    %v3708 = vpop.f32.mrf.mxu0
    %3709 = vmatmul.f32.gmra.mxu0 %v3439
    %v3710 = vpop.f32.mrf.mxu0
    %3711 = vmatmul.f32.gmra.mxu0 %v3442
    %v3712 = vpop.f32.mrf.mxu0
    %3713 = vmatmul.f32.gmra.mxu0 %v3445
    %v3714 = vpop.f32.mrf.mxu0
    %3715 = vmatmul.f32.gmra.mxu0 %v3448
    %v3716 = vpop.f32.mrf.mxu0
    %3717 = vdwg.mxu0
    %v3719 = vsel %vm3342, %v3468, 0
    %v3722 = vsel %vm3342, %v3471, 0
    %v3725 = vsel %vm3342, %v3474, 0
    %v3728 = vsel %vm3342, %v3477, 0
    %v3731 = vsel %vm3342, %v3480, 0
    %3733 = vmatpush.msra.mxu0 0.0
    %3734 = vmatpush.msra.mxu0 0.0
    %3735 = vmatpush.msra.mxu0 0.0
    %3736 = vmatpush.msra.mxu0 0.0
    %3737 = vmatpush.msra.mxu0 0.0
    %3738 = vmatpush.msra.mxu0 0.0
    %3739 = vmatpush.msra.mxu0 0.0
    %3740 = vmatpush.msra.mxu0 0.0
    %3741 = vmatpush.msra.mxu0 0.0
    %3742 = vmatpush.msra.mxu0 0.0
    %3743 = vmatpush.msra.mxu0 0.0
    %3744 = vmatpush.msra.mxu0 0.0
    %3745 = vmatpush.msra.mxu0 0.0
    %3746 = vmatpush.msra.mxu0 0.0
    %3747 = vmatpush.msra.mxu0 %v3339
    %3748 = vmatpush.msra.mxu0 %v3338
    %3749 = vmatmul.f32.gmra.mxu0 %v3719
    %v3750 = vpop.f32.mrf.mxu0
    %v3751 = vadd.f32 0.0, %v3750
    %3752 = vmatmul.f32.gmra.mxu0 %v3722
    %v3753 = vpop.f32.mrf.mxu0
    %v3754 = vadd.f32 0.0, %v3753
    %3755 = vmatmul.f32.gmra.mxu0 %v3725
    %v3756 = vpop.f32.mrf.mxu0
    %v3757 = vadd.f32 0.0, %v3756
    %3758 = vmatmul.f32.gmra.mxu0 %v3728
    %v3759 = vpop.f32.mrf.mxu0
    %v3760 = vadd.f32 0.0, %v3759
    %3761 = vmatmul.f32.gmra.mxu0 %v3731
    %v3762 = vpop.f32.mrf.mxu0
    %v3763 = vadd.f32 0.0, %v3762
    %3764 = vdwg.mxu0
    %v3766 = vsel %vm3342, %v3518, 0
    %v3769 = vsel %vm3342, %v3521, 0
    %v3772 = vsel %vm3342, %v3524, 0
    %v3775 = vsel %vm3342, %v3527, 0
    %v3778 = vsel %vm3342, %v3530, 0
    %3780 = vmatpush.msra.mxu0 0.0
    %3781 = vmatpush.msra.mxu0 0.0
    %3782 = vmatpush.msra.mxu0 0.0
    %3783 = vmatpush.msra.mxu0 0.0
    %3784 = vmatpush.msra.mxu0 0.0
    %3785 = vmatpush.msra.mxu0 0.0
    %3786 = vmatpush.msra.mxu0 0.0
    %3787 = vmatpush.msra.mxu0 0.0
    %3788 = vmatpush.msra.mxu0 0.0
    %3789 = vmatpush.msra.mxu0 0.0
    %3790 = vmatpush.msra.mxu0 0.0
    %3791 = vmatpush.msra.mxu0 0.0
    %3792 = vmatpush.msra.mxu0 0.0
    %3793 = vmatpush.msra.mxu0 0.0
    %3794 = vmatpush.msra.mxu0 %v3339
    %3795 = vmatpush.msra.mxu0 %v3338
    %3796 = vmatmul.f32.gmra.mxu0 %v3766
    %v3797 = vpop.f32.mrf.mxu0
    %v3798 = vadd.f32 0.0, %v3797
    %3799 = vmatmul.f32.gmra.mxu0 %v3769
    %v3800 = vpop.f32.mrf.mxu0
    %v3801 = vadd.f32 0.0, %v3800
    %3802 = vmatmul.f32.gmra.mxu0 %v3772
    %v3803 = vpop.f32.mrf.mxu0
    %v3804 = vadd.f32 0.0, %v3803
    %3805 = vmatmul.f32.gmra.mxu0 %v3775
    %v3806 = vpop.f32.mrf.mxu0
    %v3807 = vadd.f32 0.0, %v3806
    %3808 = vmatmul.f32.gmra.mxu0 %v3778
    %v3809 = vpop.f32.mrf.mxu0
    %v3810 = vadd.f32 0.0, %v3809
    %3811 = vdwg.mxu0
    %v3813 = vsel %vm3342, %v3580, 0
    %v3816 = vsel %vm3342, %v3583, 0
    %v3819 = vsel %vm3342, %v3586, 0
    %v3822 = vsel %vm3342, %v3589, 0
    %v3825 = vsel %vm3342, %v3592, 0
    %3827 = vmatpush.msra.mxu0 0.0
    %3828 = vmatpush.msra.mxu0 0.0
    %3829 = vmatpush.msra.mxu0 0.0
    %3830 = vmatpush.msra.mxu0 0.0
    %3831 = vmatpush.msra.mxu0 0.0
    %3832 = vmatpush.msra.mxu0 0.0
    %3833 = vmatpush.msra.mxu0 0.0
    %3834 = vmatpush.msra.mxu0 0.0
    %3835 = vmatpush.msra.mxu0 0.0
    %3836 = vmatpush.msra.mxu0 0.0
    %3837 = vmatpush.msra.mxu0 0.0
    %3838 = vmatpush.msra.mxu0 0.0
    %3839 = vmatpush.msra.mxu0 0.0
    %3840 = vmatpush.msra.mxu0 0.0
    %3841 = vmatpush.msra.mxu0 %v3339
    %3842 = vmatpush.msra.mxu0 %v3338
    %3843 = vmatmul.f32.gmra.mxu0 %v3813
    %v3844 = vpop.f32.mrf.mxu0
    %v3845 = vadd.f32 0.0, %v3844
    %3846 = vmatmul.f32.gmra.mxu0 %v3816
    %v3847 = vpop.f32.mrf.mxu0
    %v3848 = vadd.f32 0.0, %v3847
    %3849 = vmatmul.f32.gmra.mxu0 %v3819
    %v3850 = vpop.f32.mrf.mxu0
    %v3851 = vadd.f32 0.0, %v3850
    %3852 = vmatmul.f32.gmra.mxu0 %v3822
    %v3853 = vpop.f32.mrf.mxu0
    %v3854 = vadd.f32 0.0, %v3853
    %3855 = vmatmul.f32.gmra.mxu0 %v3825
    %v3856 = vpop.f32.mrf.mxu0
    %v3857 = vadd.f32 0.0, %v3856
    %3858 = vdwg.mxu0
    %v3860 = vsel %vm3342, %v3636, 0
    %v3863 = vsel %vm3342, %v3639, 0
    %v3866 = vsel %vm3342, %v3642, 0
    %v3869 = vsel %vm3342, %v3645, 0
    %v3872 = vsel %vm3342, %v3648, 0
    %3874 = vmatpush.msra.mxu0 0.0
    %3875 = vmatpush.msra.mxu0 0.0
    %3876 = vmatpush.msra.mxu0 0.0
    %3877 = vmatpush.msra.mxu0 0.0
    %3878 = vmatpush.msra.mxu0 0.0
    %3879 = vmatpush.msra.mxu0 0.0
    %3880 = vmatpush.msra.mxu0 0.0
    %3881 = vmatpush.msra.mxu0 0.0
    %3882 = vmatpush.msra.mxu0 0.0
    %3883 = vmatpush.msra.mxu0 0.0
    %3884 = vmatpush.msra.mxu0 0.0
    %3885 = vmatpush.msra.mxu0 0.0
    %3886 = vmatpush.msra.mxu0 0.0
    %3887 = vmatpush.msra.mxu0 0.0
    %3888 = vmatpush.msra.mxu0 %v3339
    %3889 = vmatpush.msra.mxu0 %v3338
    %3890 = vmatmul.f32.gmra.mxu0 %v3860
    %v3891 = vpop.f32.mrf.mxu0
    %v3892 = vadd.f32 0.0, %v3891
    %3893 = vmatmul.f32.gmra.mxu0 %v3863
    %v3894 = vpop.f32.mrf.mxu0
    %v3895 = vadd.f32 0.0, %v3894
    %3896 = vmatmul.f32.gmra.mxu0 %v3866
    %v3897 = vpop.f32.mrf.mxu0
    %v3898 = vadd.f32 0.0, %v3897
    %3899 = vmatmul.f32.gmra.mxu0 %v3869
    %v3900 = vpop.f32.mrf.mxu0
    %v3901 = vadd.f32 0.0, %v3900
    %3902 = vmatmul.f32.gmra.mxu0 %v3872
    %v3903 = vpop.f32.mrf.mxu0
    %v3904 = vadd.f32 0.0, %v3903
    %3905 = vdwg.mxu0
    %v3907 = vsel %vm3342, %v3692, 0
    %v3910 = vsel %vm3342, %v3695, 0
    %v3913 = vsel %vm3342, %v3698, 0
    %v3916 = vsel %vm3342, %v3701, 0
    %v3919 = vsel %vm3342, %v3704, 0
    %3921 = vmatpush.msra.mxu0 0.0
    %3922 = vmatpush.msra.mxu0 0.0
    %3923 = vmatpush.msra.mxu0 0.0
    %3924 = vmatpush.msra.mxu0 0.0
    %3925 = vmatpush.msra.mxu0 0.0
    %3926 = vmatpush.msra.mxu0 0.0
    %3927 = vmatpush.msra.mxu0 0.0
    %3928 = vmatpush.msra.mxu0 0.0
    %3929 = vmatpush.msra.mxu0 0.0
    %3930 = vmatpush.msra.mxu0 0.0
    %3931 = vmatpush.msra.mxu0 0.0
    %3932 = vmatpush.msra.mxu0 0.0
    %3933 = vmatpush.msra.mxu0 0.0
    %3934 = vmatpush.msra.mxu0 0.0
    %3935 = vmatpush.msra.mxu0 %v3339
    %3936 = vmatpush.msra.mxu0 %v3338
    %3937 = vmatmul.f32.gmra.mxu0 %v3907
    %v3938 = vpop.f32.mrf.mxu0
    %v3939 = vadd.f32 0.0, %v3938
    %3940 = vmatmul.f32.gmra.mxu0 %v3910
    %v3941 = vpop.f32.mrf.mxu0
    %v3942 = vadd.f32 0.0, %v3941
    %3943 = vmatmul.f32.gmra.mxu0 %v3913
    %v3944 = vpop.f32.mrf.mxu0
    %v3945 = vadd.f32 0.0, %v3944
    %3946 = vmatmul.f32.gmra.mxu0 %v3916
    %v3947 = vpop.f32.mrf.mxu0
    %v3948 = vadd.f32 0.0, %v3947
    %3949 = vmatmul.f32.gmra.mxu0 %v3919
    %v3950 = vpop.f32.mrf.mxu0
    %v3951 = vadd.f32 0.0, %v3950
    %3952 = vdwg.mxu0
    %v3953 = vmul.f32 %v3751, %v3751
    %v3954 = vmul.f32 %v3754, %v3754
    %v3955 = vmul.f32 %v3757, %v3757
    %v3956 = vmul.f32 %v3760, %v3760
    %v3957 = vmul.f32 %v3763, %v3763
    %v3958 = vmul.f32 %v3798, %v3798
    %v3959 = vmul.f32 %v3801, %v3801
    %v3960 = vmul.f32 %v3804, %v3804
    %v3961 = vmul.f32 %v3807, %v3807
    %v3962 = vmul.f32 %v3810, %v3810
    %v3963 = vmul.f32 %v3751, %v3798
    %v3964 = vmul.f32 %v3754, %v3801
    %v3965 = vmul.f32 %v3757, %v3804
    %v3966 = vmul.f32 %v3760, %v3807
    %v3967 = vmul.f32 %v3763, %v3810
    %v3968 = vsub.f32 %v3845, %v3953
    %v3969 = vsub.f32 %v3848, %v3954
    %v3970 = vsub.f32 %v3851, %v3955
    %v3971 = vsub.f32 %v3854, %v3956
    %v3972 = vsub.f32 %v3857, %v3957
    %v3973 = vsub.f32 %v3892, %v3958
    %v3974 = vsub.f32 %v3895, %v3959
    %v3975 = vsub.f32 %v3898, %v3960
    %v3976 = vsub.f32 %v3901, %v3961
    %v3977 = vsub.f32 %v3904, %v3962
    %v3978 = vsub.f32 %v3939, %v3963
    %v3979 = vsub.f32 %v3942, %v3964
    %v3980 = vsub.f32 %v3945, %v3965
    %v3981 = vsub.f32 %v3948, %v3966
    %v3982 = vsub.f32 %v3951, %v3967
    %v3983 = vmul.f32 %v3978, 2.0
    %v3984 = vmul.f32 %v3979, 2.0
    %v3985 = vmul.f32 %v3980, 2.0
    %v3986 = vmul.f32 %v3981, 2.0
    %v3987 = vmul.f32 %v3982, 2.0
    %v3988 = vstv %s3415
    %v3989 = vadd.f32 %v3983, %v3988
    %v3990 = vadd.f32 %v3984, %v3988
    %v3991 = vadd.f32 %v3985, %v3988
    %v3992 = vadd.f32 %v3986, %v3988
    %v3993 = vadd.f32 %v3987, %v3988
    %v3994 = vadd.f32 %v3968, %v3973
    %v3995 = vadd.f32 %v3969, %v3974
    %v3996 = vadd.f32 %v3970, %v3975
    %v3997 = vadd.f32 %v3971, %v3976
    %v3998 = vadd.f32 %v3972, %v3977
    %v3999 = vadd.f32 %v3994, %v3988
    %v4000 = vadd.f32 %v3995, %v3988
    %v4001 = vadd.f32 %v3996, %v3988
    %v4002 = vadd.f32 %v3997, %v3988
    %v4003 = vadd.f32 %v3998, %v3988
    %v4004 = vadd.f32 %v3999, 1e-08
    %v4005 = vadd.f32 %v4000, 1e-08
    %v4006 = vadd.f32 %v4001, 1e-08
    %v4007 = vadd.f32 %v4002, 1e-08
    %v4008 = vadd.f32 %v4003, 1e-08
    %v4009 = vrcp.pop %v4004
    %v4010 = vmul.f32 %v4004, %v4009
    %v4011 = vsub.f32 1.0, %v4010
    %v4012 = vmul.f32 %v4009, %v4011
    %v4013 = vadd.f32 %v4009, %v4012
    %vm4014 = vweird.f32 %v4004
    %vm4015 = vweird.f32 %v4009
    %vm4016 = vmor %vm4014, %vm4015
    %v4017 = vsel %vm4016, %v4009, %v4013
    %v4018 = vand.u32 2147483647, %v4004
    %vm4019 = vcmp.eq.f32.partialorder %v4018, 8.507059e+37
    %v4020 = vand.u32 %v4004, 2147483648
    %v4021 = vor.u32 1.1754944e-38, %v4020
    %v4022 = vsel %vm4019, %v4021, %v4017
    %v4023 = vmul.f32 %v3989, %v4022
    %v4024 = vrcp.pop %v4005
    %v4025 = vmul.f32 %v4005, %v4024
    %v4026 = vsub.f32 1.0, %v4025
    %v4027 = vmul.f32 %v4024, %v4026
    %v4028 = vadd.f32 %v4024, %v4027
    %vm4029 = vweird.f32 %v4005
    %vm4030 = vweird.f32 %v4024
    %vm4031 = vmor %vm4029, %vm4030
    %v4032 = vsel %vm4031, %v4024, %v4028
    %v4033 = vand.u32 2147483647, %v4005
    %vm4034 = vcmp.eq.f32.partialorder %v4033, 8.507059e+37
    %v4035 = vand.u32 %v4005, 2147483648
    %v4036 = vor.u32 1.1754944e-38, %v4035
    %v4037 = vsel %vm4034, %v4036, %v4032
    %v4038 = vmul.f32 %v3990, %v4037
    %v4039 = vrcp.pop %v4006
    %v4040 = vmul.f32 %v4006, %v4039
    %v4041 = vsub.f32 1.0, %v4040
    %v4042 = vmul.f32 %v4039, %v4041
    %v4043 = vadd.f32 %v4039, %v4042
    %vm4044 = vweird.f32 %v4006
    %vm4045 = vweird.f32 %v4039
    %vm4046 = vmor %vm4044, %vm4045
    %v4047 = vsel %vm4046, %v4039, %v4043
    %v4048 = vand.u32 2147483647, %v4006
    %vm4049 = vcmp.eq.f32.partialorder %v4048, 8.507059e+37
    %v4050 = vand.u32 %v4006, 2147483648
    %v4051 = vor.u32 1.1754944e-38, %v4050
    %v4052 = vsel %vm4049, %v4051, %v4047
    %v4053 = vmul.f32 %v3991, %v4052
    %v4054 = vrcp.pop %v4007
    %v4055 = vmul.f32 %v4007, %v4054
    %v4056 = vsub.f32 1.0, %v4055
    %v4057 = vmul.f32 %v4054, %v4056
    %v4058 = vadd.f32 %v4054, %v4057
    %vm4059 = vweird.f32 %v4007
    %vm4060 = vweird.f32 %v4054
    %vm4061 = vmor %vm4059, %vm4060
    %v4062 = vsel %vm4061, %v4054, %v4058
    %v4063 = vand.u32 2147483647, %v4007
    %vm4064 = vcmp.eq.f32.partialorder %v4063, 8.507059e+37
    %v4065 = vand.u32 %v4007, 2147483648
    %v4066 = vor.u32 1.1754944e-38, %v4065
    %v4067 = vsel %vm4064, %v4066, %v4062
    %v4068 = vmul.f32 %v3992, %v4067
    %v4069 = vrcp.pop %v4008
    %v4070 = vmul.f32 %v4008, %v4069
    %v4071 = vsub.f32 1.0, %v4070
    %v4072 = vmul.f32 %v4069, %v4071
    %v4073 = vadd.f32 %v4069, %v4072
    %vm4074 = vweird.f32 %v4008
    %vm4075 = vweird.f32 %v4069
    %vm4076 = vmor %vm4074, %vm4075
    %v4077 = vsel %vm4076, %v4069, %v4073
    %v4078 = vand.u32 2147483647, %v4008
    %vm4079 = vcmp.eq.f32.partialorder %v4078, 8.507059e+37
    %v4080 = vand.u32 %v4008, 2147483648
    %v4081 = vor.u32 1.1754944e-38, %v4080
    %v4082 = vsel %vm4079, %v4081, %v4077
    %v4083 = vmul.f32 %v3993, %v4082
    %v4084 = vmul.f32 %v3963, 2.0
    %v4085 = vmul.f32 %v3964, 2.0
    %v4086 = vmul.f32 %v3965, 2.0
    %v4087 = vmul.f32 %v3966, 2.0
    %v4088 = vmul.f32 %v3967, 2.0
    %v4089 = vstv %s3413
    %v4090 = vadd.f32 %v4084, %v4089
    %v4091 = vadd.f32 %v4085, %v4089
    %v4092 = vadd.f32 %v4086, %v4089
    %v4093 = vadd.f32 %v4087, %v4089
    %v4094 = vadd.f32 %v4088, %v4089
    %v4095 = vmul.f32 %v4090, %v3989
    %v4096 = vmul.f32 %v4091, %v3990
    %v4097 = vmul.f32 %v4092, %v3991
    %v4098 = vmul.f32 %v4093, %v3992
    %v4099 = vmul.f32 %v4094, %v3993
    %v4100 = vadd.f32 %v3953, %v3958
    %v4101 = vadd.f32 %v3954, %v3959
    %v4102 = vadd.f32 %v3955, %v3960
    %v4103 = vadd.f32 %v3956, %v3961
    %v4104 = vadd.f32 %v3957, %v3962
    %v4105 = vadd.f32 %v4100, %v4089
    %v4106 = vadd.f32 %v4101, %v4089
    %v4107 = vadd.f32 %v4102, %v4089
    %v4108 = vadd.f32 %v4103, %v4089
    %v4109 = vadd.f32 %v4104, %v4089
    %v4110 = vmul.f32 %v4105, %v4004
    %v4111 = vmul.f32 %v4106, %v4005
    %v4112 = vmul.f32 %v4107, %v4006
    %v4113 = vmul.f32 %v4108, %v4007
    %v4114 = vmul.f32 %v4109, %v4008
    %v4115 = vadd.f32 %v4110, 1e-06
    %v4116 = vadd.f32 %v4111, 1e-06
    %v4117 = vadd.f32 %v4112, 1e-06
    %v4118 = vadd.f32 %v4113, 1e-06
    %v4119 = vadd.f32 %v4114, 1e-06
    %v4120 = vrcp.pop %v4115
    %v4121 = vmul.f32 %v4115, %v4120
    %v4122 = vsub.f32 1.0, %v4121
    %v4123 = vmul.f32 %v4120, %v4122
    %v4124 = vadd.f32 %v4120, %v4123
    %vm4125 = vweird.f32 %v4115
    %vm4126 = vweird.f32 %v4120
    %vm4127 = vmor %vm4125, %vm4126
    %v4128 = vsel %vm4127, %v4120, %v4124
    %v4129 = vand.u32 2147483647, %v4115
    %vm4130 = vcmp.eq.f32.partialorder %v4129, 8.507059e+37
    %v4131 = vand.u32 %v4115, 2147483648
    %v4132 = vor.u32 1.1754944e-38, %v4131
    %v4133 = vsel %vm4130, %v4132, %v4128
    %v4134 = vmul.f32 %v4095, %v4133
    %v4135 = vrcp.pop %v4116
    %v4136 = vmul.f32 %v4116, %v4135
    %v4137 = vsub.f32 1.0, %v4136
    %v4138 = vmul.f32 %v4135, %v4137
    %v4139 = vadd.f32 %v4135, %v4138
    %vm4140 = vweird.f32 %v4116
    %vm4141 = vweird.f32 %v4135
    %vm4142 = vmor %vm4140, %vm4141
    %v4143 = vsel %vm4142, %v4135, %v4139
    %v4144 = vand.u32 2147483647, %v4116
    %vm4145 = vcmp.eq.f32.partialorder %v4144, 8.507059e+37
    %v4146 = vand.u32 %v4116, 2147483648
    %v4147 = vor.u32 1.1754944e-38, %v4146
    %v4148 = vsel %vm4145, %v4147, %v4143
    %v4149 = vmul.f32 %v4096, %v4148
    %v4150 = vrcp.pop %v4117
    %v4151 = vmul.f32 %v4117, %v4150
    %v4152 = vsub.f32 1.0, %v4151
    %v4153 = vmul.f32 %v4150, %v4152
    %v4154 = vadd.f32 %v4150, %v4153
    %vm4155 = vweird.f32 %v4117
    %vm4156 = vweird.f32 %v4150
    %vm4157 = vmor %vm4155, %vm4156
    %v4158 = vsel %vm4157, %v4150, %v4154
    %v4159 = vand.u32 2147483647, %v4117
    %vm4160 = vcmp.eq.f32.partialorder %v4159, 8.507059e+37
    %v4161 = vand.u32 %v4117, 2147483648
    %v4162 = vor.u32 1.1754944e-38, %v4161
    %v4163 = vsel %vm4160, %v4162, %v4158
    %v4164 = vmul.f32 %v4097, %v4163
    %v4165 = vrcp.pop %v4118
    %v4166 = vmul.f32 %v4118, %v4165
    %v4167 = vsub.f32 1.0, %v4166
    %v4168 = vmul.f32 %v4165, %v4167
    %v4169 = vadd.f32 %v4165, %v4168
    %vm4170 = vweird.f32 %v4118
    %vm4171 = vweird.f32 %v4165
    %vm4172 = vmor %vm4170, %vm4171
    %v4173 = vsel %vm4172, %v4165, %v4169
    %v4174 = vand.u32 2147483647, %v4118
    %vm4175 = vcmp.eq.f32.partialorder %v4174, 8.507059e+37
    %v4176 = vand.u32 %v4118, 2147483648
    %v4177 = vor.u32 1.1754944e-38, %v4176
    %v4178 = vsel %vm4175, %v4177, %v4173
    %v4179 = vmul.f32 %v4098, %v4178
    %v4180 = vrcp.pop %v4119
    %v4181 = vmul.f32 %v4119, %v4180
    %v4182 = vsub.f32 1.0, %v4181
    %v4183 = vmul.f32 %v4180, %v4182
    %v4184 = vadd.f32 %v4180, %v4183
    %vm4185 = vweird.f32 %v4119
    %vm4186 = vweird.f32 %v4180
    %vm4187 = vmor %vm4185, %vm4186
    %v4188 = vsel %vm4187, %v4180, %v4184
    %v4189 = vand.u32 2147483647, %v4119
    %vm4190 = vcmp.eq.f32.partialorder %v4189, 8.507059e+37
    %v4191 = vand.u32 %v4119, 2147483648
    %v4192 = vor.u32 1.1754944e-38, %v4191
    %v4193 = vsel %vm4190, %v4192, %v4188
    %v4194 = vmul.f32 %v4099, %v4193
    %vm4195 = vcmask 48128
    %v4196 = vsel %vm4195, %v4134, 0.0
    %v4197 = vsel %vm4195, %v4149, 0.0
    %v4198 = vadd.f32 %v4196, %v4197
    %v4199 = vsel %vm4195, %v4164, 0.0
    %v4200 = vadd.f32 %v4198, %v4199
    %v4201 = vsel %vm4195, %v4179, 0.0
    %v4202 = vadd.f32 %v4200, %v4201
    %vm4203 = vcmask 44032
    %v4204 = vsel %vm4203, %v4194, 0.0
    %v4205 = vadd.f32 %v4202, %v4204
    %4206 = vadd.xlane.f32.xlu0 %v4205
    %v4207 = vpop.xlane.xlu0 %4206
    %v4208 = vrot.slane %v4207, 4
    %v4209 = vadd.f32 %v4207, %v4208
    %v4210 = vrot.slane %v4209, 2
    %v4211 = vadd.f32 %v4209, %v4210
    %v4212 = vrot.slane %v4211, 1
    %v4213 = vadd.f32 %v4211, %v4212
    %s4214 = vtos %v4213
    %s4215 = smul.f32 %s4214, 0.0046296297
    %v4216 = vstv %s4215
    %4217 = vst.msk [vmem:[#allocation28] sm:$0x1] %vm3102, %v4216
    %v4218 = vsel %vm4195, %v4023, 0.0
    %v4219 = vsel %vm4195, %v4038, 0.0
    %v4220 = vadd.f32 %v4218, %v4219
    %v4221 = vsel %vm4195, %v4053, 0.0
    %v4222 = vadd.f32 %v4220, %v4221
    %v4223 = vsel %vm4195, %v4068, 0.0
    %v4224 = vadd.f32 %v4222, %v4223
    %v4225 = vsel %vm4203, %v4083, 0.0
    %v4226 = vadd.f32 %v4224, %v4225
    %4227 = vadd.xlane.f32.xlu0 %v4226
    %v4228 = vpop.xlane.xlu0 %4227
    %v4229 = vrot.slane %v4228, 4
    %v4230 = vadd.f32 %v4228, %v4229
    %v4231 = vrot.slane %v4230, 2
    %v4232 = vadd.f32 %v4230, %v4231
    %v4233 = vrot.slane %v4232, 1
    %v4234 = vadd.f32 %v4232, %v4233
    %s4235 = vtos %v4234
    %s4236 = smul.f32 %s4235, 0.0046296297
    %v4237 = vstv %s4236
    %4238 = vst.msk [vmem:[#allocation29] sm:$0x1] %vm3102, %v4237
    %v4240 = vsel %vm3342, %v3483, 0
    %v4243 = vsel %vm3342, %v3486, 0
    %v4246 = vsel %vm3342, %v3489, 0
    %v4249 = vsel %vm3342, %v3492, 0
    %v4252 = vsel %vm3342, %v3495, 0
    %v4255 = vsel %vm3342, %v3498, 0
    %4257 = vmatpush.msra.mxu0 0.0
    %4258 = vmatpush.msra.mxu0 0.0
    %4259 = vmatpush.msra.mxu0 0.0
    %4260 = vmatpush.msra.mxu0 0.0
    %4261 = vmatpush.msra.mxu0 0.0
    %4262 = vmatpush.msra.mxu0 0.0
    %4263 = vmatpush.msra.mxu0 0.0
    %4264 = vmatpush.msra.mxu0 0.0
    %4265 = vmatpush.msra.mxu0 0.0
    %4266 = vmatpush.msra.mxu0 0.0
    %4267 = vmatpush.msra.mxu0 0.0
    %4268 = vmatpush.msra.mxu0 0.0
    %4269 = vmatpush.msra.mxu0 0.0
    %4270 = vmatpush.msra.mxu0 0.0
    %4271 = vmatpush.msra.mxu0 %v3341
    %4272 = vmatpush.msra.mxu0 %v3340
    %4273 = vmatmul.f32.gmra.mxu0 %v4240
    %v4274 = vpop.f32.mrf.mxu0
    %v4275 = vadd.f32 0.0, %v4274
    %4276 = vmatmul.f32.gmra.mxu0 %v4243
    %v4277 = vpop.f32.mrf.mxu0
    %v4278 = vadd.f32 0.0, %v4277
    %4279 = vmatmul.f32.gmra.mxu0 %v4246
    %v4280 = vpop.f32.mrf.mxu0
    %v4281 = vadd.f32 0.0, %v4280
    %4282 = vmatmul.f32.gmra.mxu0 %v4249
    %v4283 = vpop.f32.mrf.mxu0
    %v4284 = vadd.f32 0.0, %v4283
    %4285 = vmatmul.f32.gmra.mxu0 %v4252
    %v4286 = vpop.f32.mrf.mxu0
    %v4287 = vadd.f32 0.0, %v4286
    %4288 = vmatmul.f32.gmra.mxu0 %v4255
    %v4289 = vpop.f32.mrf.mxu0
    %v4290 = vadd.f32 0.0, %v4289
    %4291 = vdwg.mxu0
    %v4293 = vsel %vm3342, %v3533, 0
    %v4296 = vsel %vm3342, %v3536, 0
    %v4299 = vsel %vm3342, %v3539, 0
    %v4302 = vsel %vm3342, %v3542, 0
    %v4305 = vsel %vm3342, %v3545, 0
    %v4308 = vsel %vm3342, %v3548, 0
    %4310 = vmatpush.msra.mxu0 0.0
    %4311 = vmatpush.msra.mxu0 0.0
    %4312 = vmatpush.msra.mxu0 0.0
    %4313 = vmatpush.msra.mxu0 0.0
    %4314 = vmatpush.msra.mxu0 0.0
    %4315 = vmatpush.msra.mxu0 0.0
    %4316 = vmatpush.msra.mxu0 0.0
    %4317 = vmatpush.msra.mxu0 0.0
    %4318 = vmatpush.msra.mxu0 0.0
    %4319 = vmatpush.msra.mxu0 0.0
    %4320 = vmatpush.msra.mxu0 0.0
    %4321 = vmatpush.msra.mxu0 0.0
    %4322 = vmatpush.msra.mxu0 0.0
    %4323 = vmatpush.msra.mxu0 0.0
    %4324 = vmatpush.msra.mxu0 %v3341
    %4325 = vmatpush.msra.mxu0 %v3340
    %4326 = vmatmul.f32.gmra.mxu0 %v4293
    %v4327 = vpop.f32.mrf.mxu0
    %v4328 = vadd.f32 0.0, %v4327
    %4329 = vmatmul.f32.gmra.mxu0 %v4296
    %v4330 = vpop.f32.mrf.mxu0
    %v4331 = vadd.f32 0.0, %v4330
    %4332 = vmatmul.f32.gmra.mxu0 %v4299
    %v4333 = vpop.f32.mrf.mxu0
    %v4334 = vadd.f32 0.0, %v4333
    %4335 = vmatmul.f32.gmra.mxu0 %v4302
    %v4336 = vpop.f32.mrf.mxu0
    %v4337 = vadd.f32 0.0, %v4336
    %4338 = vmatmul.f32.gmra.mxu0 %v4305
    %v4339 = vpop.f32.mrf.mxu0
    %v4340 = vadd.f32 0.0, %v4339
    %4341 = vmatmul.f32.gmra.mxu0 %v4308
    %v4342 = vpop.f32.mrf.mxu0
    %v4343 = vadd.f32 0.0, %v4342
    %4344 = vdwg.mxu0
    %v4345 = vld [vmem:[#allocation16] sm:$0xff]
    %v4346 = vld [vmem:[#allocation16 + $0x8] sm:$0xff]
    %v4347 = vld [vmem:[#allocation16 + $0x10] sm:$0xff]
    %v4348 = vld [vmem:[#allocation16 + $0x18] sm:$0xff]
    %v4349 = vld [vmem:[#allocation17] sm:$0xff]
    %v4350 = vld [vmem:[%s10] sm:$0xff]
    %vm4351 = vcmask 64512
    %v4352 = vsel %vm4351, %v4275, -inf
    %v4353 = vsel %vm4351, %v4278, -inf
    %v4354 = vsel %vm4351, %v4281, -inf
    %v4355 = vsel %vm4351, %v4284, -inf
    %v4356 = vsel %vm4351, %v4287, -inf
    %v4357 = vmax.f32 %v4352, %v4356
    %v4358 = vsel %vm4351, %v4290, -inf
    %v4359 = vmax.f32 %v4353, %v4358
    %v4360 = vmax.f32 %v4357, %v4359
    %v4361 = vmax.f32 %v4354, %v4355
    %v4362 = vmax.f32 %v4360, %v4361
    %4363 = vmax.xlane.f32.xlu0 %v4362
    %v4364 = vpop.xlane.xlu0 %4363
    %v4365 = vrot.slane %v4364, 4
    %v4366 = vmax.f32 %v4364, %v4365
    %v4367 = vrot.slane %v4366, 2
    %v4368 = vmax.f32 %v4366, %v4367
    %v4369 = vrot.slane %v4368, 1
    %v4370 = vmax.f32 %v4368, %v4369
    %s4371 = vtos %v4370
    %p4372 = scmp.gt.f32.partialorder %s4371, 128.0
    %s4373 = scalar_select %p4372, 255.0, 1.0
    %v4374 = vsel %vm4351, %v4275, inf
    %v4375 = vsel %vm4351, %v4278, inf
    %v4376 = vsel %vm4351, %v4281, inf
    %v4377 = vsel %vm4351, %v4284, inf
    %v4378 = vsel %vm4351, %v4287, inf
    %v4379 = vmin.f32 %v4374, %v4378
    %v4380 = vsel %vm4351, %v4290, inf
    %v4381 = vmin.f32 %v4375, %v4380
    %v4382 = vmin.f32 %v4379, %v4381
    %v4383 = vmin.f32 %v4376, %v4377
    %v4384 = vmin.f32 %v4382, %v4383
    %4385 = vmin.xlane.f32.xlu0 %v4384
    %v4386 = vpop.xlane.xlu0 %4385
    %v4387 = vrot.slane %v4386, 4
    %v4388 = vmin.f32 %v4386, %v4387
    %v4389 = vrot.slane %v4388, 2
    %v4390 = vmin.f32 %v4388, %v4389
    %v4391 = vrot.slane %v4390, 1
    %v4392 = vmin.f32 %v4390, %v4391
    %s4393 = vtos %v4392
    %p4394 = scmp.lt.f32.partialorder %s4393, -0.5
    %s4395 = scalar_select %p4394, -1.0, 0.0
    %s4396 = ssub.f32 %s4373, %s4395
    %s4397 = smul.f32 %s4396, 0.01
    %s4398 = smul.f32 %s4397, %s4397
    %s4399 = smul.f32 %s4396, 0.03
    %s4400 = smul.f32 %s4399, %s4399
    %vm4401 = vcmask 392192
    %v4403 = vsel %vm4401, %v4345, 0
    %v4406 = vsel %vm4401, %v4346, 0
    %v4409 = vsel %vm4401, %v4347, 0
    %v4412 = vsel %vm4401, %v4348, 0
    %4414 = vmatpush.msra.mxu0 0.0
    %4415 = vmatpush.msra.mxu0 0.0
    %4416 = vmatpush.msra.mxu0 0.0
    %4417 = vmatpush.msra.mxu0 0.0
    %4418 = vmatpush.msra.mxu0 0.0
    %4419 = vmatpush.msra.mxu0 0.0
    %4420 = vmatpush.msra.mxu0 0.0
    %4421 = vmatpush.msra.mxu0 0.0
    %4422 = vmatpush.msra.mxu0 0.0
    %4423 = vmatpush.msra.mxu0 0.0
    %4424 = vmatpush.msra.mxu0 %v4290
    %4425 = vmatpush.msra.mxu0 %v4287
    %4426 = vmatpush.msra.mxu0 %v4284
    %4427 = vmatpush.msra.mxu0 %v4281
    %4428 = vmatpush.msra.mxu0 %v4278
    %4429 = vmatpush.msra.mxu0 %v4275
    %4430 = vmatmul.f32.gmra.mxu0 %v4403
    %v4431 = vpop.f32.mrf.mxu0
    %v4432 = vadd.f32 0.0, %v4431
    %4433 = vmatmul.f32.gmra.mxu0 %v4406
    %v4434 = vpop.f32.mrf.mxu0
    %v4435 = vadd.f32 0.0, %v4434
    %4436 = vmatmul.f32.gmra.mxu0 %v4409
    %v4437 = vpop.f32.mrf.mxu0
    %v4438 = vadd.f32 0.0, %v4437
    %4439 = vmatmul.f32.gmra.mxu0 %v4412
    %v4440 = vpop.f32.mrf.mxu0
    %v4441 = vadd.f32 0.0, %v4440
    %4442 = vdwg.mxu0
    %4443 = vmatpush.msra.mxu0 0.0
    %4444 = vmatpush.msra.mxu0 0.0
    %4445 = vmatpush.msra.mxu0 0.0
    %4446 = vmatpush.msra.mxu0 0.0
    %4447 = vmatpush.msra.mxu0 0.0
    %4448 = vmatpush.msra.mxu0 0.0
    %4449 = vmatpush.msra.mxu0 0.0
    %4450 = vmatpush.msra.mxu0 0.0
    %4451 = vmatpush.msra.mxu0 0.0
    %4452 = vmatpush.msra.mxu0 0.0
    %4453 = vmatpush.msra.mxu0 %v4343
    %4454 = vmatpush.msra.mxu0 %v4340
    %4455 = vmatpush.msra.mxu0 %v4337
    %4456 = vmatpush.msra.mxu0 %v4334
    %4457 = vmatpush.msra.mxu0 %v4331
    %4458 = vmatpush.msra.mxu0 %v4328
    %4459 = vmatmul.f32.gmra.mxu0 %v4403
    %v4460 = vpop.f32.mrf.mxu0
    %v4461 = vadd.f32 0.0, %v4460
    %4462 = vmatmul.f32.gmra.mxu0 %v4406
    %v4463 = vpop.f32.mrf.mxu0
    %v4464 = vadd.f32 0.0, %v4463
    %4465 = vmatmul.f32.gmra.mxu0 %v4409
    %v4466 = vpop.f32.mrf.mxu0
    %v4467 = vadd.f32 0.0, %v4466
    %4468 = vmatmul.f32.gmra.mxu0 %v4412
    %v4469 = vpop.f32.mrf.mxu0
    %v4470 = vadd.f32 0.0, %v4469
    %4471 = vdwg.mxu0
    %v4472 = vmul.f32 %v4275, %v4275
    %v4473 = vmul.f32 %v4278, %v4278
    %v4474 = vmul.f32 %v4281, %v4281
    %v4475 = vmul.f32 %v4284, %v4284
    %v4476 = vmul.f32 %v4287, %v4287
    %v4477 = vmul.f32 %v4290, %v4290
    %4478 = vmatpush.msra.mxu0 0.0
    %4479 = vmatpush.msra.mxu0 0.0
    %4480 = vmatpush.msra.mxu0 0.0
    %4481 = vmatpush.msra.mxu0 0.0
    %4482 = vmatpush.msra.mxu0 0.0
    %4483 = vmatpush.msra.mxu0 0.0
    %4484 = vmatpush.msra.mxu0 0.0
    %4485 = vmatpush.msra.mxu0 0.0
    %4486 = vmatpush.msra.mxu0 0.0
    %4487 = vmatpush.msra.mxu0 0.0
    %4488 = vmatpush.msra.mxu0 %v4477
    %4489 = vmatpush.msra.mxu0 %v4476
    %4490 = vmatpush.msra.mxu0 %v4475
    %4491 = vmatpush.msra.mxu0 %v4474
    %4492 = vmatpush.msra.mxu0 %v4473
    %4493 = vmatpush.msra.mxu0 %v4472
    %4494 = vmatmul.f32.gmra.mxu0 %v4403
    %v4495 = vpop.f32.mrf.mxu0
    %v4496 = vadd.f32 0.0, %v4495
    %4497 = vmatmul.f32.gmra.mxu0 %v4406
    %v4498 = vpop.f32.mrf.mxu0
    %4499 = vmatmul.f32.gmra.mxu0 %v4409
    %v4500 = vpop.f32.mrf.mxu0
    %4501 = vmatmul.f32.gmra.mxu0 %v4412
    %v4502 = vpop.f32.mrf.mxu0
    %4503 = vdwg.mxu0
    %v4504 = vmul.f32 %v4328, %v4328
    %v4505 = vmul.f32 %v4331, %v4331
    %v4506 = vmul.f32 %v4334, %v4334
    %v4507 = vmul.f32 %v4337, %v4337
    %v4508 = vmul.f32 %v4340, %v4340
    %v4509 = vmul.f32 %v4343, %v4343
    %4510 = vmatpush.msra.mxu0 0.0
    %4511 = vmatpush.msra.mxu0 0.0
    %4512 = vmatpush.msra.mxu0 0.0
    %4513 = vmatpush.msra.mxu0 0.0
    %4514 = vmatpush.msra.mxu0 0.0
    %4515 = vmatpush.msra.mxu0 0.0
    %4516 = vmatpush.msra.mxu0 0.0
    %4517 = vmatpush.msra.mxu0 0.0
    %4518 = vmatpush.msra.mxu0 0.0
    %4519 = vmatpush.msra.mxu0 0.0
    %4520 = vmatpush.msra.mxu0 %v4509
    %4521 = vmatpush.msra.mxu0 %v4508
    %4522 = vmatpush.msra.mxu0 %v4507
    %4523 = vmatpush.msra.mxu0 %v4506
    %4524 = vmatpush.msra.mxu0 %v4505
    %4525 = vmatpush.msra.mxu0 %v4504
    %4526 = vmatmul.f32.gmra.mxu0 %v4403
    %v4527 = vpop.f32.mrf.mxu0
    %v4528 = vadd.f32 0.0, %v4527
    %4529 = vmatmul.f32.gmra.mxu0 %v4406
    %v4530 = vpop.f32.mrf.mxu0
    %4531 = vmatmul.f32.gmra.mxu0 %v4409
    %v4532 = vpop.f32.mrf.mxu0
    %4533 = vmatmul.f32.gmra.mxu0 %v4412
    %v4534 = vpop.f32.mrf.mxu0
    %4535 = vdwg.mxu0
    %v4536 = vmul.f32 %v4275, %v4328
    %v4537 = vmul.f32 %v4278, %v4331
    %v4538 = vmul.f32 %v4281, %v4334
    %v4539 = vmul.f32 %v4284, %v4337
    %v4540 = vmul.f32 %v4287, %v4340
    %v4541 = vmul.f32 %v4290, %v4343
    %4542 = vmatpush.msra.mxu0 0.0
    %4543 = vmatpush.msra.mxu0 0.0
    %4544 = vmatpush.msra.mxu0 0.0
    %4545 = vmatpush.msra.mxu0 0.0
    %4546 = vmatpush.msra.mxu0 0.0
    %4547 = vmatpush.msra.mxu0 0.0
    %4548 = vmatpush.msra.mxu0 0.0
    %4549 = vmatpush.msra.mxu0 0.0
    %4550 = vmatpush.msra.mxu0 0.0
    %4551 = vmatpush.msra.mxu0 0.0
    %4552 = vmatpush.msra.mxu0 %v4541
    %4553 = vmatpush.msra.mxu0 %v4540
    %4554 = vmatpush.msra.mxu0 %v4539
    %4555 = vmatpush.msra.mxu0 %v4538
    %4556 = vmatpush.msra.mxu0 %v4537
    %4557 = vmatpush.msra.mxu0 %v4536
    %4558 = vmatmul.f32.gmra.mxu0 %v4403
    %v4559 = vpop.f32.mrf.mxu0
    %v4560 = vadd.f32 0.0, %v4559
    %4561 = vmatmul.f32.gmra.mxu0 %v4406
    %v4562 = vpop.f32.mrf.mxu0
    %4563 = vmatmul.f32.gmra.mxu0 %v4409
    %v4564 = vpop.f32.mrf.mxu0
    %4565 = vmatmul.f32.gmra.mxu0 %v4412
    %v4566 = vpop.f32.mrf.mxu0
    %4567 = vdwg.mxu0
    %v4569 = vsel %vm4351, %v4432, 0
    %4571 = vmatpush.msra.mxu0 0.0
    %4572 = vmatpush.msra.mxu0 0.0
    %4573 = vmatpush.msra.mxu0 0.0
    %4574 = vmatpush.msra.mxu0 0.0
    %4575 = vmatpush.msra.mxu0 0.0
    %4576 = vmatpush.msra.mxu0 0.0
    %4577 = vmatpush.msra.mxu0 0.0
    %4578 = vmatpush.msra.mxu0 0.0
    %4579 = vmatpush.msra.mxu0 0.0
    %4580 = vmatpush.msra.mxu0 0.0
    %4581 = vmatpush.msra.mxu0 0.0
    %4582 = vmatpush.msra.mxu0 0.0
    %4583 = vmatpush.msra.mxu0 0.0
    %4584 = vmatpush.msra.mxu0 0.0
    %4585 = vmatpush.msra.mxu0 0.0
    %4586 = vmatpush.msra.mxu0 %v4349
    %4587 = vmatmul.f32.gmra.mxu0 %v4569
    %v4588 = vpop.f32.mrf.mxu0
    %v4589 = vadd.f32 0.0, %v4588
    %4590 = vdwg.mxu0
    %v4592 = vsel %vm4351, %v4461, 0
    %4594 = vmatpush.msra.mxu0 0.0
    %4595 = vmatpush.msra.mxu0 0.0
    %4596 = vmatpush.msra.mxu0 0.0
    %4597 = vmatpush.msra.mxu0 0.0
    %4598 = vmatpush.msra.mxu0 0.0
    %4599 = vmatpush.msra.mxu0 0.0
    %4600 = vmatpush.msra.mxu0 0.0
    %4601 = vmatpush.msra.mxu0 0.0
    %4602 = vmatpush.msra.mxu0 0.0
    %4603 = vmatpush.msra.mxu0 0.0
    %4604 = vmatpush.msra.mxu0 0.0
    %4605 = vmatpush.msra.mxu0 0.0
    %4606 = vmatpush.msra.mxu0 0.0
    %4607 = vmatpush.msra.mxu0 0.0
    %4608 = vmatpush.msra.mxu0 0.0
    %4609 = vmatpush.msra.mxu0 %v4349
    %4610 = vmatmul.f32.gmra.mxu0 %v4592
    %v4611 = vpop.f32.mrf.mxu0
    %v4612 = vadd.f32 0.0, %v4611
    %4613 = vdwg.mxu0
    %v4615 = vsel %vm4351, %v4496, 0
    %4617 = vmatpush.msra.mxu0 0.0
    %4618 = vmatpush.msra.mxu0 0.0
    %4619 = vmatpush.msra.mxu0 0.0
    %4620 = vmatpush.msra.mxu0 0.0
    %4621 = vmatpush.msra.mxu0 0.0
    %4622 = vmatpush.msra.mxu0 0.0
    %4623 = vmatpush.msra.mxu0 0.0
    %4624 = vmatpush.msra.mxu0 0.0
    %4625 = vmatpush.msra.mxu0 0.0
    %4626 = vmatpush.msra.mxu0 0.0
    %4627 = vmatpush.msra.mxu0 0.0
    %4628 = vmatpush.msra.mxu0 0.0
    %4629 = vmatpush.msra.mxu0 0.0
    %4630 = vmatpush.msra.mxu0 0.0
    %4631 = vmatpush.msra.mxu0 0.0
    %4632 = vmatpush.msra.mxu0 %v4349
    %4633 = vmatmul.f32.gmra.mxu0 %v4615
    %v4634 = vpop.f32.mrf.mxu0
    %v4635 = vadd.f32 0.0, %v4634
    %4636 = vdwg.mxu0
    %v4638 = vsel %vm4351, %v4528, 0
    %4640 = vmatpush.msra.mxu0 0.0
    %4641 = vmatpush.msra.mxu0 0.0
    %4642 = vmatpush.msra.mxu0 0.0
    %4643 = vmatpush.msra.mxu0 0.0
    %4644 = vmatpush.msra.mxu0 0.0
    %4645 = vmatpush.msra.mxu0 0.0
    %4646 = vmatpush.msra.mxu0 0.0
    %4647 = vmatpush.msra.mxu0 0.0
    %4648 = vmatpush.msra.mxu0 0.0
    %4649 = vmatpush.msra.mxu0 0.0
    %4650 = vmatpush.msra.mxu0 0.0
    %4651 = vmatpush.msra.mxu0 0.0
    %4652 = vmatpush.msra.mxu0 0.0
    %4653 = vmatpush.msra.mxu0 0.0
    %4654 = vmatpush.msra.mxu0 0.0
    %4655 = vmatpush.msra.mxu0 %v4349
    %4656 = vmatmul.f32.gmra.mxu0 %v4638
    %v4657 = vpop.f32.mrf.mxu0
    %v4658 = vadd.f32 0.0, %v4657
    %4659 = vdwg.mxu0
    %v4661 = vsel %vm4351, %v4560, 0
    %4663 = vmatpush.msra.mxu0 0.0
    %4664 = vmatpush.msra.mxu0 0.0
    %4665 = vmatpush.msra.mxu0 0.0
    %4666 = vmatpush.msra.mxu0 0.0
    %4667 = vmatpush.msra.mxu0 0.0
    %4668 = vmatpush.msra.mxu0 0.0
    %4669 = vmatpush.msra.mxu0 0.0
    %4670 = vmatpush.msra.mxu0 0.0
    %4671 = vmatpush.msra.mxu0 0.0
    %4672 = vmatpush.msra.mxu0 0.0
    %4673 = vmatpush.msra.mxu0 0.0
    %4674 = vmatpush.msra.mxu0 0.0
    %4675 = vmatpush.msra.mxu0 0.0
    %4676 = vmatpush.msra.mxu0 0.0
    %4677 = vmatpush.msra.mxu0 0.0
    %4678 = vmatpush.msra.mxu0 %v4349
    %4679 = vmatmul.f32.gmra.mxu0 %v4661
    %v4680 = vpop.f32.mrf.mxu0
    %v4681 = vadd.f32 0.0, %v4680
    %4682 = vdwg.mxu0
    %v4683 = vmul.f32 %v4589, %v4589
    %v4684 = vmul.f32 %v4612, %v4612
    %v4685 = vmul.f32 %v4589, %v4612
    %v4686 = vsub.f32 %v4635, %v4683
    %v4687 = vsub.f32 %v4658, %v4684
    %v4688 = vsub.f32 %v4681, %v4685
    %v4689 = vmul.f32 %v4688, 2.0
    %v4690 = vstv %s4400
    %v4691 = vadd.f32 %v4689, %v4690
    %v4692 = vadd.f32 %v4686, %v4687
    %v4693 = vadd.f32 %v4692, %v4690
    %v4694 = vadd.f32 %v4693, 1e-08
    %v4695 = vrcp.pop %v4694
    %v4696 = vmul.f32 %v4694, %v4695
    %v4697 = vsub.f32 1.0, %v4696
    %v4698 = vmul.f32 %v4695, %v4697
    %v4699 = vadd.f32 %v4695, %v4698
    %vm4700 = vweird.f32 %v4694
    %vm4701 = vweird.f32 %v4695
    %vm4702 = vmor %vm4700, %vm4701
    %v4703 = vsel %vm4702, %v4695, %v4699
    %v4704 = vand.u32 2147483647, %v4694
    %vm4705 = vcmp.eq.f32.partialorder %v4704, 8.507059e+37
    %v4706 = vand.u32 %v4694, 2147483648
    %v4707 = vor.u32 1.1754944e-38, %v4706
    %v4708 = vsel %vm4705, %v4707, %v4703
    %v4709 = vmul.f32 %v4691, %v4708
    %v4710 = vmul.f32 %v4685, 2.0
    %v4711 = vstv %s4398
    %v4712 = vadd.f32 %v4710, %v4711
    %v4713 = vmul.f32 %v4712, %v4691
    %v4714 = vadd.f32 %v4683, %v4684
    %v4715 = vadd.f32 %v4714, %v4711
    %v4716 = vmul.f32 %v4715, %v4694
    %v4717 = vadd.f32 %v4716, 1e-06
    %v4718 = vrcp.pop %v4717
    %v4719 = vmul.f32 %v4717, %v4718
    %v4720 = vsub.f32 1.0, %v4719
    %v4721 = vmul.f32 %v4718, %v4720
    %v4722 = vadd.f32 %v4718, %v4721
    %vm4723 = vweird.f32 %v4717
    %vm4724 = vweird.f32 %v4718
    %vm4725 = vmor %vm4723, %vm4724
    %v4726 = vsel %vm4725, %v4718, %v4722
    %v4727 = vand.u32 2147483647, %v4717
    %vm4728 = vcmp.eq.f32.partialorder %v4727, 8.507059e+37
    %v4729 = vand.u32 %v4717, 2147483648
    %v4730 = vor.u32 1.1754944e-38, %v4729
    %v4731 = vsel %vm4728, %v4730, %v4726
    %v4732 = vmul.f32 %v4713, %v4731
    %vm4733 = vcmask 5120
    %v4734 = vsel %vm4733, %v4732, 0.0
    %4735 = vadd.xlane.f32.xlu0 %v4734
    %v4736 = vpop.xlane.xlu0 %4735
    %v4737 = vrot.slane %v4736, 4
    %v4738 = vadd.f32 %v4736, %v4737
    %v4739 = vrot.slane %v4738, 2
    %v4740 = vadd.f32 %v4738, %v4739
    %v4741 = vrot.slane %v4740, 1
    %v4742 = vadd.f32 %v4740, %v4741
    %s4743 = vtos %v4742
    %s4744 = smul.f32 %s4743, 0.16666667
    %v4745 = vstv %s4744
    %4746 = vst.msk [vmem:[#allocation31] sm:$0x1] %vm3102, %v4745
    %v4747 = vsel %vm4733, %v4709, 0.0
    %4748 = vadd.xlane.f32.xlu0 %v4747
    %v4749 = vpop.xlane.xlu0 %4748
    %v4750 = vrot.slane %v4749, 4
    %v4751 = vadd.f32 %v4749, %v4750
    %v4752 = vrot.slane %v4751, 2
    %v4753 = vadd.f32 %v4751, %v4752
    %v4754 = vrot.slane %v4753, 1
    %v4755 = vadd.f32 %v4753, %v4754
    %s4756 = vtos %v4755
    %s4757 = smul.f32 %s4756, 0.16666667
    %v4758 = vstv %s4757
    %4759 = vst.msk [vmem:[#allocation32] sm:$0x1] %vm3102, %v4758
    %v4761 = vsel %vm4351, %v4435, 0
    %v4764 = vsel %vm4351, %v4438, 0
    %v4767 = vsel %vm4351, %v4441, 0
    %4769 = vmatpush.msra.mxu0 0.0
    %4770 = vmatpush.msra.mxu0 0.0
    %4771 = vmatpush.msra.mxu0 0.0
    %4772 = vmatpush.msra.mxu0 0.0
    %4773 = vmatpush.msra.mxu0 0.0
    %4774 = vmatpush.msra.mxu0 0.0
    %4775 = vmatpush.msra.mxu0 0.0
    %4776 = vmatpush.msra.mxu0 0.0
    %4777 = vmatpush.msra.mxu0 0.0
    %4778 = vmatpush.msra.mxu0 0.0
    %4779 = vmatpush.msra.mxu0 0.0
    %4780 = vmatpush.msra.mxu0 0.0
    %4781 = vmatpush.msra.mxu0 0.0
    %4782 = vmatpush.msra.mxu0 0.0
    %4783 = vmatpush.msra.mxu0 0.0
    %4784 = vmatpush.msra.mxu0 %v4350
    %4785 = vmatmul.f32.gmra.mxu0 %v4761
    %v4786 = vpop.f32.mrf.mxu0
    %v4787 = vadd.f32 0.0, %v4786
    %4788 = vmatmul.f32.gmra.mxu0 %v4764
    %v4789 = vpop.f32.mrf.mxu0
    %v4790 = vadd.f32 0.0, %v4789
    %4791 = vmatmul.f32.gmra.mxu0 %v4767
    %v4792 = vpop.f32.mrf.mxu0
    %v4793 = vadd.f32 0.0, %v4792
    %4794 = vdwg.mxu0
    %v4796 = vsel %vm4351, %v4464, 0
    %v4799 = vsel %vm4351, %v4467, 0
    %v4802 = vsel %vm4351, %v4470, 0
    %4804 = vmatpush.msra.mxu0 0.0
    %4805 = vmatpush.msra.mxu0 0.0
    %4806 = vmatpush.msra.mxu0 0.0
    %4807 = vmatpush.msra.mxu0 0.0
    %4808 = vmatpush.msra.mxu0 0.0
    %4809 = vmatpush.msra.mxu0 0.0
    %4810 = vmatpush.msra.mxu0 0.0
    %4811 = vmatpush.msra.mxu0 0.0
    %4812 = vmatpush.msra.mxu0 0.0
    %4813 = vmatpush.msra.mxu0 0.0
    %4814 = vmatpush.msra.mxu0 0.0
    %4815 = vmatpush.msra.mxu0 0.0
    %4816 = vmatpush.msra.mxu0 0.0
    %4817 = vmatpush.msra.mxu0 0.0
    %4818 = vmatpush.msra.mxu0 0.0
    %4819 = vmatpush.msra.mxu0 %v4350
    %4820 = vmatmul.f32.gmra.mxu0 %v4796
    %v4821 = vpop.f32.mrf.mxu0
    %v4822 = vadd.f32 0.0, %v4821
    %4823 = vmatmul.f32.gmra.mxu0 %v4799
    %v4824 = vpop.f32.mrf.mxu0
    %v4825 = vadd.f32 0.0, %v4824
    %4826 = vmatmul.f32.gmra.mxu0 %v4802
    %v4827 = vpop.f32.mrf.mxu0
    %v4828 = vadd.f32 0.0, %v4827
    %4829 = vdwg.mxu0
    %v4830 = vld [vmem:[#allocation19] sm:$0xff]
    %v4831 = vld [vmem:[#allocation19 + $0x8] sm:$0xff]
    %v4832 = vld [vmem:[#allocation19 + $0x10] sm:$0xf]
    %v4833 = vld [vmem:[#allocation20] sm:$0xf]
    %v4834 = vld [vmem:[#allocation22] sm:$0xf]
    %vm4835 = vcmask 31744
    %v4836 = vsel %vm4835, %v4787, -inf
    %v4837 = vsel %vm4835, %v4790, -inf
    %v4838 = vsel %vm4835, %v4793, -inf
    %v4839 = vmax.f32 %v4836, %v4837
    %v4840 = vmax.f32 %v4839, %v4838
    %4841 = vmax.xlane.f32.xlu0 %v4840
    %v4842 = vpop.xlane.xlu0 %4841
    %v4843 = vrot.slane %v4842, 4
    %v4844 = vmax.f32 %v4842, %v4843
    %v4845 = vrot.slane %v4844, 2
    %v4846 = vmax.f32 %v4844, %v4845
    %v4847 = vrot.slane %v4846, 1
    %v4848 = vmax.f32 %v4846, %v4847
    %s4849 = vtos %v4848
    %p4850 = scmp.gt.f32.partialorder %s4849, 128.0
    %s4851 = scalar_select %p4850, 255.0, 1.0
    %v4852 = vsel %vm4835, %v4787, inf
    %v4853 = vsel %vm4835, %v4790, inf
    %v4854 = vsel %vm4835, %v4793, inf
    %v4855 = vmin.f32 %v4852, %v4853
    %v4856 = vmin.f32 %v4855, %v4854
    %4857 = vmin.xlane.f32.xlu0 %v4856
    %v4858 = vpop.xlane.xlu0 %4857
    %v4859 = vrot.slane %v4858, 4
    %v4860 = vmin.f32 %v4858, %v4859
    %v4861 = vrot.slane %v4860, 2
    %v4862 = vmin.f32 %v4860, %v4861
    %v4863 = vrot.slane %v4862, 1
    %v4864 = vmin.f32 %v4862, %v4863
    %s4865 = vtos %v4864
    %p4866 = scmp.lt.f32.partialorder %s4865, -0.5
    %s4867 = scalar_select %p4866, -1.0, 0.0
    %s4868 = ssub.f32 %s4851, %s4867
    %s4869 = smul.f32 %s4868, 0.01
    %s4870 = smul.f32 %s4869, %s4869
    %s4871 = smul.f32 %s4868, 0.03
    %s4872 = smul.f32 %s4871, %s4871
    %vm4873 = vcmask 195584
    %v4875 = vsel %vm4873, %v4830, 0
    %v4878 = vsel %vm4873, %v4831, 0
    %v4881 = vsel %vm4873, %v4832, 0
    %4883 = vmatpush.msra.mxu0 0.0
    %4884 = vmatpush.msra.mxu0 0.0
    %4885 = vmatpush.msra.mxu0 0.0
    %4886 = vmatpush.msra.mxu0 0.0
    %4887 = vmatpush.msra.mxu0 0.0
    %4888 = vmatpush.msra.mxu0 0.0
    %4889 = vmatpush.msra.mxu0 0.0
    %4890 = vmatpush.msra.mxu0 0.0
    %4891 = vmatpush.msra.mxu0 0.0
    %4892 = vmatpush.msra.mxu0 0.0
    %4893 = vmatpush.msra.mxu0 0.0
    %4894 = vmatpush.msra.mxu0 0.0
    %4895 = vmatpush.msra.mxu0 0.0
    %4896 = vmatpush.msra.mxu0 %v4793
    %4897 = vmatpush.msra.mxu0 %v4790
    %4898 = vmatpush.msra.mxu0 %v4787
    %4899 = vmatmul.f32.gmra.mxu0 %v4875
    %v4900 = vpop.f32.mrf.mxu0
    %v4901 = vadd.f32 0.0, %v4900
    %4902 = vmatmul.f32.gmra.mxu0 %v4878
    %v4903 = vpop.f32.mrf.mxu0
    %v4904 = vadd.f32 0.0, %v4903
    %4905 = vmatmul.f32.gmra.mxu0 %v4881
    %v4906 = vpop.f32.mrf.mxu0
    %v4907 = vadd.f32 0.0, %v4906
    %4908 = vdwg.mxu0
    %4909 = vmatpush.msra.mxu0 0.0
    %4910 = vmatpush.msra.mxu0 0.0
    %4911 = vmatpush.msra.mxu0 0.0
    %4912 = vmatpush.msra.mxu0 0.0
    %4913 = vmatpush.msra.mxu0 0.0
    %4914 = vmatpush.msra.mxu0 0.0
    %4915 = vmatpush.msra.mxu0 0.0
    %4916 = vmatpush.msra.mxu0 0.0
    %4917 = vmatpush.msra.mxu0 0.0
    %4918 = vmatpush.msra.mxu0 0.0
    %4919 = vmatpush.msra.mxu0 0.0
    %4920 = vmatpush.msra.mxu0 0.0
    %4921 = vmatpush.msra.mxu0 0.0
    %4922 = vmatpush.msra.mxu0 %v4828
    %4923 = vmatpush.msra.mxu0 %v4825
    %4924 = vmatpush.msra.mxu0 %v4822
    %4925 = vmatmul.f32.gmra.mxu0 %v4875
    %v4926 = vpop.f32.mrf.mxu0
    %v4927 = vadd.f32 0.0, %v4926
    %4928 = vmatmul.f32.gmra.mxu0 %v4878
    %v4929 = vpop.f32.mrf.mxu0
    %v4930 = vadd.f32 0.0, %v4929
    %4931 = vmatmul.f32.gmra.mxu0 %v4881
    %v4932 = vpop.f32.mrf.mxu0
    %v4933 = vadd.f32 0.0, %v4932
    %4934 = vdwg.mxu0
    %v4935 = vmul.f32 %v4787, %v4787
    %v4936 = vmul.f32 %v4790, %v4790
    %v4937 = vmul.f32 %v4793, %v4793
    %4938 = vmatpush.msra.mxu0 0.0
    %4939 = vmatpush.msra.mxu0 0.0
    %4940 = vmatpush.msra.mxu0 0.0
    %4941 = vmatpush.msra.mxu0 0.0
    %4942 = vmatpush.msra.mxu0 0.0
    %4943 = vmatpush.msra.mxu0 0.0
    %4944 = vmatpush.msra.mxu0 0.0
    %4945 = vmatpush.msra.mxu0 0.0
    %4946 = vmatpush.msra.mxu0 0.0
    %4947 = vmatpush.msra.mxu0 0.0
    %4948 = vmatpush.msra.mxu0 0.0
    %4949 = vmatpush.msra.mxu0 0.0
    %4950 = vmatpush.msra.mxu0 0.0
    %4951 = vmatpush.msra.mxu0 %v4937
    %4952 = vmatpush.msra.mxu0 %v4936
    %4953 = vmatpush.msra.mxu0 %v4935
    %4954 = vmatmul.f32.gmra.mxu0 %v4875
    %v4955 = vpop.f32.mrf.mxu0
    %v4956 = vadd.f32 0.0, %v4955
    %4957 = vmatmul.f32.gmra.mxu0 %v4878
    %v4958 = vpop.f32.mrf.mxu0
    %4959 = vmatmul.f32.gmra.mxu0 %v4881
    %v4960 = vpop.f32.mrf.mxu0
    %4961 = vdwg.mxu0
    %v4962 = vmul.f32 %v4822, %v4822
    %v4963 = vmul.f32 %v4825, %v4825
    %v4964 = vmul.f32 %v4828, %v4828
    %4965 = vmatpush.msra.mxu0 0.0
    %4966 = vmatpush.msra.mxu0 0.0
    %4967 = vmatpush.msra.mxu0 0.0
    %4968 = vmatpush.msra.mxu0 0.0
    %4969 = vmatpush.msra.mxu0 0.0
    %4970 = vmatpush.msra.mxu0 0.0
    %4971 = vmatpush.msra.mxu0 0.0
    %4972 = vmatpush.msra.mxu0 0.0
    %4973 = vmatpush.msra.mxu0 0.0
    %4974 = vmatpush.msra.mxu0 0.0
    %4975 = vmatpush.msra.mxu0 0.0
    %4976 = vmatpush.msra.mxu0 0.0
    %4977 = vmatpush.msra.mxu0 0.0
    %4978 = vmatpush.msra.mxu0 %v4964
    %4979 = vmatpush.msra.mxu0 %v4963
    %4980 = vmatpush.msra.mxu0 %v4962
    %4981 = vmatmul.f32.gmra.mxu0 %v4875
    %v4982 = vpop.f32.mrf.mxu0
    %v4983 = vadd.f32 0.0, %v4982
    %4984 = vmatmul.f32.gmra.mxu0 %v4878
    %v4985 = vpop.f32.mrf.mxu0
    %4986 = vmatmul.f32.gmra.mxu0 %v4881
    %v4987 = vpop.f32.mrf.mxu0
    %4988 = vdwg.mxu0
    %v4989 = vmul.f32 %v4787, %v4822
    %v4990 = vmul.f32 %v4790, %v4825
    %v4991 = vmul.f32 %v4793, %v4828
    %4992 = vmatpush.msra.mxu0 0.0
    %4993 = vmatpush.msra.mxu0 0.0
    %4994 = vmatpush.msra.mxu0 0.0
    %4995 = vmatpush.msra.mxu0 0.0
    %4996 = vmatpush.msra.mxu0 0.0
    %4997 = vmatpush.msra.mxu0 0.0
    %4998 = vmatpush.msra.mxu0 0.0
    %4999 = vmatpush.msra.mxu0 0.0
    %5000 = vmatpush.msra.mxu0 0.0
    %5001 = vmatpush.msra.mxu0 0.0
    %5002 = vmatpush.msra.mxu0 0.0
    %5003 = vmatpush.msra.mxu0 0.0
    %5004 = vmatpush.msra.mxu0 0.0
    %5005 = vmatpush.msra.mxu0 %v4991
    %5006 = vmatpush.msra.mxu0 %v4990
    %5007 = vmatpush.msra.mxu0 %v4989
    %5008 = vmatmul.f32.gmra.mxu0 %v4875
    %v5009 = vpop.f32.mrf.mxu0
    %v5010 = vadd.f32 0.0, %v5009
    %5011 = vmatmul.f32.gmra.mxu0 %v4878
    %v5012 = vpop.f32.mrf.mxu0
    %5013 = vmatmul.f32.gmra.mxu0 %v4881
    %v5014 = vpop.f32.mrf.mxu0
    %5015 = vdwg.mxu0
    %v5017 = vsel %vm4835, %v4901, 0
    %vm5019 = vcmask 1043456
    %v5021 = vsel %vm5019, %v4833, 0
    %5023 = vmatpush.msra.mxu0 0.0
    %5024 = vmatpush.msra.mxu0 0.0
    %5025 = vmatpush.msra.mxu0 0.0
    %5026 = vmatpush.msra.mxu0 0.0
    %5027 = vmatpush.msra.mxu0 0.0
    %5028 = vmatpush.msra.mxu0 0.0
    %5029 = vmatpush.msra.mxu0 0.0
    %5030 = vmatpush.msra.mxu0 0.0
    %5031 = vmatpush.msra.mxu0 0.0
    %5032 = vmatpush.msra.mxu0 0.0
    %5033 = vmatpush.msra.mxu0 0.0
    %5034 = vmatpush.msra.mxu0 0.0
    %5035 = vmatpush.msra.mxu0 0.0
    %5036 = vmatpush.msra.mxu0 0.0
    %5037 = vmatpush.msra.mxu0 0.0
    %5038 = vmatpush.msra.mxu0 %v5021
    %5039 = vmatmul.f32.gmra.mxu0 %v5017
    %v5040 = vpop.f32.mrf.mxu0
    %v5041 = vadd.f32 0.0, %v5040
    %5042 = vdwg.mxu0
    %v5044 = vsel %vm4835, %v4927, 0
    %5046 = vmatpush.msra.mxu0 0.0
    %5047 = vmatpush.msra.mxu0 0.0
    %5048 = vmatpush.msra.mxu0 0.0
    %5049 = vmatpush.msra.mxu0 0.0
    %5050 = vmatpush.msra.mxu0 0.0
    %5051 = vmatpush.msra.mxu0 0.0
    %5052 = vmatpush.msra.mxu0 0.0
    %5053 = vmatpush.msra.mxu0 0.0
    %5054 = vmatpush.msra.mxu0 0.0
    %5055 = vmatpush.msra.mxu0 0.0
    %5056 = vmatpush.msra.mxu0 0.0
    %5057 = vmatpush.msra.mxu0 0.0
    %5058 = vmatpush.msra.mxu0 0.0
    %5059 = vmatpush.msra.mxu0 0.0
    %5060 = vmatpush.msra.mxu0 0.0
    %5061 = vmatpush.msra.mxu0 %v5021
    %5062 = vmatmul.f32.gmra.mxu0 %v5044
    %v5063 = vpop.f32.mrf.mxu0
    %v5064 = vadd.f32 0.0, %v5063
    %5065 = vdwg.mxu0
    %v5067 = vsel %vm4835, %v4956, 0
    %5069 = vmatpush.msra.mxu0 0.0
    %5070 = vmatpush.msra.mxu0 0.0
    %5071 = vmatpush.msra.mxu0 0.0
    %5072 = vmatpush.msra.mxu0 0.0
    %5073 = vmatpush.msra.mxu0 0.0
    %5074 = vmatpush.msra.mxu0 0.0
    %5075 = vmatpush.msra.mxu0 0.0
    %5076 = vmatpush.msra.mxu0 0.0
    %5077 = vmatpush.msra.mxu0 0.0
    %5078 = vmatpush.msra.mxu0 0.0
    %5079 = vmatpush.msra.mxu0 0.0
    %5080 = vmatpush.msra.mxu0 0.0
    %5081 = vmatpush.msra.mxu0 0.0
    %5082 = vmatpush.msra.mxu0 0.0
    %5083 = vmatpush.msra.mxu0 0.0
    %5084 = vmatpush.msra.mxu0 %v5021
    %5085 = vmatmul.f32.gmra.mxu0 %v5067
    %v5086 = vpop.f32.mrf.mxu0
    %v5087 = vadd.f32 0.0, %v5086
    %5088 = vdwg.mxu0
    %v5090 = vsel %vm4835, %v4983, 0
    %5092 = vmatpush.msra.mxu0 0.0
    %5093 = vmatpush.msra.mxu0 0.0
    %5094 = vmatpush.msra.mxu0 0.0
    %5095 = vmatpush.msra.mxu0 0.0
    %5096 = vmatpush.msra.mxu0 0.0
    %5097 = vmatpush.msra.mxu0 0.0
    %5098 = vmatpush.msra.mxu0 0.0
    %5099 = vmatpush.msra.mxu0 0.0
    %5100 = vmatpush.msra.mxu0 0.0
    %5101 = vmatpush.msra.mxu0 0.0
    %5102 = vmatpush.msra.mxu0 0.0
    %5103 = vmatpush.msra.mxu0 0.0
    %5104 = vmatpush.msra.mxu0 0.0
    %5105 = vmatpush.msra.mxu0 0.0
    %5106 = vmatpush.msra.mxu0 0.0
    %5107 = vmatpush.msra.mxu0 %v5021
    %5108 = vmatmul.f32.gmra.mxu0 %v5090
    %v5109 = vpop.f32.mrf.mxu0
    %v5110 = vadd.f32 0.0, %v5109
    %5111 = vdwg.mxu0
    %v5113 = vsel %vm4835, %v5010, 0
    %5115 = vmatpush.msra.mxu0 0.0
    %5116 = vmatpush.msra.mxu0 0.0
    %5117 = vmatpush.msra.mxu0 0.0
    %5118 = vmatpush.msra.mxu0 0.0
    %5119 = vmatpush.msra.mxu0 0.0
    %5120 = vmatpush.msra.mxu0 0.0
    %5121 = vmatpush.msra.mxu0 0.0
    %5122 = vmatpush.msra.mxu0 0.0
    %5123 = vmatpush.msra.mxu0 0.0
    %5124 = vmatpush.msra.mxu0 0.0
    %5125 = vmatpush.msra.mxu0 0.0
    %5126 = vmatpush.msra.mxu0 0.0
    %5127 = vmatpush.msra.mxu0 0.0
    %5128 = vmatpush.msra.mxu0 0.0
    %5129 = vmatpush.msra.mxu0 0.0
    %5130 = vmatpush.msra.mxu0 %v5021
    %5131 = vmatmul.f32.gmra.mxu0 %v5113
    %v5132 = vpop.f32.mrf.mxu0
    %v5133 = vadd.f32 0.0, %v5132
    %5134 = vdwg.mxu0
    %v5135 = vmul.f32 %v5041, %v5041
    %v5136 = vmul.f32 %v5064, %v5064
    %v5137 = vmul.f32 %v5041, %v5064
    %v5138 = vsub.f32 %v5087, %v5135
    %v5139 = vsub.f32 %v5110, %v5136
    %v5140 = vsub.f32 %v5133, %v5137
    %v5141 = vmul.f32 %v5140, 2.0
    %v5142 = vstv %s4872
    %v5143 = vadd.f32 %v5141, %v5142
    %v5144 = vadd.f32 %v5138, %v5139
    %v5145 = vadd.f32 %v5144, %v5142
    %v5146 = vadd.f32 %v5145, 1e-08
    %v5147 = vrcp.pop %v5146
    %v5148 = vmul.f32 %v5146, %v5147
    %v5149 = vsub.f32 1.0, %v5148
    %v5150 = vmul.f32 %v5147, %v5149
    %v5151 = vadd.f32 %v5147, %v5150
    %vm5152 = vweird.f32 %v5146
    %vm5153 = vweird.f32 %v5147
    %vm5154 = vmor %vm5152, %vm5153
    %v5155 = vsel %vm5154, %v5147, %v5151
    %v5156 = vand.u32 2147483647, %v5146
    %vm5157 = vcmp.eq.f32.partialorder %v5156, 8.507059e+37
    %v5158 = vand.u32 %v5146, 2147483648
    %v5159 = vor.u32 1.1754944e-38, %v5158
    %v5160 = vsel %vm5157, %v5159, %v5155
    %v5161 = vmul.f32 %v5143, %v5160
    %v5162 = vmul.f32 %v5137, 2.0
    %v5163 = vstv %s4870
    %v5164 = vadd.f32 %v5162, %v5163
    %v5165 = vmul.f32 %v5164, %v5143
    %v5166 = vadd.f32 %v5135, %v5136
    %v5167 = vadd.f32 %v5166, %v5163
    %v5168 = vmul.f32 %v5167, %v5146
    %v5169 = vadd.f32 %v5168, 1e-06
    %v5170 = vrcp.pop %v5169
    %v5171 = vmul.f32 %v5169, %v5170
    %v5172 = vsub.f32 1.0, %v5171
    %v5173 = vmul.f32 %v5170, %v5172
    %v5174 = vadd.f32 %v5170, %v5173
    %vm5175 = vweird.f32 %v5169
    %vm5176 = vweird.f32 %v5170
    %vm5177 = vmor %vm5175, %vm5176
    %v5178 = vsel %vm5177, %v5170, %v5174
    %v5179 = vand.u32 2147483647, %v5169
    %vm5180 = vcmp.eq.f32.partialorder %v5179, 8.507059e+37
    %v5181 = vand.u32 %v5169, 2147483648
    %v5182 = vor.u32 1.1754944e-38, %v5181
    %v5183 = vsel %vm5180, %v5182, %v5178
    %v5184 = vmul.f32 %v5165, %v5183
    %v5185 = vsel %vm4733, %v5184, 0.0
    %5186 = vadd.xlane.f32.xlu0 %v5185
    %v5187 = vpop.xlane.xlu0 %5186
    %v5188 = vrot.slane %v5187, 4
    %v5189 = vadd.f32 %v5187, %v5188
    %v5190 = vrot.slane %v5189, 2
    %v5191 = vadd.f32 %v5189, %v5190
    %v5192 = vrot.slane %v5191, 1
    %v5193 = vadd.f32 %v5191, %v5192
    %s5194 = vtos %v5193
    %s5195 = smul.f32 %s5194, 0.16666667
    %v5196 = vstv %s5195
    %5197 = vst.msk [vmem:[#allocation34] sm:$0x1] %vm3102, %v5196
    %v5198 = vsel %vm4733, %v5161, 0.0
    %5199 = vadd.xlane.f32.xlu0 %v5198
    %v5200 = vpop.xlane.xlu0 %5199
    %v5201 = vrot.slane %v5200, 4
    %v5202 = vadd.f32 %v5200, %v5201
    %v5203 = vrot.slane %v5202, 2
    %v5204 = vadd.f32 %v5202, %v5203
    %v5205 = vrot.slane %v5204, 1
    %v5206 = vadd.f32 %v5204, %v5205
    %s5207 = vtos %v5206
    %s5208 = smul.f32 %s5207, 0.16666667
    %v5209 = vstv %s5208
    %5210 = vst.msk [vmem:[#allocation35] sm:$0x1] %vm3102, %v5209
    %v5212 = vsel %vm4835, %v4904, 0
    %v5215 = vsel %vm4835, %v4907, 0
    %v5218 = vsel %vm5019, %v4834, 0
    %5220 = vmatpush.msra.mxu0 0.0
    %5221 = vmatpush.msra.mxu0 0.0
    %5222 = vmatpush.msra.mxu0 0.0
    %5223 = vmatpush.msra.mxu0 0.0
    %5224 = vmatpush.msra.mxu0 0.0
    %5225 = vmatpush.msra.mxu0 0.0
    %5226 = vmatpush.msra.mxu0 0.0
    %5227 = vmatpush.msra.mxu0 0.0
    %5228 = vmatpush.msra.mxu0 0.0
    %5229 = vmatpush.msra.mxu0 0.0
    %5230 = vmatpush.msra.mxu0 0.0
    %5231 = vmatpush.msra.mxu0 0.0
    %5232 = vmatpush.msra.mxu0 0.0
    %5233 = vmatpush.msra.mxu0 0.0
    %5234 = vmatpush.msra.mxu0 0.0
    %5235 = vmatpush.msra.mxu0 %v5218
    %5236 = vmatmul.f32.gmra.mxu0 %v5212
    %v5237 = vpop.f32.mrf.mxu0
    %v5238 = vadd.f32 0.0, %v5237
    %5239 = vmatmul.f32.gmra.mxu0 %v5215
    %v5240 = vpop.f32.mrf.mxu0
    %v5241 = vadd.f32 0.0, %v5240
    %5242 = vdwg.mxu0
    %v5244 = vsel %vm4835, %v4930, 0
    %v5247 = vsel %vm4835, %v4933, 0
    %5249 = vmatpush.msra.mxu0 0.0
    %5250 = vmatpush.msra.mxu0 0.0
    %5251 = vmatpush.msra.mxu0 0.0
    %5252 = vmatpush.msra.mxu0 0.0
    %5253 = vmatpush.msra.mxu0 0.0
    %5254 = vmatpush.msra.mxu0 0.0
    %5255 = vmatpush.msra.mxu0 0.0
    %5256 = vmatpush.msra.mxu0 0.0
    %5257 = vmatpush.msra.mxu0 0.0
    %5258 = vmatpush.msra.mxu0 0.0
    %5259 = vmatpush.msra.mxu0 0.0
    %5260 = vmatpush.msra.mxu0 0.0
    %5261 = vmatpush.msra.mxu0 0.0
    %5262 = vmatpush.msra.mxu0 0.0
    %5263 = vmatpush.msra.mxu0 0.0
    %5264 = vmatpush.msra.mxu0 %v5218
    %5265 = vmatmul.f32.gmra.mxu0 %v5244
    %v5266 = vpop.f32.mrf.mxu0
    %v5267 = vadd.f32 0.0, %v5266
    %5268 = vmatmul.f32.gmra.mxu0 %v5247
    %v5269 = vpop.f32.mrf.mxu0
    %v5270 = vadd.f32 0.0, %v5269
    %5271 = vdwg.mxu0
    %v5272 = vld [vmem:[%s14] sm:$0x3f]
    %v5273 = vld [vmem:[#allocation23] sm:$0x3]
    %vm5274 = vcmask 15360
    %v5275 = vsel %vm5274, %v5238, -inf
    %vm5276 = vcmask 11264
    %v5277 = vsel %vm5276, %v5241, -inf
    %v5278 = vmax.f32 %v5275, %v5277
    %5279 = vmax.xlane.f32.xlu0 %v5278
    %v5280 = vpop.xlane.xlu0 %5279
    %v5281 = vrot.slane %v5280, 4
    %v5282 = vmax.f32 %v5280, %v5281
    %v5283 = vrot.slane %v5282, 2
    %v5284 = vmax.f32 %v5282, %v5283
    %v5285 = vrot.slane %v5284, 1
    %v5286 = vmax.f32 %v5284, %v5285
    %s5287 = vtos %v5286
    %p5288 = scmp.gt.f32.partialorder %s5287, 128.0
    %s5289 = scalar_select %p5288, 255.0, 1.0
    %v5290 = vsel %vm5274, %v5238, inf
    %v5291 = vsel %vm5276, %v5241, inf
    %v5292 = vmin.f32 %v5290, %v5291
    %5293 = vmin.xlane.f32.xlu0 %v5292
    %v5294 = vpop.xlane.xlu0 %5293
    %v5295 = vrot.slane %v5294, 4
    %v5296 = vmin.f32 %v5294, %v5295
    %v5297 = vrot.slane %v5296, 2
    %v5298 = vmin.f32 %v5296, %v5297
    %v5299 = vrot.slane %v5298, 1
    %v5300 = vmin.f32 %v5298, %v5299
    %s5301 = vtos %v5300
    %p5302 = scmp.lt.f32.partialorder %s5301, -0.5
    %s5303 = scalar_select %p5302, -1.0, 0.0
    %s5304 = ssub.f32 %s5289, %s5303
    %s5305 = smul.f32 %s5304, 0.01
    %s5306 = smul.f32 %s5305, %s5305
    %s5307 = smul.f32 %s5304, 0.03
    %s5308 = smul.f32 %s5307, %s5307
    %vm5309 = vcmask 97280
    %v5311 = vsel %vm5309, %v5272, 0
    %v5314 = vsel %vm5019, %v5241, 0
    %5316 = vmatpush.msra.mxu0 0.0
    %5317 = vmatpush.msra.mxu0 0.0
    %5318 = vmatpush.msra.mxu0 0.0
    %5319 = vmatpush.msra.mxu0 0.0
    %5320 = vmatpush.msra.mxu0 0.0
    %5321 = vmatpush.msra.mxu0 0.0
    %5322 = vmatpush.msra.mxu0 0.0
    %5323 = vmatpush.msra.mxu0 0.0
    %5324 = vmatpush.msra.mxu0 0.0
    %5325 = vmatpush.msra.mxu0 0.0
    %5326 = vmatpush.msra.mxu0 0.0
    %5327 = vmatpush.msra.mxu0 0.0
    %5328 = vmatpush.msra.mxu0 0.0
    %5329 = vmatpush.msra.mxu0 0.0
    %5330 = vmatpush.msra.mxu0 %v5314
    %5331 = vmatpush.msra.mxu0 %v5238
    %5332 = vmatmul.f32.gmra.mxu0 %v5311
    %v5333 = vpop.f32.mrf.mxu0
    %v5334 = vadd.f32 0.0, %v5333
    %5335 = vdwg.mxu0
    %v5337 = vsel %vm5019, %v5270, 0
    %5339 = vmatpush.msra.mxu0 0.0
    %5340 = vmatpush.msra.mxu0 0.0
    %5341 = vmatpush.msra.mxu0 0.0
    %5342 = vmatpush.msra.mxu0 0.0
    %5343 = vmatpush.msra.mxu0 0.0
    %5344 = vmatpush.msra.mxu0 0.0
    %5345 = vmatpush.msra.mxu0 0.0
    %5346 = vmatpush.msra.mxu0 0.0
    %5347 = vmatpush.msra.mxu0 0.0
    %5348 = vmatpush.msra.mxu0 0.0
    %5349 = vmatpush.msra.mxu0 0.0
    %5350 = vmatpush.msra.mxu0 0.0
    %5351 = vmatpush.msra.mxu0 0.0
    %5352 = vmatpush.msra.mxu0 0.0
    %5353 = vmatpush.msra.mxu0 %v5337
    %5354 = vmatpush.msra.mxu0 %v5267
    %5355 = vmatmul.f32.gmra.mxu0 %v5311
    %v5356 = vpop.f32.mrf.mxu0
    %v5357 = vadd.f32 0.0, %v5356
    %5358 = vdwg.mxu0
    %v5359 = vmul.f32 %v5238, %v5238
    %v5360 = vmul.f32 %v5241, %v5241
    %v5362 = vsel %vm5019, %v5360, 0
    %5364 = vmatpush.msra.mxu0 0.0
    %5365 = vmatpush.msra.mxu0 0.0
    %5366 = vmatpush.msra.mxu0 0.0
    %5367 = vmatpush.msra.mxu0 0.0
    %5368 = vmatpush.msra.mxu0 0.0
    %5369 = vmatpush.msra.mxu0 0.0
    %5370 = vmatpush.msra.mxu0 0.0
    %5371 = vmatpush.msra.mxu0 0.0
    %5372 = vmatpush.msra.mxu0 0.0
    %5373 = vmatpush.msra.mxu0 0.0
    %5374 = vmatpush.msra.mxu0 0.0
    %5375 = vmatpush.msra.mxu0 0.0
    %5376 = vmatpush.msra.mxu0 0.0
    %5377 = vmatpush.msra.mxu0 0.0
    %5378 = vmatpush.msra.mxu0 %v5362
    %5379 = vmatpush.msra.mxu0 %v5359
    %5380 = vmatmul.f32.gmra.mxu0 %v5311
    %v5381 = vpop.f32.mrf.mxu0
    %v5382 = vadd.f32 0.0, %v5381
    %5383 = vdwg.mxu0
    %v5384 = vmul.f32 %v5267, %v5267
    %v5385 = vmul.f32 %v5270, %v5270
    %v5387 = vsel %vm5019, %v5385, 0
    %5389 = vmatpush.msra.mxu0 0.0
    %5390 = vmatpush.msra.mxu0 0.0
    %5391 = vmatpush.msra.mxu0 0.0
    %5392 = vmatpush.msra.mxu0 0.0
    %5393 = vmatpush.msra.mxu0 0.0
    %5394 = vmatpush.msra.mxu0 0.0
    %5395 = vmatpush.msra.mxu0 0.0
    %5396 = vmatpush.msra.mxu0 0.0
    %5397 = vmatpush.msra.mxu0 0.0
    %5398 = vmatpush.msra.mxu0 0.0
    %5399 = vmatpush.msra.mxu0 0.0
    %5400 = vmatpush.msra.mxu0 0.0
    %5401 = vmatpush.msra.mxu0 0.0
    %5402 = vmatpush.msra.mxu0 0.0
    %5403 = vmatpush.msra.mxu0 %v5387
    %5404 = vmatpush.msra.mxu0 %v5384
    %5405 = vmatmul.f32.gmra.mxu0 %v5311
    %v5406 = vpop.f32.mrf.mxu0
    %v5407 = vadd.f32 0.0, %v5406
    %5408 = vdwg.mxu0
    %v5409 = vmul.f32 %v5238, %v5267
    %v5410 = vmul.f32 %v5241, %v5270
    %v5412 = vsel %vm5019, %v5410, 0
    %5414 = vmatpush.msra.mxu0 0.0
    %5415 = vmatpush.msra.mxu0 0.0
    %5416 = vmatpush.msra.mxu0 0.0
    %5417 = vmatpush.msra.mxu0 0.0
    %5418 = vmatpush.msra.mxu0 0.0
    %5419 = vmatpush.msra.mxu0 0.0
    %5420 = vmatpush.msra.mxu0 0.0
    %5421 = vmatpush.msra.mxu0 0.0
    %5422 = vmatpush.msra.mxu0 0.0
    %5423 = vmatpush.msra.mxu0 0.0
    %5424 = vmatpush.msra.mxu0 0.0
    %5425 = vmatpush.msra.mxu0 0.0
    %5426 = vmatpush.msra.mxu0 0.0
    %5427 = vmatpush.msra.mxu0 0.0
    %5428 = vmatpush.msra.mxu0 %v5412
    %5429 = vmatpush.msra.mxu0 %v5409
    %5430 = vmatmul.f32.gmra.mxu0 %v5311
    %v5431 = vpop.f32.mrf.mxu0
    %v5432 = vadd.f32 0.0, %v5431
    %5433 = vdwg.mxu0
    %v5435 = vsel %vm5274, %v5334, 0
    %vm5437 = vcmask 1041408
    %v5439 = vsel %vm5437, %v5273, 0
    %5441 = vmatpush.msra.mxu0 0.0
    %5442 = vmatpush.msra.mxu0 0.0
    %5443 = vmatpush.msra.mxu0 0.0
    %5444 = vmatpush.msra.mxu0 0.0
    %5445 = vmatpush.msra.mxu0 0.0
    %5446 = vmatpush.msra.mxu0 0.0
    %5447 = vmatpush.msra.mxu0 0.0
    %5448 = vmatpush.msra.mxu0 0.0
    %5449 = vmatpush.msra.mxu0 0.0
    %5450 = vmatpush.msra.mxu0 0.0
    %5451 = vmatpush.msra.mxu0 0.0
    %5452 = vmatpush.msra.mxu0 0.0
    %5453 = vmatpush.msra.mxu0 0.0
    %5454 = vmatpush.msra.mxu0 0.0
    %5455 = vmatpush.msra.mxu0 0.0
    %5456 = vmatpush.msra.mxu0 %v5439
    %5457 = vmatmul.f32.gmra.mxu0 %v5435
    %v5458 = vpop.f32.mrf.mxu0
    %v5459 = vadd.f32 0.0, %v5458
    %5460 = vdwg.mxu0
    %v5462 = vsel %vm5274, %v5357, 0
    %5464 = vmatpush.msra.mxu0 0.0
    %5465 = vmatpush.msra.mxu0 0.0
    %5466 = vmatpush.msra.mxu0 0.0
    %5467 = vmatpush.msra.mxu0 0.0
    %5468 = vmatpush.msra.mxu0 0.0
    %5469 = vmatpush.msra.mxu0 0.0
    %5470 = vmatpush.msra.mxu0 0.0
    %5471 = vmatpush.msra.mxu0 0.0
    %5472 = vmatpush.msra.mxu0 0.0
    %5473 = vmatpush.msra.mxu0 0.0
    %5474 = vmatpush.msra.mxu0 0.0
    %5475 = vmatpush.msra.mxu0 0.0
    %5476 = vmatpush.msra.mxu0 0.0
    %5477 = vmatpush.msra.mxu0 0.0
    %5478 = vmatpush.msra.mxu0 0.0
    %5479 = vmatpush.msra.mxu0 %v5439
    %5480 = vmatmul.f32.gmra.mxu0 %v5462
    %v5481 = vpop.f32.mrf.mxu0
    %v5482 = vadd.f32 0.0, %v5481
    %5483 = vdwg.mxu0
    %v5485 = vsel %vm5274, %v5382, 0
    %5487 = vmatpush.msra.mxu0 0.0
    %5488 = vmatpush.msra.mxu0 0.0
    %5489 = vmatpush.msra.mxu0 0.0
    %5490 = vmatpush.msra.mxu0 0.0
    %5491 = vmatpush.msra.mxu0 0.0
    %5492 = vmatpush.msra.mxu0 0.0
    %5493 = vmatpush.msra.mxu0 0.0
    %5494 = vmatpush.msra.mxu0 0.0
    %5495 = vmatpush.msra.mxu0 0.0
    %5496 = vmatpush.msra.mxu0 0.0
    %5497 = vmatpush.msra.mxu0 0.0
    %5498 = vmatpush.msra.mxu0 0.0
    %5499 = vmatpush.msra.mxu0 0.0
    %5500 = vmatpush.msra.mxu0 0.0
    %5501 = vmatpush.msra.mxu0 0.0
    %5502 = vmatpush.msra.mxu0 %v5439
    %5503 = vmatmul.f32.gmra.mxu0 %v5485
    %v5504 = vpop.f32.mrf.mxu0
    %v5505 = vadd.f32 0.0, %v5504
    %5506 = vdwg.mxu0
    %v5508 = vsel %vm5274, %v5407, 0
    %5510 = vmatpush.msra.mxu0 0.0
    %5511 = vmatpush.msra.mxu0 0.0
    %5512 = vmatpush.msra.mxu0 0.0
    %5513 = vmatpush.msra.mxu0 0.0
    %5514 = vmatpush.msra.mxu0 0.0
    %5515 = vmatpush.msra.mxu0 0.0
    %5516 = vmatpush.msra.mxu0 0.0
    %5517 = vmatpush.msra.mxu0 0.0
    %5518 = vmatpush.msra.mxu0 0.0
    %5519 = vmatpush.msra.mxu0 0.0
    %5520 = vmatpush.msra.mxu0 0.0
    %5521 = vmatpush.msra.mxu0 0.0
    %5522 = vmatpush.msra.mxu0 0.0
    %5523 = vmatpush.msra.mxu0 0.0
    %5524 = vmatpush.msra.mxu0 0.0
    %5525 = vmatpush.msra.mxu0 %v5439
    %5526 = vmatmul.f32.gmra.mxu0 %v5508
    %v5527 = vpop.f32.mrf.mxu0
    %v5528 = vadd.f32 0.0, %v5527
    %5529 = vdwg.mxu0
    %v5531 = vsel %vm5274, %v5432, 0
    %5533 = vmatpush.msra.mxu0 0.0
    %5534 = vmatpush.msra.mxu0 0.0
    %5535 = vmatpush.msra.mxu0 0.0
    %5536 = vmatpush.msra.mxu0 0.0
    %5537 = vmatpush.msra.mxu0 0.0
    %5538 = vmatpush.msra.mxu0 0.0
    %5539 = vmatpush.msra.mxu0 0.0
    %5540 = vmatpush.msra.mxu0 0.0
    %5541 = vmatpush.msra.mxu0 0.0
    %5542 = vmatpush.msra.mxu0 0.0
    %5543 = vmatpush.msra.mxu0 0.0
    %5544 = vmatpush.msra.mxu0 0.0
    %5545 = vmatpush.msra.mxu0 0.0
    %5546 = vmatpush.msra.mxu0 0.0
    %5547 = vmatpush.msra.mxu0 0.0
    %5548 = vmatpush.msra.mxu0 %v5439
    %5549 = vmatmul.f32.gmra.mxu0 %v5531
    %v5550 = vpop.f32.mrf.mxu0
    %v5551 = vadd.f32 0.0, %v5550
    %5552 = vdwg.mxu0
    %v5553 = vmul.f32 %v5459, %v5459
    %v5554 = vmul.f32 %v5482, %v5482
    %v5555 = vmul.f32 %v5459, %v5482
    %v5556 = vsub.f32 %v5505, %v5553
    %v5557 = vsub.f32 %v5528, %v5554
    %v5558 = vsub.f32 %v5551, %v5555
    %v5559 = vmul.f32 %v5558, 2.0
    %v5560 = vstv %s5308
    %v5561 = vadd.f32 %v5559, %v5560
    %v5562 = vadd.f32 %v5556, %v5557
    %v5563 = vadd.f32 %v5562, %v5560
    %v5564 = vadd.f32 %v5563, 1e-08
    %v5565 = vrcp.pop %v5564
    %v5566 = vmul.f32 %v5564, %v5565
    %v5567 = vsub.f32 1.0, %v5566
    %v5568 = vmul.f32 %v5565, %v5567
    %v5569 = vadd.f32 %v5565, %v5568
    %vm5570 = vweird.f32 %v5564
    %vm5571 = vweird.f32 %v5565
    %vm5572 = vmor %vm5570, %vm5571
    %v5573 = vsel %vm5572, %v5565, %v5569
    %v5574 = vand.u32 2147483647, %v5564
    %vm5575 = vcmp.eq.f32.partialorder %v5574, 8.507059e+37
    %v5576 = vand.u32 %v5564, 2147483648
    %v5577 = vor.u32 1.1754944e-38, %v5576
    %v5578 = vsel %vm5575, %v5577, %v5573
    %v5579 = vmul.f32 %v5561, %v5578
    %v5580 = vmul.f32 %v5555, 2.0
    %v5581 = vstv %s5306
    %v5582 = vadd.f32 %v5580, %v5581
    %v5583 = vmul.f32 %v5582, %v5561
    %v5584 = vadd.f32 %v5553, %v5554
    %v5585 = vadd.f32 %v5584, %v5581
    %v5586 = vmul.f32 %v5585, %v5564
    %v5587 = vadd.f32 %v5586, 1e-06
    %v5588 = vrcp.pop %v5587
    %v5589 = vmul.f32 %v5587, %v5588
    %v5590 = vsub.f32 1.0, %v5589
    %v5591 = vmul.f32 %v5588, %v5590
    %v5592 = vadd.f32 %v5588, %v5591
    %vm5593 = vweird.f32 %v5587
    %vm5594 = vweird.f32 %v5588
    %vm5595 = vmor %vm5593, %vm5594
    %v5596 = vsel %vm5595, %v5588, %v5592
    %v5597 = vand.u32 2147483647, %v5587
    %vm5598 = vcmp.eq.f32.partialorder %v5597, 8.507059e+37
    %v5599 = vand.u32 %v5587, 2147483648
    %v5600 = vor.u32 1.1754944e-38, %v5599
    %v5601 = vsel %vm5598, %v5600, %v5596
    %v5602 = vmul.f32 %v5583, %v5601
    %v5603 = vsel %vm4733, %v5602, 0.0
    %5604 = vadd.xlane.f32.xlu0 %v5603
    %v5605 = vpop.xlane.xlu0 %5604
    %v5606 = vrot.slane %v5605, 4
    %v5607 = vadd.f32 %v5605, %v5606
    %v5608 = vrot.slane %v5607, 2
    %v5609 = vadd.f32 %v5607, %v5608
    %v5610 = vrot.slane %v5609, 1
    %v5611 = vadd.f32 %v5609, %v5610
    %s5612 = vtos %v5611
    %s5613 = smul.f32 %s5612, 0.16666667
    %v5614 = vstv %s5613
    %5615 = vst.msk [vmem:[#allocation37] sm:$0x1] %vm3102, %v5614
    %v5616 = vsel %vm4733, %v5579, 0.0
    %5617 = vadd.xlane.f32.xlu0 %v5616
    %v5618 = vpop.xlane.xlu0 %5617
    %v5619 = vrot.slane %v5618, 4
    %v5620 = vadd.f32 %v5618, %v5619
    %v5621 = vrot.slane %v5620, 2
    %v5622 = vadd.f32 %v5620, %v5621
    %v5623 = vrot.slane %v5622, 1
    %v5624 = vadd.f32 %v5622, %v5623
    %s5625 = vtos %v5624
    %s5626 = smul.f32 %s5625, 0.16666667
    %v5627 = vstv %s5626
    %5628 = vst.msk [vmem:[#allocation38] sm:$0x1] %vm3102, %v5627
    // Predicated region
    $region122: #{_lambda_.1} parent=1 // pred_check
      _
    $region123: #{_lambda_.1} parent=1 // pred_check_branch
      %5630 = sbr.rel (0) target = $region125
    $region124: #{_lambda_.1} parent=1 // pred_region
      %5632 = vsyncadd [#allocation4], 0
      %s5634 = sshll.u32 [#allocation25], 4
      %s5635 = int_to_ptr.vmem [resolvable:$true] %s5634
      %s5636 = sshll.u32 %s16, 4
      %s5637 = int_to_ptr.hbm [resolvable:$true] %s5636
      %5639 = dma.vmem_to_hbm [thread:$0]  %s5635, 16, %s5637, [#allocation4]
    $region125: #{_lambda_.1} parent=1 // pred_fallthru
      _
    // Predicated region
    $region126: #{_lambda_.1} parent=1 // pred_check
      _
    $region127: #{_lambda_.1} parent=1 // pred_check_branch
      %5641 = sbr.rel (0) target = $region129
    $region128: #{_lambda_.1} parent=1 // pred_region
      %5643 = vsyncadd [#allocation27], 0
      %s5645 = sshll.u32 [#allocation26], 4
      %s5646 = int_to_ptr.vmem [resolvable:$true] %s5645
      %s5647 = sshll.u32 %s17, 4
      %s5648 = int_to_ptr.hbm [resolvable:$true] %s5647
      %5650 = dma.vmem_to_hbm [thread:$0]  %s5646, 16, %s5648, [#allocation27]
    $region129: #{_lambda_.1} parent=1 // pred_fallthru
      _
    // Predicated region
    $region130: #{_lambda_.1} parent=1 // pred_check
      _
    $region131: #{_lambda_.1} parent=1 // pred_check_branch
      %5652 = sbr.rel (0) target = $region133
    $region132: #{_lambda_.1} parent=1 // pred_region
      %5654 = vsyncadd [#allocation27], 0
      %s5656 = sshll.u32 [#allocation28], 4
      %s5657 = int_to_ptr.vmem [resolvable:$true] %s5656
      %s5658 = sshll.u32 %s18, 4
      %s5659 = int_to_ptr.hbm [resolvable:$true] %s5658
      %5661 = dma.vmem_to_hbm [thread:$0]  %s5657, 16, %s5659, [#allocation27]
    $region133: #{_lambda_.1} parent=1 // pred_fallthru
      _
    // Predicated region
    $region134: #{_lambda_.1} parent=1 // pred_check
      _
    $region135: #{_lambda_.1} parent=1 // pred_check_branch
      %5663 = sbr.rel (0) target = $region137
    $region136: #{_lambda_.1} parent=1 // pred_region
      %5665 = vsyncadd [#allocation30], 0
      %s5667 = sshll.u32 [#allocation29], 4
      %s5668 = int_to_ptr.vmem [resolvable:$true] %s5667
      %s5669 = sshll.u32 %s19, 4
      %s5670 = int_to_ptr.hbm [resolvable:$true] %s5669
      %5672 = dma.vmem_to_hbm [thread:$0]  %s5668, 16, %s5670, [#allocation30]
    $region137: #{_lambda_.1} parent=1 // pred_fallthru
      _
    // Predicated region
    $region138: #{_lambda_.1} parent=1 // pred_check
      _
    $region139: #{_lambda_.1} parent=1 // pred_check_branch
      %5674 = sbr.rel (0) target = $region141
    $region140: #{_lambda_.1} parent=1 // pred_region
      %5676 = vsyncadd [#allocation30], 0
      %s5678 = sshll.u32 [#allocation31], 4
      %s5679 = int_to_ptr.vmem [resolvable:$true] %s5678
      %s5680 = sshll.u32 %s20, 4
      %s5681 = int_to_ptr.hbm [resolvable:$true] %s5680
      %5683 = dma.vmem_to_hbm [thread:$0]  %s5679, 16, %s5681, [#allocation30]
    $region141: #{_lambda_.1} parent=1 // pred_fallthru
      _
    // Predicated region
    $region142: #{_lambda_.1} parent=1 // pred_check
      _
    $region143: #{_lambda_.1} parent=1 // pred_check_branch
      %5685 = sbr.rel (0) target = $region145
    $region144: #{_lambda_.1} parent=1 // pred_region
      %5687 = vsyncadd [#allocation33], 0
      %s5689 = sshll.u32 [#allocation32], 4
      %s5690 = int_to_ptr.vmem [resolvable:$true] %s5689
      %s5691 = sshll.u32 %s21, 4
      %s5692 = int_to_ptr.hbm [resolvable:$true] %s5691
      %5694 = dma.vmem_to_hbm [thread:$0]  %s5690, 16, %s5692, [#allocation33]
    $region145: #{_lambda_.1} parent=1 // pred_fallthru
      _
    // Predicated region
    $region146: #{_lambda_.1} parent=1 // pred_check
      _
    $region147: #{_lambda_.1} parent=1 // pred_check_branch
      %5696 = sbr.rel (0) target = $region149
    $region148: #{_lambda_.1} parent=1 // pred_region
      %5698 = vsyncadd [#allocation33], 0
      %s5700 = sshll.u32 [#allocation34], 4
      %s5701 = int_to_ptr.vmem [resolvable:$true] %s5700
      %s5702 = sshll.u32 %s22, 4
      %s5703 = int_to_ptr.hbm [resolvable:$true] %s5702
      %5705 = dma.vmem_to_hbm [thread:$0]  %s5701, 16, %s5703, [#allocation33]
    $region149: #{_lambda_.1} parent=1 // pred_fallthru
      _
    // Predicated region
    $region150: #{_lambda_.1} parent=1 // pred_check
      _
    $region151: #{_lambda_.1} parent=1 // pred_check_branch
      %5707 = sbr.rel (0) target = $region153
    $region152: #{_lambda_.1} parent=1 // pred_region
      %5709 = vsyncadd [#allocation36], 0
      %s5711 = sshll.u32 [#allocation35], 4
      %s5712 = int_to_ptr.vmem [resolvable:$true] %s5711
      %s5713 = sshll.u32 %s23, 4
      %s5714 = int_to_ptr.hbm [resolvable:$true] %s5713
      %5716 = dma.vmem_to_hbm [thread:$0]  %s5712, 16, %s5714, [#allocation36]
    $region153: #{_lambda_.1} parent=1 // pred_fallthru
      _
    // Predicated region
    $region154: #{_lambda_.1} parent=1 // pred_check
      _
    $region155: #{_lambda_.1} parent=1 // pred_check_branch
      %5718 = sbr.rel (0) target = $region157
    $region156: #{_lambda_.1} parent=1 // pred_region
      %5720 = vsyncadd [#allocation36], 0
      %s5722 = sshll.u32 [#allocation37], 4
      %s5723 = int_to_ptr.vmem [resolvable:$true] %s5722
      %s5724 = sshll.u32 %s24, 4
      %s5725 = int_to_ptr.hbm [resolvable:$true] %s5724
      %5727 = dma.vmem_to_hbm [thread:$0]  %s5723, 16, %s5725, [#allocation36]
    $region157: #{_lambda_.1} parent=1 // pred_fallthru
      _
    // Predicated region
    $region158: #{_lambda_.1} parent=1 // pred_check
      _
    $region159: #{_lambda_.1} parent=1 // pred_check_branch
      %5729 = sbr.rel (0) target = $region161
    $region160: #{_lambda_.1} parent=1 // pred_region
      %5731 = vsyncadd [#allocation39], 0
      %s5733 = sshll.u32 [#allocation38], 4
      %s5734 = int_to_ptr.vmem [resolvable:$true] %s5733
      %s5735 = sshll.u32 %s25, 4
      %s5736 = int_to_ptr.hbm [resolvable:$true] %s5735
      %5738 = dma.vmem_to_hbm [thread:$0]  %s5734, 16, %s5736, [#allocation39]
    $region161: #{_lambda_.1} parent=1 // pred_fallthru
      _
    // Predicated region
    $region162: #{_lambda_.1} parent=1 // pred_check
      _
    $region163: #{_lambda_.1} parent=1 // pred_check_branch
      %5740 = sbr.rel (0) target = $region165
    $region164: #{_lambda_.1} parent=1 // pred_region
      %5742 = dma.done [#allocation4], 16
    $region165: #{_lambda_.1} parent=1 // pred_fallthru
      _
    // Predicated region
    $region166: #{_lambda_.1} parent=1 // pred_check
      _
    $region167: #{_lambda_.1} parent=1 // pred_check_branch
      %5744 = sbr.rel (0) target = $region169
    $region168: #{_lambda_.1} parent=1 // pred_region
      %5746 = dma.done [#allocation27], 16
    $region169: #{_lambda_.1} parent=1 // pred_fallthru
      _
    // Predicated region
    $region170: #{_lambda_.1} parent=1 // pred_check
      _
    $region171: #{_lambda_.1} parent=1 // pred_check_branch
      %5748 = sbr.rel (0) target = $region173
    $region172: #{_lambda_.1} parent=1 // pred_region
      %5750 = dma.done [#allocation27], 16
    $region173: #{_lambda_.1} parent=1 // pred_fallthru
      _
    // Predicated region
    $region174: #{_lambda_.1} parent=1 // pred_check
      _
    $region175: #{_lambda_.1} parent=1 // pred_check_branch
      %5752 = sbr.rel (0) target = $region177
    $region176: #{_lambda_.1} parent=1 // pred_region
      %5754 = dma.done [#allocation30], 16
    $region177: #{_lambda_.1} parent=1 // pred_fallthru
      _
    // Predicated region
    $region178: #{_lambda_.1} parent=1 // pred_check
      _
    $region179: #{_lambda_.1} parent=1 // pred_check_branch
      %5756 = sbr.rel (0) target = $region181
    $region180: #{_lambda_.1} parent=1 // pred_region
      %5758 = dma.done [#allocation30], 16
    $region181: #{_lambda_.1} parent=1 // pred_fallthru
      _
    // Predicated region
    $region182: #{_lambda_.1} parent=1 // pred_check
      _
    $region183: #{_lambda_.1} parent=1 // pred_check_branch
      %5760 = sbr.rel (0) target = $region185
    $region184: #{_lambda_.1} parent=1 // pred_region
      %5762 = dma.done [#allocation33], 16
    $region185: #{_lambda_.1} parent=1 // pred_fallthru
      _
    // Predicated region
    $region186: #{_lambda_.1} parent=1 // pred_check
      _
    $region187: #{_lambda_.1} parent=1 // pred_check_branch
      %5764 = sbr.rel (0) target = $region189
    $region188: #{_lambda_.1} parent=1 // pred_region
      %5766 = dma.done [#allocation33], 16
    $region189: #{_lambda_.1} parent=1 // pred_fallthru
      _
    // Predicated region
    $region190: #{_lambda_.1} parent=1 // pred_check
      _
    $region191: #{_lambda_.1} parent=1 // pred_check_branch
      %5768 = sbr.rel (0) target = $region193
    $region192: #{_lambda_.1} parent=1 // pred_region
      %5770 = dma.done [#allocation36], 16
    $region193: #{_lambda_.1} parent=1 // pred_fallthru
      _
    // Predicated region
    $region194: #{_lambda_.1} parent=1 // pred_check
      _
    $region195: #{_lambda_.1} parent=1 // pred_check_branch
      %5772 = sbr.rel (0) target = $region197
    $region196: #{_lambda_.1} parent=1 // pred_region
      %5774 = dma.done [#allocation36], 16
    $region197: #{_lambda_.1} parent=1 // pred_fallthru
      _
    // Predicated region
    $region198: #{_lambda_.1} parent=1 // pred_check
      _
    $region199: #{_lambda_.1} parent=1 // pred_check_branch
      %5776 = sbr.rel (0) target = $region201
    $region200: #{_lambda_.1} parent=1 // pred_region
      %5778 = dma.done [#allocation39], 16
    $region201: #{_lambda_.1} parent=1 // pred_fallthru
      _
    %5779 = vsyncpa [#allocation3], 1
    %5780 = vsyncpa [#allocation6], 1
    %5781 = vsyncpa [#allocation9], 1
    %5782 = vsyncpa [#allocation12], 1
    %5783 = vsyncpa [#allocation15], 1
    %5784 = vsyncpa [#allocation18], 1
    %5785 = vsyncpa [#allocation21], 1
    %5786 = vsyncpa [#allocation24], 1
    %5787 = vsyncpa [#allocation4], 1
    %5788 = vsyncpa [#allocation27], 1
    %5789 = vsyncpa [#allocation30], 1
    %5790 = vsyncpa [#allocation33], 1
    %5791 = vsyncpa [#allocation36], 1
    %5792 = vsyncpa [#allocation39], 1

</llo_original>
